<compile_context>
chip_gen: v5e
topology: v5e:2x2
jax: 0.10.0
libtpu: 0.0.40
codegen_flags: <defaults>
</compile_context>

<pallas_src>
import numpy as np
import jax
import jax.numpy as jnp
from jax.experimental import pallas as pl
from jax.experimental.pallas import tpu as pltpu


# ----------------------------------------------------------------------------
# Shape helpers
# ----------------------------------------------------------------------------
def conv2d_size_out(size, kernel_size=5, stride=2):
    return (size - (kernel_size - 1) - 1) // stride + 1


# ----------------------------------------------------------------------------
# Parameter construction (PyTorch layout) + kernel-side preparation
# ----------------------------------------------------------------------------
def init_dqn_params(h, w, outputs, key):
    """Deterministic synthetic parameters in PyTorch layouts."""
    ks = jax.random.split(key, 20)

    def conv(kw_, kb, cout, cin):
        return (jax.random.normal(kw_, (cout, cin, 5, 5), jnp.float32) * 0.05,
                jax.random.normal(kb, (cout,), jnp.float32) * 0.05)

    def bn(k0, k1, k2, k3, c):
        gamma = 1.0 + 0.1 * jax.random.normal(k0, (c,), jnp.float32)
        beta = 0.1 * jax.random.normal(k1, (c,), jnp.float32)
        mean = 0.1 * jax.random.normal(k2, (c,), jnp.float32)
        var = jax.random.uniform(k3, (c,), jnp.float32, 0.5, 1.5)
        return (gamma, beta, mean, var)

    p = {}
    p["w1"], p["b1"] = conv(ks[0], ks[1], 16, 3)
    p["bn1"] = bn(ks[2], ks[3], ks[4], ks[5], 16)
    p["w2"], p["b2"] = conv(ks[6], ks[7], 32, 16)
    p["bn2"] = bn(ks[8], ks[9], ks[10], ks[11], 32)
    p["w3"], p["b3"] = conv(ks[12], ks[13], 32, 32)
    p["bn3"] = bn(ks[14], ks[15], ks[16], ks[17], 32)

    convw = conv2d_size_out(conv2d_size_out(conv2d_size_out(w)))
    convh = conv2d_size_out(conv2d_size_out(conv2d_size_out(h)))
    lin_in = convw * convh * 32
    p["head_w"] = jax.random.normal(ks[18], (outputs, lin_in), jnp.float32) * 0.05
    p["head_b"] = jax.random.normal(ks[19], (outputs,), jnp.float32) * 0.05
    return p


def _fold_bn(w_oihw, b, bn, eps=1e-5):
    """Fold eval-mode BN into conv weight/bias.  Returns HWIO weight, bias."""
    gamma, beta, mean, var = (np.asarray(a, np.float32) for a in bn)
    scale = gamma / np.sqrt(var + eps)                       # (Cout,)
    w_hwio = np.transpose(np.asarray(w_oihw, np.float32), (2, 3, 1, 0)) * scale
    b_f = (np.asarray(b, np.float32) - mean) * scale + beta
    return w_hwio, b_f


def _build_row_toeplitz(w_hwio, w_in, ow, stride=2):
    """T[kh, w*Cin+ci, j*Cout+co] = W[kh, w-stride*j, ci, co] (0 if out of tap).

    With it, a full-width dense-row conv output is:
        out_row[r] = sum_kh  A_row[r + kh] @ T[kh]
    where A_row[r] is the (W_in*Cin,) row-major flatten of input row r.  The
    stride over W is entirely inside T; only contiguous row reads are needed.
    """
    kh_, kw_, cin, cout = w_hwio.shape
    t = np.zeros((kh_, w_in * cin, ow * cout), np.float32)
    for kh in range(kh_):
        for j in range(ow):
            for kw in range(kw_):
                col = stride * j + kw
                t[kh, col * cin:(col + 1) * cin,
                  j * cout:(j + 1) * cout] = w_hwio[kh, kw]
    return t


def prepare_kernel_params(p, h, w, n_out):
    """Fold BN, build per-kh Toeplitz weights (bf16) and permuted head weight."""
    oh1, ow1 = conv2d_size_out(h), conv2d_size_out(w)
    oh2, ow2 = conv2d_size_out(oh1), conv2d_size_out(ow1)
    oh3, ow3 = conv2d_size_out(oh2), conv2d_size_out(ow2)

    w1, b1 = _fold_bn(p["w1"], p["b1"], p["bn1"])
    w2, b2 = _fold_bn(p["w2"], p["b2"], p["bn2"])
    w3, b3 = _fold_bn(p["w3"], p["b3"], p["bn3"])

    t1 = _build_row_toeplitz(w1, w, ow1)      # (5, W*3,     ow1*16)
    t2 = _build_row_toeplitz(w2, ow1, ow2)    # (5, ow1*16,  ow2*32)
    t3 = _build_row_toeplitz(w3, ow2, ow3)    # (5, ow2*32,  ow3*32)

    # Head: PyTorch flattens the (32, oh3, ow3) activation in (C, H, W) order;
    # the kernel produces per-H rows laid out as (W, C).  Permute once at init.
    head = np.asarray(p["head_w"], np.float32).reshape(n_out, 32, oh3, ow3)
    whp = np.transpose(head, (2, 3, 1, 0)).reshape(oh3, ow3 * 32, n_out)

    return {
        "t1": jnp.asarray(t1, jnp.bfloat16),
        "t2": jnp.asarray(t2, jnp.bfloat16),
        "t3": jnp.asarray(t3, jnp.bfloat16),
        "bias1": jnp.asarray(np.tile(b1, ow1)[None, :], jnp.float32),
        "bias2": jnp.asarray(np.tile(b2, ow2)[None, :], jnp.float32),
        "bias3": jnp.asarray(np.tile(b3, ow3)[None, :], jnp.float32),
        "whp": jnp.asarray(whp, jnp.bfloat16),
        "biash": jnp.asarray(np.asarray(p["head_b"], np.float32)[None, :],
                             jnp.float32),
    }


# ----------------------------------------------------------------------------
# Fused Pallas kernel: full DQN forward, one grid step per image
# ----------------------------------------------------------------------------
def build_dqn_forward(h, w, n_out):
    cin = 3
    oh1, ow1 = conv2d_size_out(h), conv2d_size_out(w)
    oh2, ow2 = conv2d_size_out(oh1), conv2d_size_out(ow1)
    oh3, ow3 = conv2d_size_out(oh2), conv2d_size_out(ow2)
    c1, c2, c3 = 16, 32, 32
    assert oh3 >= 1 and ow3 >= 1, "input too small for three 5x5/stride-2 convs"

    # Dense (stride-1 in H) row counts kept in VMEM for layers 1 and 2.
    #   h1_s[r] = conv1 row with window top at input row r  (true conv1 row i1
    #             lives at h1_s[2*i1]).
    #   h2_s[r] = conv2 row whose window top is h1 dense row r = sum_kh
    #             h1_s[r + 2*kh] @ t2[kh]  (true conv2 row i2 at h2_s[4*i2]).
    #   conv3 true row i3 reads h2_s[8*i3 + 4*kh], kh = 0..4.
    s2 = 8 * (oh3 - 1) + 4 * 4 + 1          # dense conv2 rows needed
    r1 = (s2 - 1) + 2 * 4 + 1               # dense conv1 rows needed
    # Read-bound sanity checks (static):
    assert 8 * (oh3 - 1) + 4 * 4 == s2 - 1
    assert (s2 - 1) + 2 * 4 == r1 - 1
    assert r1 + 4 <= h, "input too small for three 5x5/stride-2 convs"

    k1k, k1n = w * cin, ow1 * c1            # layer-1 matmul K, N
    k2k, k2n = ow1 * c1, ow2 * c2
    k3k, k3n = ow2 * c2, ow3 * c3

    def kernel(x_ref, t1_ref, bias1_ref, t2_ref, bias2_ref, t3_ref, bias3_ref,
               whp_ref, biash_ref, o_ref, h1_s, h2_s):
        # ---- layer 1: conv1 + folded BN + ReLU (dense rows) ----------------
        acc1 = jnp.zeros((r1, k1n), jnp.float32)
        for kh in range(5):
            lhs = x_ref[pl.ds(kh, r1), :].astype(jnp.bfloat16)
            acc1 = acc1 + jnp.dot(lhs, t1_ref[kh],
                                  preferred_element_type=jnp.float32)
        h1_s[...] = jnp.maximum(acc1 + bias1_ref[...], 0.0)

        # ---- layer 2: dense conv2 rows from dense conv1 rows ----------------
        acc2 = jnp.zeros((s2, k2n), jnp.float32)
        for kh in range(5):
            lhs = h1_s[pl.ds(2 * kh, s2), :].astype(jnp.bfloat16)
            acc2 = acc2 + jnp.dot(lhs, t2_ref[kh],
                                  preferred_element_type=jnp.float32)
        h2_s[...] = jnp.maximum(acc2 + bias2_ref[...], 0.0)

        # ---- layer 3 + head: true conv2 rows sit at h2_s[4*i2]; conv3 row i3
        #      needs conv2 rows 2*i3+kh -> h2_s[8*i3 + 4*kh].  Only the oh3
        #      final rows are computed, then fed straight into the head.
        q = biash_ref[...]
        for i3 in range(oh3):
            acc3 = jnp.zeros((1, k3n), jnp.float32)
            for kh in range(5):
                lhs = h2_s[pl.ds(8 * i3 + 4 * kh, 1), :].astype(jnp.bfloat16)
                acc3 = acc3 + jnp.dot(lhs, t3_ref[kh],
                                      preferred_element_type=jnp.float32)
            a3 = jnp.maximum(acc3 + bias3_ref[...], 0.0).astype(jnp.bfloat16)
            q = q + jnp.dot(a3, whp_ref[i3], preferred_element_type=jnp.float32)
        o_ref[...] = q

    def forward(x_nchw, kp):
        n = x_nchw.shape[0]
        # NCHW -> NHWC -> (N, H, W*Cin) rows; this is the only XLA glue left.
        x2d = jnp.transpose(x_nchw, (0, 2, 3, 1)).reshape(n, h, w * cin)

        flops = 2 * n * (5 * r1 * k1k * k1n + 5 * s2 * k2k * k2n
                         + oh3 * 5 * k3k * k3n + oh3 * k3n * n_out)
        bytes_accessed = (x2d.size * 4 + n * n_out * 4
                          + (kp["t1"].size + kp["t2"].size + kp["t3"].size
                             + kp["whp"].size) * 2
                          + (kp["bias1"].size + kp["bias2"].size
                             + kp["bias3"].size + kp["biash"].size) * 4)

        out = pl.pallas_call(
            kernel,
            out_shape=jax.ShapeDtypeStruct((n, 1, n_out), jnp.float32),
            grid_spec=pltpu.PrefetchScalarGridSpec(
                num_scalar_prefetch=0,
                grid=(n,),
                in_specs=[
                    pl.BlockSpec((None, h, w * cin), lambda i: (i, 0, 0)),
                    pl.BlockSpec((5, k1k, k1n), lambda i: (0, 0, 0)),
                    pl.BlockSpec((1, k1n), lambda i: (0, 0)),
                    pl.BlockSpec((5, k2k, k2n), lambda i: (0, 0, 0)),
                    pl.BlockSpec((1, k2n), lambda i: (0, 0)),
                    pl.BlockSpec((5, k3k, k3n), lambda i: (0, 0, 0)),
                    pl.BlockSpec((1, k3n), lambda i: (0, 0)),
                    pl.BlockSpec((oh3, ow3 * c3, n_out), lambda i: (0, 0, 0)),
                    pl.BlockSpec((1, n_out), lambda i: (0, 0)),
                ],
                out_specs=pl.BlockSpec((None, 1, n_out), lambda i: (i, 0, 0)),
                scratch_shapes=[
                    pltpu.VMEM((r1, k1n), jnp.float32),   # layer-1 dense rows
                    pltpu.VMEM((s2, k2n), jnp.float32),   # layer-2 dense rows
                ]),
            compiler_params=pltpu.CompilerParams(
                dimension_semantics=("parallel",)),
            cost_estimate=pl.CostEstimate(
                flops=flops, transcendentals=0, bytes_accessed=bytes_accessed),
        )(x2d, kp["t1"], kp["bias1"], kp["t2"], kp["bias2"], kp["t3"],
          kp["bias3"], kp["whp"], kp["biash"])
        return out.reshape(n, n_out)

    return jax.jit(forward)


# ----------------------------------------------------------------------------
# Pure-JAX reference (PyTorch semantics, eval-mode BN) for self-check
# ----------------------------------------------------------------------------
def dqn_forward_ref(x_nchw, p, eps=1e-5):
    def block(x, wkey, bkey, bnkey):
        wgt, b = p[wkey], p[bkey]
        gamma, beta, mean, var = p[bnkey]
        y = jax.lax.conv_general_dilated(
            x, wgt, window_strides=(2, 2), padding="VALID",
            dimension_numbers=("NCHW", "OIHW", "NCHW"))
        y = y + b.reshape(1, -1, 1, 1)
        y = ((y - mean.reshape(1, -1, 1, 1))
             * (gamma.reshape(1, -1, 1, 1)
                / jnp.sqrt(var.reshape(1, -1, 1, 1) + eps))
             + beta.reshape(1, -1, 1, 1))
        return jnp.maximum(y, 0.0)

    x = block(x_nchw, "w1", "b1", "bn1")
    x = block(x, "w2", "b2", "bn2")
    x = block(x, "w3", "b3", "bn3")
    n = x.shape[0]
    feat = x.reshape(n, -1)                         # PyTorch x.view(N, -1)
    return feat @ p["head_w"].T + p["head_b"][None, :]


if __name__ == "__main__":
    key = jax.random.PRNGKey(0)
    k_param, k_input = jax.random.split(key)

    # DQN-typical small shapes: batch=2, 3 channels, 40x40 screen, 4 actions.
    N, H, W, OUT = 2, 40, 40, 4
    x = jax.random.normal(k_input, (N, 3, H, W), jnp.float32)

    params = init_dqn_params(H, W, OUT, k_param)        # PyTorch-layout params
    kparams = prepare_kernel_params(params, H, W, OUT)  # folded / Toeplitz

    dqn_forward = build_dqn_forward(H, W, OUT)
    out = jax.block_until_ready(dqn_forward(x, kparams))

    ref = dqn_forward_ref(x, params)
    assert out.shape == (N, OUT), out.shape
    max_err = float(jnp.max(jnp.abs(out - ref)))
    # bf16 MXU operands with f32 accumulation -> slightly looser tolerance.
    assert jnp.allclose(out, ref, rtol=5e-2, atol=5e-2), f"max err {max_err}"

    print("KERNEL_OK")
</pallas_src>

<mosaic_0001>
module attributes {stable_mosaic.version = 11 : i64} {
  func.func @kernel(%arg0: i32, %arg1: memref<1x40x120xf32, #tpu.memory_space<vmem>>, %arg2: memref<5x120x288xbf16, #tpu.memory_space<vmem>>, %arg3: memref<1x288xf32, #tpu.memory_space<vmem>>, %arg4: memref<5x288x224xbf16, #tpu.memory_space<vmem>>, %arg5: memref<1x224xf32, #tpu.memory_space<vmem>>, %arg6: memref<5x224x64xbf16, #tpu.memory_space<vmem>>, %arg7: memref<1x64xf32, #tpu.memory_space<vmem>>, %arg8: memref<2x64x4xbf16, #tpu.memory_space<vmem>>, %arg9: memref<1x4xf32, #tpu.memory_space<vmem>>, %arg10: memref<1x1x4xf32, #tpu.memory_space<vmem>>, %arg11: memref<33x288xf32, #tpu.memory_space<vmem>>, %arg12: memref<25x224xf32, #tpu.memory_space<vmem>>) attributes {dimension_semantics = [#tpu.dimension_semantics<parallel>], iteration_bounds = array<i64: 2>, scalar_prefetch = 0 : i64, scratch_operands = 2 : i64, tpu.core_type = #tpu.core_type<tc>, window_params = [{transform_indices = @transform_0, window_bounds = array<i64: 1, 40, 120>}, {pipeline_mode = #tpu.pipeline_mode<synchronous>, transform_indices = @transform_1, window_bounds = array<i64: 5, 120, 288>}, {pipeline_mode = #tpu.pipeline_mode<synchronous>, transform_indices = @transform_2, window_bounds = array<i64: 1, 288>}, {pipeline_mode = #tpu.pipeline_mode<synchronous>, transform_indices = @transform_3, window_bounds = array<i64: 5, 288, 224>}, {pipeline_mode = #tpu.pipeline_mode<synchronous>, transform_indices = @transform_4, window_bounds = array<i64: 1, 224>}, {pipeline_mode = #tpu.pipeline_mode<synchronous>, transform_indices = @transform_5, window_bounds = array<i64: 5, 224, 64>}, {pipeline_mode = #tpu.pipeline_mode<synchronous>, transform_indices = @transform_6, window_bounds = array<i64: 1, 64>}, {pipeline_mode = #tpu.pipeline_mode<synchronous>, transform_indices = @transform_7, window_bounds = array<i64: 2, 64, 4>}, {pipeline_mode = #tpu.pipeline_mode<synchronous>, transform_indices = @transform_8, window_bounds = array<i64: 1, 4>}, {transform_indices = @transform_9, window_bounds = array<i64: 1, 1, 4>}]} {
    %cst = arith.constant 0.000000e+00 : f32
    %0 = vector.broadcast %cst : f32 to vector<33x288xf32>
    %c0 = arith.constant 0 : index
    %c0_0 = arith.constant 0 : index
    %c0_1 = arith.constant 0 : index
    %1 = vector.load %arg1[%c0, %c0_0, %c0_1] : memref<1x40x120xf32, #tpu.memory_space<vmem>>, vector<1x33x120xf32>
    %2 = vector.shape_cast %1 : vector<1x33x120xf32> to vector<33x120xf32>
    %3 = arith.truncf %2 : vector<33x120xf32> to vector<33x120xbf16>
    %c0_2 = arith.constant 0 : index
    %c0_3 = arith.constant 0 : index
    %c0_4 = arith.constant 0 : index
    %4 = vector.load %arg2[%c0_2, %c0_3, %c0_4] : memref<5x120x288xbf16, #tpu.memory_space<vmem>>, vector<1x120x288xbf16>
    %5 = vector.shape_cast %4 : vector<1x120x288xbf16> to vector<120x288xbf16>
    %cst_5 = arith.constant dense<0.000000e+00> : vector<33x288xf32>
    %6 = tpu.matmul %3, %5, %cst_5 {dimension_numbers = #tpu.dot_dimension_numbers<[1], [0], [0], [1], [0, 0, 1, 1], [], []>} : vector<33x120xbf16>, vector<120x288xbf16>, vector<33x288xf32> -> vector<33x288xf32>
    %7 = arith.addf %0, %6 : vector<33x288xf32>
    %c0_6 = arith.constant 0 : index
    %c1 = arith.constant 1 : index
    %c0_7 = arith.constant 0 : index
    %8 = vector.load %arg1[%c0_6, %c1, %c0_7] : memref<1x40x120xf32, #tpu.memory_space<vmem>>, vector<1x33x120xf32>
    %9 = vector.shape_cast %8 : vector<1x33x120xf32> to vector<33x120xf32>
    %10 = arith.truncf %9 : vector<33x120xf32> to vector<33x120xbf16>
    %c1_8 = arith.constant 1 : index
    %c0_9 = arith.constant 0 : index
    %c0_10 = arith.constant 0 : index
    %11 = vector.load %arg2[%c1_8, %c0_9, %c0_10] : memref<5x120x288xbf16, #tpu.memory_space<vmem>>, vector<1x120x288xbf16>
    %12 = vector.shape_cast %11 : vector<1x120x288xbf16> to vector<120x288xbf16>
    %cst_11 = arith.constant dense<0.000000e+00> : vector<33x288xf32>
    %13 = tpu.matmul %10, %12, %cst_11 {dimension_numbers = #tpu.dot_dimension_numbers<[1], [0], [0], [1], [0, 0, 1, 1], [], []>} : vector<33x120xbf16>, vector<120x288xbf16>, vector<33x288xf32> -> vector<33x288xf32>
    %14 = arith.addf %7, %13 : vector<33x288xf32>
    %c0_12 = arith.constant 0 : index
    %c2 = arith.constant 2 : index
    %c0_13 = arith.constant 0 : index
    %15 = vector.load %arg1[%c0_12, %c2, %c0_13] : memref<1x40x120xf32, #tpu.memory_space<vmem>>, vector<1x33x120xf32>
    %16 = vector.shape_cast %15 : vector<1x33x120xf32> to vector<33x120xf32>
    %17 = arith.truncf %16 : vector<33x120xf32> to vector<33x120xbf16>
    %c2_14 = arith.constant 2 : index
    %c0_15 = arith.constant 0 : index
    %c0_16 = arith.constant 0 : index
    %18 = vector.load %arg2[%c2_14, %c0_15, %c0_16] : memref<5x120x288xbf16, #tpu.memory_space<vmem>>, vector<1x120x288xbf16>
    %19 = vector.shape_cast %18 : vector<1x120x288xbf16> to vector<120x288xbf16>
    %cst_17 = arith.constant dense<0.000000e+00> : vector<33x288xf32>
    %20 = tpu.matmul %17, %19, %cst_17 {dimension_numbers = #tpu.dot_dimension_numbers<[1], [0], [0], [1], [0, 0, 1, 1], [], []>} : vector<33x120xbf16>, vector<120x288xbf16>, vector<33x288xf32> -> vector<33x288xf32>
    %21 = arith.addf %14, %20 : vector<33x288xf32>
    %c0_18 = arith.constant 0 : index
    %c3 = arith.constant 3 : index
    %c0_19 = arith.constant 0 : index
    %22 = vector.load %arg1[%c0_18, %c3, %c0_19] : memref<1x40x120xf32, #tpu.memory_space<vmem>>, vector<1x33x120xf32>
    %23 = vector.shape_cast %22 : vector<1x33x120xf32> to vector<33x120xf32>
    %24 = arith.truncf %23 : vector<33x120xf32> to vector<33x120xbf16>
    %c3_20 = arith.constant 3 : index
    %c0_21 = arith.constant 0 : index
    %c0_22 = arith.constant 0 : index
    %25 = vector.load %arg2[%c3_20, %c0_21, %c0_22] : memref<5x120x288xbf16, #tpu.memory_space<vmem>>, vector<1x120x288xbf16>
    %26 = vector.shape_cast %25 : vector<1x120x288xbf16> to vector<120x288xbf16>
    %cst_23 = arith.constant dense<0.000000e+00> : vector<33x288xf32>
    %27 = tpu.matmul %24, %26, %cst_23 {dimension_numbers = #tpu.dot_dimension_numbers<[1], [0], [0], [1], [0, 0, 1, 1], [], []>} : vector<33x120xbf16>, vector<120x288xbf16>, vector<33x288xf32> -> vector<33x288xf32>
    %28 = arith.addf %21, %27 : vector<33x288xf32>
    %c0_24 = arith.constant 0 : index
    %c4 = arith.constant 4 : index
    %c0_25 = arith.constant 0 : index
    %29 = vector.load %arg1[%c0_24, %c4, %c0_25] : memref<1x40x120xf32, #tpu.memory_space<vmem>>, vector<1x33x120xf32>
    %30 = vector.shape_cast %29 : vector<1x33x120xf32> to vector<33x120xf32>
    %31 = arith.truncf %30 : vector<33x120xf32> to vector<33x120xbf16>
    %c4_26 = arith.constant 4 : index
    %c0_27 = arith.constant 0 : index
    %c0_28 = arith.constant 0 : index
    %32 = vector.load %arg2[%c4_26, %c0_27, %c0_28] : memref<5x120x288xbf16, #tpu.memory_space<vmem>>, vector<1x120x288xbf16>
    %33 = vector.shape_cast %32 : vector<1x120x288xbf16> to vector<120x288xbf16>
    %cst_29 = arith.constant dense<0.000000e+00> : vector<33x288xf32>
    %34 = tpu.matmul %31, %33, %cst_29 {dimension_numbers = #tpu.dot_dimension_numbers<[1], [0], [0], [1], [0, 0, 1, 1], [], []>} : vector<33x120xbf16>, vector<120x288xbf16>, vector<33x288xf32> -> vector<33x288xf32>
    %35 = arith.addf %28, %34 : vector<33x288xf32>
    %c0_30 = arith.constant 0 : index
    %c0_31 = arith.constant 0 : index
    %36 = vector.load %arg3[%c0_30, %c0_31] : memref<1x288xf32, #tpu.memory_space<vmem>>, vector<1x288xf32>
    %37 = vector.broadcast %36 : vector<1x288xf32> to vector<33x288xf32>
    %38 = arith.addf %35, %37 : vector<33x288xf32>
    %cst_32 = arith.constant 0.000000e+00 : f32
    %39 = vector.broadcast %cst_32 : f32 to vector<33x288xf32>
    %40 = arith.maximumf %38, %39 : vector<33x288xf32>
    %c0_33 = arith.constant 0 : index
    %c0_34 = arith.constant 0 : index
    %41 = vector.load %arg11[%c0_33, %c0_34] : memref<33x288xf32, #tpu.memory_space<vmem>>, vector<33x288xf32>
    tpu.vector_store %arg11[%c0_33, %c0_34], %40 {strides = array<i32>} : memref<33x288xf32, #tpu.memory_space<vmem>>, vector<33x288xf32>,
    %cst_35 = arith.constant 0.000000e+00 : f32
    %42 = vector.broadcast %cst_35 : f32 to vector<25x224xf32>
    %c0_36 = arith.constant 0 : index
    %c0_37 = arith.constant 0 : index
    %43 = vector.load %arg11[%c0_36, %c0_37] : memref<33x288xf32, #tpu.memory_space<vmem>>, vector<25x288xf32>
    %44 = arith.truncf %43 : vector<25x288xf32> to vector<25x288xbf16>
    %c0_38 = arith.constant 0 : index
    %c0_39 = arith.constant 0 : index
    %c0_40 = arith.constant 0 : index
    %45 = vector.load %arg4[%c0_38, %c0_39, %c0_40] : memref<5x288x224xbf16, #tpu.memory_space<vmem>>, vector<1x288x224xbf16>
    %46 = vector.shape_cast %45 : vector<1x288x224xbf16> to vector<288x224xbf16>
    %cst_41 = arith.constant dense<0.000000e+00> : vector<25x224xf32>
    %47 = tpu.matmul %44, %46, %cst_41 {dimension_numbers = #tpu.dot_dimension_numbers<[1], [0], [0], [1], [0, 0, 1, 1], [], []>} : vector<25x288xbf16>, vector<288x224xbf16>, vector<25x224xf32> -> vector<25x224xf32>
    %48 = arith.addf %42, %47 : vector<25x224xf32>
    %c2_42 = arith.constant 2 : index
    %c0_43 = arith.constant 0 : index
    %49 = vector.load %arg11[%c2_42, %c0_43] : memref<33x288xf32, #tpu.memory_space<vmem>>, vector<25x288xf32>
    %50 = arith.truncf %49 : vector<25x288xf32> to vector<25x288xbf16>
    %c1_44 = arith.constant 1 : index
    %c0_45 = arith.constant 0 : index
    %c0_46 = arith.constant 0 : index
    %51 = vector.load %arg4[%c1_44, %c0_45, %c0_46] : memref<5x288x224xbf16, #tpu.memory_space<vmem>>, vector<1x288x224xbf16>
    %52 = vector.shape_cast %51 : vector<1x288x224xbf16> to vector<288x224xbf16>
    %cst_47 = arith.constant dense<0.000000e+00> : vector<25x224xf32>
    %53 = tpu.matmul %50, %52, %cst_47 {dimension_numbers = #tpu.dot_dimension_numbers<[1], [0], [0], [1], [0, 0, 1, 1], [], []>} : vector<25x288xbf16>, vector<288x224xbf16>, vector<25x224xf32> -> vector<25x224xf32>
    %54 = arith.addf %48, %53 : vector<25x224xf32>
    %c4_48 = arith.constant 4 : index
    %c0_49 = arith.constant 0 : index
    %55 = vector.load %arg11[%c4_48, %c0_49] : memref<33x288xf32, #tpu.memory_space<vmem>>, vector<25x288xf32>
    %56 = arith.truncf %55 : vector<25x288xf32> to vector<25x288xbf16>
    %c2_50 = arith.constant 2 : index
    %c0_51 = arith.constant 0 : index
    %c0_52 = arith.constant 0 : index
    %57 = vector.load %arg4[%c2_50, %c0_51, %c0_52] : memref<5x288x224xbf16, #tpu.memory_space<vmem>>, vector<1x288x224xbf16>
    %58 = vector.shape_cast %57 : vector<1x288x224xbf16> to vector<288x224xbf16>
    %cst_53 = arith.constant dense<0.000000e+00> : vector<25x224xf32>
    %59 = tpu.matmul %56, %58, %cst_53 {dimension_numbers = #tpu.dot_dimension_numbers<[1], [0], [0], [1], [0, 0, 1, 1], [], []>} : vector<25x288xbf16>, vector<288x224xbf16>, vector<25x224xf32> -> vector<25x224xf32>
    %60 = arith.addf %54, %59 : vector<25x224xf32>
    %c6 = arith.constant 6 : index
    %c0_54 = arith.constant 0 : index
    %61 = vector.load %arg11[%c6, %c0_54] : memref<33x288xf32, #tpu.memory_space<vmem>>, vector<25x288xf32>
    %62 = arith.truncf %61 : vector<25x288xf32> to vector<25x288xbf16>
    %c3_55 = arith.constant 3 : index
    %c0_56 = arith.constant 0 : index
    %c0_57 = arith.constant 0 : index
    %63 = vector.load %arg4[%c3_55, %c0_56, %c0_57] : memref<5x288x224xbf16, #tpu.memory_space<vmem>>, vector<1x288x224xbf16>
    %64 = vector.shape_cast %63 : vector<1x288x224xbf16> to vector<288x224xbf16>
    %cst_58 = arith.constant dense<0.000000e+00> : vector<25x224xf32>
    %65 = tpu.matmul %62, %64, %cst_58 {dimension_numbers = #tpu.dot_dimension_numbers<[1], [0], [0], [1], [0, 0, 1, 1], [], []>} : vector<25x288xbf16>, vector<288x224xbf16>, vector<25x224xf32> -> vector<25x224xf32>
    %66 = arith.addf %60, %65 : vector<25x224xf32>
    %c8 = arith.constant 8 : index
    %c0_59 = arith.constant 0 : index
    %67 = vector.load %arg11[%c8, %c0_59] : memref<33x288xf32, #tpu.memory_space<vmem>>, vector<25x288xf32>
    %68 = arith.truncf %67 : vector<25x288xf32> to vector<25x288xbf16>
    %c4_60 = arith.constant 4 : index
    %c0_61 = arith.constant 0 : index
    %c0_62 = arith.constant 0 : index
    %69 = vector.load %arg4[%c4_60, %c0_61, %c0_62] : memref<5x288x224xbf16, #tpu.memory_space<vmem>>, vector<1x288x224xbf16>
    %70 = vector.shape_cast %69 : vector<1x288x224xbf16> to vector<288x224xbf16>
    %cst_63 = arith.constant dense<0.000000e+00> : vector<25x224xf32>
    %71 = tpu.matmul %68, %70, %cst_63 {dimension_numbers = #tpu.dot_dimension_numbers<[1], [0], [0], [1], [0, 0, 1, 1], [], []>} : vector<25x288xbf16>, vector<288x224xbf16>, vector<25x224xf32> -> vector<25x224xf32>
    %72 = arith.addf %66, %71 : vector<25x224xf32>
    %c0_64 = arith.constant 0 : index
    %c0_65 = arith.constant 0 : index
    %73 = vector.load %arg5[%c0_64, %c0_65] : memref<1x224xf32, #tpu.memory_space<vmem>>, vector<1x224xf32>
    %74 = vector.broadcast %73 : vector<1x224xf32> to vector<25x224xf32>
    %75 = arith.addf %72, %74 : vector<25x224xf32>
    %cst_66 = arith.constant 0.000000e+00 : f32
    %76 = vector.broadcast %cst_66 : f32 to vector<25x224xf32>
    %77 = arith.maximumf %75, %76 : vector<25x224xf32>
    %c0_67 = arith.constant 0 : index
    %c0_68 = arith.constant 0 : index
    %78 = vector.load %arg12[%c0_67, %c0_68] : memref<25x224xf32, #tpu.memory_space<vmem>>, vector<25x224xf32>
    tpu.vector_store %arg12[%c0_67, %c0_68], %77 {strides = array<i32>} : memref<25x224xf32, #tpu.memory_space<vmem>>, vector<25x224xf32>,
    %c0_69 = arith.constant 0 : index
    %c0_70 = arith.constant 0 : index
    %79 = vector.load %arg9[%c0_69, %c0_70] : memref<1x4xf32, #tpu.memory_space<vmem>>, vector<1x4xf32>
    %cst_71 = arith.constant 0.000000e+00 : f32
    %80 = vector.broadcast %cst_71 : f32 to vector<1x64xf32>
    %c0_72 = arith.constant 0 : index
    %c0_73 = arith.constant 0 : index
    %81 = vector.load %arg12[%c0_72, %c0_73] : memref<25x224xf32, #tpu.memory_space<vmem>>, vector<1x224xf32>
    %82 = arith.truncf %81 : vector<1x224xf32> to vector<1x224xbf16>
    %c0_74 = arith.constant 0 : index
    %c0_75 = arith.constant 0 : index
    %c0_76 = arith.constant 0 : index
    %83 = vector.load %arg6[%c0_74, %c0_75, %c0_76] : memref<5x224x64xbf16, #tpu.memory_space<vmem>>, vector<1x224x64xbf16>
    %84 = vector.shape_cast %83 : vector<1x224x64xbf16> to vector<224x64xbf16>
    %cst_77 = arith.constant dense<0.000000e+00> : vector<1x64xf32>
    %85 = tpu.matmul %82, %84, %cst_77 {dimension_numbers = #tpu.dot_dimension_numbers<[1], [0], [0], [1], [0, 0, 1, 1], [], []>} : vector<1x224xbf16>, vector<224x64xbf16>, vector<1x64xf32> -> vector<1x64xf32>
    %86 = arith.addf %80, %85 : vector<1x64xf32>
    %c4_78 = arith.constant 4 : index
    %c0_79 = arith.constant 0 : index
    %87 = vector.load %arg12[%c4_78, %c0_79] : memref<25x224xf32, #tpu.memory_space<vmem>>, vector<1x224xf32>
    %88 = arith.truncf %87 : vector<1x224xf32> to vector<1x224xbf16>
    %c1_80 = arith.constant 1 : index
    %c0_81 = arith.constant 0 : index
    %c0_82 = arith.constant 0 : index
    %89 = vector.load %arg6[%c1_80, %c0_81, %c0_82] : memref<5x224x64xbf16, #tpu.memory_space<vmem>>, vector<1x224x64xbf16>
    %90 = vector.shape_cast %89 : vector<1x224x64xbf16> to vector<224x64xbf16>
    %cst_83 = arith.constant dense<0.000000e+00> : vector<1x64xf32>
    %91 = tpu.matmul %88, %90, %cst_83 {dimension_numbers = #tpu.dot_dimension_numbers<[1], [0], [0], [1], [0, 0, 1, 1], [], []>} : vector<1x224xbf16>, vector<224x64xbf16>, vector<1x64xf32> -> vector<1x64xf32>
    %92 = arith.addf %86, %91 : vector<1x64xf32>
    %c8_84 = arith.constant 8 : index
    %c0_85 = arith.constant 0 : index
    %93 = vector.load %arg12[%c8_84, %c0_85] : memref<25x224xf32, #tpu.memory_space<vmem>>, vector<1x224xf32>
    %94 = arith.truncf %93 : vector<1x224xf32> to vector<1x224xbf16>
    %c2_86 = arith.constant 2 : index
    %c0_87 = arith.constant 0 : index
    %c0_88 = arith.constant 0 : index
    %95 = vector.load %arg6[%c2_86, %c0_87, %c0_88] : memref<5x224x64xbf16, #tpu.memory_space<vmem>>, vector<1x224x64xbf16>
    %96 = vector.shape_cast %95 : vector<1x224x64xbf16> to vector<224x64xbf16>
    %cst_89 = arith.constant dense<0.000000e+00> : vector<1x64xf32>
    %97 = tpu.matmul %94, %96, %cst_89 {dimension_numbers = #tpu.dot_dimension_numbers<[1], [0], [0], [1], [0, 0, 1, 1], [], []>} : vector<1x224xbf16>, vector<224x64xbf16>, vector<1x64xf32> -> vector<1x64xf32>
    %98 = arith.addf %92, %97 : vector<1x64xf32>
    %c12 = arith.constant 12 : index
    %c0_90 = arith.constant 0 : index
    %99 = vector.load %arg12[%c12, %c0_90] : memref<25x224xf32, #tpu.memory_space<vmem>>, vector<1x224xf32>
    %100 = arith.truncf %99 : vector<1x224xf32> to vector<1x224xbf16>
    %c3_91 = arith.constant 3 : index
    %c0_92 = arith.constant 0 : index
    %c0_93 = arith.constant 0 : index
    %101 = vector.load %arg6[%c3_91, %c0_92, %c0_93] : memref<5x224x64xbf16, #tpu.memory_space<vmem>>, vector<1x224x64xbf16>
    %102 = vector.shape_cast %101 : vector<1x224x64xbf16> to vector<224x64xbf16>
    %cst_94 = arith.constant dense<0.000000e+00> : vector<1x64xf32>
    %103 = tpu.matmul %100, %102, %cst_94 {dimension_numbers = #tpu.dot_dimension_numbers<[1], [0], [0], [1], [0, 0, 1, 1], [], []>} : vector<1x224xbf16>, vector<224x64xbf16>, vector<1x64xf32> -> vector<1x64xf32>
    %104 = arith.addf %98, %103 : vector<1x64xf32>
    %c16 = arith.constant 16 : index
    %c0_95 = arith.constant 0 : index
    %105 = vector.load %arg12[%c16, %c0_95] : memref<25x224xf32, #tpu.memory_space<vmem>>, vector<1x224xf32>
    %106 = arith.truncf %105 : vector<1x224xf32> to vector<1x224xbf16>
    %c4_96 = arith.constant 4 : index
    %c0_97 = arith.constant 0 : index
    %c0_98 = arith.constant 0 : index
    %107 = vector.load %arg6[%c4_96, %c0_97, %c0_98] : memref<5x224x64xbf16, #tpu.memory_space<vmem>>, vector<1x224x64xbf16>
    %108 = vector.shape_cast %107 : vector<1x224x64xbf16> to vector<224x64xbf16>
    %cst_99 = arith.constant dense<0.000000e+00> : vector<1x64xf32>
    %109 = tpu.matmul %106, %108, %cst_99 {dimension_numbers = #tpu.dot_dimension_numbers<[1], [0], [0], [1], [0, 0, 1, 1], [], []>} : vector<1x224xbf16>, vector<224x64xbf16>, vector<1x64xf32> -> vector<1x64xf32>
    %110 = arith.addf %104, %109 : vector<1x64xf32>
    %c0_100 = arith.constant 0 : index
    %c0_101 = arith.constant 0 : index
    %111 = vector.load %arg7[%c0_100, %c0_101] : memref<1x64xf32, #tpu.memory_space<vmem>>, vector<1x64xf32>
    %112 = arith.addf %110, %111 : vector<1x64xf32>
    %cst_102 = arith.constant 0.000000e+00 : f32
    %113 = vector.broadcast %cst_102 : f32 to vector<1x64xf32>
    %114 = arith.maximumf %112, %113 : vector<1x64xf32>
    %115 = arith.truncf %114 : vector<1x64xf32> to vector<1x64xbf16>
    %c0_103 = arith.constant 0 : index
    %c0_104 = arith.constant 0 : index
    %c0_105 = arith.constant 0 : index
    %116 = vector.load %arg8[%c0_103, %c0_104, %c0_105] : memref<2x64x4xbf16, #tpu.memory_space<vmem>>, vector<1x64x4xbf16>
    %117 = vector.shape_cast %116 : vector<1x64x4xbf16> to vector<64x4xbf16>
    %cst_106 = arith.constant dense<0.000000e+00> : vector<1x4xf32>
    %118 = tpu.matmul %115, %117, %cst_106 {dimension_numbers = #tpu.dot_dimension_numbers<[1], [0], [0], [1], [0, 0, 1, 1], [], []>} : vector<1x64xbf16>, vector<64x4xbf16>, vector<1x4xf32> -> vector<1x4xf32>
    %119 = arith.addf %79, %118 : vector<1x4xf32>
    %cst_107 = arith.constant 0.000000e+00 : f32
    %120 = vector.broadcast %cst_107 : f32 to vector<1x64xf32>
    %c8_108 = arith.constant 8 : index
    %c0_109 = arith.constant 0 : index
    %121 = vector.load %arg12[%c8_108, %c0_109] : memref<25x224xf32, #tpu.memory_space<vmem>>, vector<1x224xf32>
    %122 = arith.truncf %121 : vector<1x224xf32> to vector<1x224xbf16>
    %c0_110 = arith.constant 0 : index
    %c0_111 = arith.constant 0 : index
    %c0_112 = arith.constant 0 : index
    %123 = vector.load %arg6[%c0_110, %c0_111, %c0_112] : memref<5x224x64xbf16, #tpu.memory_space<vmem>>, vector<1x224x64xbf16>
    %124 = vector.shape_cast %123 : vector<1x224x64xbf16> to vector<224x64xbf16>
    %cst_113 = arith.constant dense<0.000000e+00> : vector<1x64xf32>
    %125 = tpu.matmul %122, %124, %cst_113 {dimension_numbers = #tpu.dot_dimension_numbers<[1], [0], [0], [1], [0, 0, 1, 1], [], []>} : vector<1x224xbf16>, vector<224x64xbf16>, vector<1x64xf32> -> vector<1x64xf32>
    %126 = arith.addf %120, %125 : vector<1x64xf32>
    %c12_114 = arith.constant 12 : index
    %c0_115 = arith.constant 0 : index
    %127 = vector.load %arg12[%c12_114, %c0_115] : memref<25x224xf32, #tpu.memory_space<vmem>>, vector<1x224xf32>
    %128 = arith.truncf %127 : vector<1x224xf32> to vector<1x224xbf16>
    %c1_116 = arith.constant 1 : index
    %c0_117 = arith.constant 0 : index
    %c0_118 = arith.constant 0 : index
    %129 = vector.load %arg6[%c1_116, %c0_117, %c0_118] : memref<5x224x64xbf16, #tpu.memory_space<vmem>>, vector<1x224x64xbf16>
    %130 = vector.shape_cast %129 : vector<1x224x64xbf16> to vector<224x64xbf16>
    %cst_119 = arith.constant dense<0.000000e+00> : vector<1x64xf32>
    %131 = tpu.matmul %128, %130, %cst_119 {dimension_numbers = #tpu.dot_dimension_numbers<[1], [0], [0], [1], [0, 0, 1, 1], [], []>} : vector<1x224xbf16>, vector<224x64xbf16>, vector<1x64xf32> -> vector<1x64xf32>
    %132 = arith.addf %126, %131 : vector<1x64xf32>
    %c16_120 = arith.constant 16 : index
    %c0_121 = arith.constant 0 : index
    %133 = vector.load %arg12[%c16_120, %c0_121] : memref<25x224xf32, #tpu.memory_space<vmem>>, vector<1x224xf32>
    %134 = arith.truncf %133 : vector<1x224xf32> to vector<1x224xbf16>
    %c2_122 = arith.constant 2 : index
    %c0_123 = arith.constant 0 : index
    %c0_124 = arith.constant 0 : index
    %135 = vector.load %arg6[%c2_122, %c0_123, %c0_124] : memref<5x224x64xbf16, #tpu.memory_space<vmem>>, vector<1x224x64xbf16>
    %136 = vector.shape_cast %135 : vector<1x224x64xbf16> to vector<224x64xbf16>
    %cst_125 = arith.constant dense<0.000000e+00> : vector<1x64xf32>
    %137 = tpu.matmul %134, %136, %cst_125 {dimension_numbers = #tpu.dot_dimension_numbers<[1], [0], [0], [1], [0, 0, 1, 1], [], []>} : vector<1x224xbf16>, vector<224x64xbf16>, vector<1x64xf32> -> vector<1x64xf32>
    %138 = arith.addf %132, %137 : vector<1x64xf32>
    %c20 = arith.constant 20 : index
    %c0_126 = arith.constant 0 : index
    %139 = vector.load %arg12[%c20, %c0_126] : memref<25x224xf32, #tpu.memory_space<vmem>>, vector<1x224xf32>
    %140 = arith.truncf %139 : vector<1x224xf32> to vector<1x224xbf16>
    %c3_127 = arith.constant 3 : index
    %c0_128 = arith.constant 0 : index
    %c0_129 = arith.constant 0 : index
    %141 = vector.load %arg6[%c3_127, %c0_128, %c0_129] : memref<5x224x64xbf16, #tpu.memory_space<vmem>>, vector<1x224x64xbf16>
    %142 = vector.shape_cast %141 : vector<1x224x64xbf16> to vector<224x64xbf16>
    %cst_130 = arith.constant dense<0.000000e+00> : vector<1x64xf32>
    %143 = tpu.matmul %140, %142, %cst_130 {dimension_numbers = #tpu.dot_dimension_numbers<[1], [0], [0], [1], [0, 0, 1, 1], [], []>} : vector<1x224xbf16>, vector<224x64xbf16>, vector<1x64xf32> -> vector<1x64xf32>
    %144 = arith.addf %138, %143 : vector<1x64xf32>
    %c24 = arith.constant 24 : index
    %c0_131 = arith.constant 0 : index
    %145 = vector.load %arg12[%c24, %c0_131] : memref<25x224xf32, #tpu.memory_space<vmem>>, vector<1x224xf32>
    %146 = arith.truncf %145 : vector<1x224xf32> to vector<1x224xbf16>
    %c4_132 = arith.constant 4 : index
    %c0_133 = arith.constant 0 : index
    %c0_134 = arith.constant 0 : index
    %147 = vector.load %arg6[%c4_132, %c0_133, %c0_134] : memref<5x224x64xbf16, #tpu.memory_space<vmem>>, vector<1x224x64xbf16>
    %148 = vector.shape_cast %147 : vector<1x224x64xbf16> to vector<224x64xbf16>
    %cst_135 = arith.constant dense<0.000000e+00> : vector<1x64xf32>
    %149 = tpu.matmul %146, %148, %cst_135 {dimension_numbers = #tpu.dot_dimension_numbers<[1], [0], [0], [1], [0, 0, 1, 1], [], []>} : vector<1x224xbf16>, vector<224x64xbf16>, vector<1x64xf32> -> vector<1x64xf32>
    %150 = arith.addf %144, %149 : vector<1x64xf32>
    %c0_136 = arith.constant 0 : index
    %c0_137 = arith.constant 0 : index
    %151 = vector.load %arg7[%c0_136, %c0_137] : memref<1x64xf32, #tpu.memory_space<vmem>>, vector<1x64xf32>
    %152 = arith.addf %150, %151 : vector<1x64xf32>
    %cst_138 = arith.constant 0.000000e+00 : f32
    %153 = vector.broadcast %cst_138 : f32 to vector<1x64xf32>
    %154 = arith.maximumf %152, %153 : vector<1x64xf32>
    %155 = arith.truncf %154 : vector<1x64xf32> to vector<1x64xbf16>
    %c1_139 = arith.constant 1 : index
    %c0_140 = arith.constant 0 : index
    %c0_141 = arith.constant 0 : index
    %156 = vector.load %arg8[%c1_139, %c0_140, %c0_141] : memref<2x64x4xbf16, #tpu.memory_space<vmem>>, vector<1x64x4xbf16>
    %157 = vector.shape_cast %156 : vector<1x64x4xbf16> to vector<64x4xbf16>
    %cst_142 = arith.constant dense<0.000000e+00> : vector<1x4xf32>
    %158 = tpu.matmul %155, %157, %cst_142 {dimension_numbers = #tpu.dot_dimension_numbers<[1], [0], [0], [1], [0, 0, 1, 1], [], []>} : vector<1x64xbf16>, vector<64x4xbf16>, vector<1x4xf32> -> vector<1x4xf32>
    %159 = arith.addf %119, %158 : vector<1x4xf32>
    %c0_143 = arith.constant 0 : index
    %c0_144 = arith.constant 0 : index
    %c0_145 = arith.constant 0 : index
    %160 = vector.load %arg10[%c0_143, %c0_144, %c0_145] : memref<1x1x4xf32, #tpu.memory_space<vmem>>, vector<1x1x4xf32>
    %161 = vector.shape_cast %160 : vector<1x1x4xf32> to vector<1x4xf32>
    %162 = vector.shape_cast %159 : vector<1x4xf32> to vector<1x1x4xf32>
    tpu.vector_store %arg10[%c0_143, %c0_144, %c0_145], %162 {strides = array<i32>} : memref<1x1x4xf32, #tpu.memory_space<vmem>>, vector<1x1x4xf32>,
    return
  }
  func.func @transform_0(%arg0: i32) -> (i32, i32, i32) {
    %c0_i32 = arith.constant 0 : i32
    %c0_i32_0 = arith.constant 0 : i32
    %c0_i32_1 = arith.constant 0 : i32
    return %arg0, %c0_i32, %c0_i32_0 : i32, i32, i32
  }
  func.func @transform_1(%arg0: i32) -> (i32, i32, i32) {
    %c0_i32 = arith.constant 0 : i32
    %c0_i32_0 = arith.constant 0 : i32
    %c0_i32_1 = arith.constant 0 : i32
    %c0_i32_2 = arith.constant 0 : i32
    return %c0_i32, %c0_i32_0, %c0_i32_1 : i32, i32, i32
  }
  func.func @transform_2(%arg0: i32) -> (i32, i32) {
    %c0_i32 = arith.constant 0 : i32
    %c0_i32_0 = arith.constant 0 : i32
    %c0_i32_1 = arith.constant 0 : i32
    return %c0_i32, %c0_i32_0 : i32, i32
  }
  func.func @transform_3(%arg0: i32) -> (i32, i32, i32) {
    %c0_i32 = arith.constant 0 : i32
    %c0_i32_0 = arith.constant 0 : i32
    %c0_i32_1 = arith.constant 0 : i32
    %c0_i32_2 = arith.constant 0 : i32
    return %c0_i32, %c0_i32_0, %c0_i32_1 : i32, i32, i32
  }
  func.func @transform_4(%arg0: i32) -> (i32, i32) {
    %c0_i32 = arith.constant 0 : i32
    %c0_i32_0 = arith.constant 0 : i32
    %c0_i32_1 = arith.constant 0 : i32
    return %c0_i32, %c0_i32_0 : i32, i32
  }
  func.func @transform_5(%arg0: i32) -> (i32, i32, i32) {
    %c0_i32 = arith.constant 0 : i32
    %c0_i32_0 = arith.constant 0 : i32
    %c0_i32_1 = arith.constant 0 : i32
    %c0_i32_2 = arith.constant 0 : i32
    return %c0_i32, %c0_i32_0, %c0_i32_1 : i32, i32, i32
  }
  func.func @transform_6(%arg0: i32) -> (i32, i32) {
    %c0_i32 = arith.constant 0 : i32
    %c0_i32_0 = arith.constant 0 : i32
    %c0_i32_1 = arith.constant 0 : i32
    return %c0_i32, %c0_i32_0 : i32, i32
  }
  func.func @transform_7(%arg0: i32) -> (i32, i32, i32) {
    %c0_i32 = arith.constant 0 : i32
    %c0_i32_0 = arith.constant 0 : i32
    %c0_i32_1 = arith.constant 0 : i32
    %c0_i32_2 = arith.constant 0 : i32
    return %c0_i32, %c0_i32_0, %c0_i32_1 : i32, i32, i32
  }
  func.func @transform_8(%arg0: i32) -> (i32, i32) {
    %c0_i32 = arith.constant 0 : i32
    %c0_i32_0 = arith.constant 0 : i32
    %c0_i32_1 = arith.constant 0 : i32
    return %c0_i32, %c0_i32_0 : i32, i32
  }
  func.func @transform_9(%arg0: i32) -> (i32, i32, i32) {
    %c0_i32 = arith.constant 0 : i32
    %c0_i32_0 = arith.constant 0 : i32
    %c0_i32_1 = arith.constant 0 : i32
    return %arg0, %c0_i32, %c0_i32_0 : i32, i32, i32
  }
}

</mosaic_0001>

<llo_original>
// kernel: forward.1
$region0: #{forward.1}
  #allocation0 [shape = 'u32[]', space=smem, size = 0x4, offset = 0x4, fixed_abs, tag = 'smem constant byte address 0x4 - core index']
  #allocation1 [shape = 'u32[72,128]{1,0:T(1,128)}', space=vmem, size = 0x9000, scoped, tag = 'internal scratch']
  #allocation2 [shape = 'f32[33,288]{1,0:T(8,128)}', space=vmem, size = 0xf000, scoped, tag = 'scratch operand']
  #allocation3 [shape = 'f32[25,224]{1,0:T(8,128)}', space=vmem, size = 0x8000, scoped, tag = 'scratch operand']
  %s0 = inlined_call_operand.vmem [shape: f32[2,40,120], index: 0, kind: input, shape index: {}]
  %s1 = inlined_call_operand.vmem [shape: bf16[5,120,288], index: 1, kind: input, shape index: {}]
  %s2 = inlined_call_operand.vmem [shape: f32[1,288], index: 2, kind: input, shape index: {}]
  %s3 = inlined_call_operand.vmem [shape: bf16[5,288,224], index: 3, kind: input, shape index: {}]
  %s4 = inlined_call_operand.vmem [shape: f32[1,224], index: 4, kind: input, shape index: {}]
  %s5 = inlined_call_operand.vmem [shape: bf16[5,224,64], index: 5, kind: input, shape index: {}]
  %s6 = inlined_call_operand.vmem [shape: f32[1,64], index: 6, kind: input, shape index: {}]
  %s7 = inlined_call_operand.vmem [shape: bf16[2,64,4], index: 7, kind: input, shape index: {}]
  %s8 = inlined_call_operand.vmem [shape: f32[1,4], index: 8, kind: input, shape index: {}]
  %s9 = inlined_call_operand.hbm [shape: f32[2,1,4], index: 9, kind: output, shape index: {}]
  %s10 = sld [smem:[#allocation0]]
  $region69: #{forward.1} parent=0
    _
  %s12 = ssub.s32 1, %s10
  %s13 = scalar_select 0, %s12, %s10
  $region1: #{forward.1} parent=0
    #allocation4 [shape = 'u8[1024]{0}', space=vmem, size = 0x400, scoped, tag = 'output window, operand 0']
    #allocation5 [shape = 's32[2]{0}', space=sflag, size = 0x8, scoped, tag = 'scoped memory for forward.1']
    %14 = vsyncpa [#allocation5], 0
    %s15 = scalar_lea.sflag [#allocation5], 1
    %16 = vsyncpa %s15, 0
    loop: start=0, step=1, limit=4
    $region2: #{forward.1} parent=1 // loop_pre_header
      _
    $region3: #{forward.1} parent=1 // loop_header
      %s18 = sphi 0, %s22
      %p19 = scmp.ge.s32.totalorder %s18, 4
      %s28 = sphi 0, %s30
      %s31 = sphi 0, %s28
      %s32 = sphi 0, %s31
      %s48 = sphi 0, %s32
      %s52 = sphi 0, %s52
      %s54 = sphi 0, %s52
      %s55 = sphi 0, %s54
      %s69 = sphi 0, %s55
      %s73 = sphi 0, %s73
      %s75 = sphi 0, %s73
      %s76 = sphi 0, %s75
      %s90 = sphi 0, %s76
      %s94 = sphi 0, %s94
      %s96 = sphi 0, %s94
      %s97 = sphi 0, %s96
      %s111 = sphi 0, %s97
      %s115 = sphi 0, %s115
      %s117 = sphi 0, %s115
      %s118 = sphi 0, %s117
      %s132 = sphi 0, %s118
      %s136 = sphi 0, %s136
      %s138 = sphi 0, %s136
      %s139 = sphi 0, %s138
      %s153 = sphi 0, %s139
      %s157 = sphi 0, %s157
      %s159 = sphi 0, %s157
      %s160 = sphi 0, %s159
      %s174 = sphi 0, %s160
      %s178 = sphi 0, %s178
      %s180 = sphi 0, %s178
      %s181 = sphi 0, %s180
      %s195 = sphi 0, %s181
      %s199 = sphi 0, %s199
      %s201 = sphi 0, %s199
      %s202 = sphi 0, %s201
      %s216 = sphi 0, %s202
      %s222 = sphi 0, %s224
      %s225 = sphi 0, %s222
      %s226 = sphi 0, %s225
      %s242 = sphi 0, %s226
    $region4: #{forward.1} parent=1 // loop_header_branch
      %21 = sbr.rel (%p19) target = $region8
    $region5: #{forward.1} parent=1 // loop_body
      %s23 = ssub.s32 %s18, 1
      %s24 = ssub.s32 %s18, 2
      %s25 = sadd.s32 %s18, 1
      %s26 = ssub.s32 %s18, %s25
      %p27 = scmp.eq.s32.totalorder %s26, 0
      %s29 = sadd.s32 %s28, 1
      %s30 = scalar_select %p27, %s28, %s29
      %p33 = pneg %p27
      %p34 = scmp.eq.s32.totalorder %s18, 1
      %p35 = por %p33, %p34
      %p36 = scmp.ne.s32.totalorder %s28, %s31
      %p37 = scmp.eq.s32.totalorder %s18, 0
      %p38 = por %p36, %p37
      %p39 = scmp.ne.s32.totalorder %s28, %s31
      %p40 = scmp.eq.s32.totalorder %s23, 1
      %p41 = por %p39, %p40
      %p42 = scmp.ne.s32.totalorder %s31, %s32
      %p43 = scmp.eq.s32.totalorder %s23, 0
      %p44 = por %p42, %p43
      %p45 = scmp.ne.s32.totalorder %s31, %s32
      %p46 = scmp.eq.s32.totalorder %s24, 1
      %p47 = por %p45, %p46
      %p49 = scmp.ne.s32.totalorder %s32, %s48
      %p50 = scmp.eq.s32.totalorder %s24, 0
      %p51 = por %p49, %p50
      %s53 = sadd.s32 %s52, 1
      %p56 = scmp.eq.s32.totalorder %s18, 1
      %p57 = scmp.ne.s32.totalorder %s52, %s54
      %p58 = scmp.eq.s32.totalorder %s18, 0
      %p59 = por %p57, %p58
      %p60 = scmp.ne.s32.totalorder %s52, %s54
      %p61 = scmp.eq.s32.totalorder %s23, 1
      %p62 = por %p60, %p61
      %p63 = scmp.ne.s32.totalorder %s54, %s55
      %p64 = scmp.eq.s32.totalorder %s23, 0
      %p65 = por %p63, %p64
      %p66 = scmp.ne.s32.totalorder %s54, %s55
      %p67 = scmp.eq.s32.totalorder %s24, 1
      %p68 = por %p66, %p67
      %p70 = scmp.ne.s32.totalorder %s55, %s69
      %p71 = scmp.eq.s32.totalorder %s24, 0
      %p72 = por %p70, %p71
      %s74 = sadd.s32 %s73, 1
      %p77 = scmp.eq.s32.totalorder %s18, 1
      %p78 = scmp.ne.s32.totalorder %s73, %s75
      %p79 = scmp.eq.s32.totalorder %s18, 0
      %p80 = por %p78, %p79
      %p81 = scmp.ne.s32.totalorder %s73, %s75
      %p82 = scmp.eq.s32.totalorder %s23, 1
      %p83 = por %p81, %p82
      %p84 = scmp.ne.s32.totalorder %s75, %s76
      %p85 = scmp.eq.s32.totalorder %s23, 0
      %p86 = por %p84, %p85
      %p87 = scmp.ne.s32.totalorder %s75, %s76
      %p88 = scmp.eq.s32.totalorder %s24, 1
      %p89 = por %p87, %p88
      %p91 = scmp.ne.s32.totalorder %s76, %s90
      %p92 = scmp.eq.s32.totalorder %s24, 0
      %p93 = por %p91, %p92
      %s95 = sadd.s32 %s94, 1
      %p98 = scmp.eq.s32.totalorder %s18, 1
      %p99 = scmp.ne.s32.totalorder %s94, %s96
      %p100 = scmp.eq.s32.totalorder %s18, 0
      %p101 = por %p99, %p100
      %p102 = scmp.ne.s32.totalorder %s94, %s96
      %p103 = scmp.eq.s32.totalorder %s23, 1
      %p104 = por %p102, %p103
      %p105 = scmp.ne.s32.totalorder %s96, %s97
      %p106 = scmp.eq.s32.totalorder %s23, 0
      %p107 = por %p105, %p106
      %p108 = scmp.ne.s32.totalorder %s96, %s97
      %p109 = scmp.eq.s32.totalorder %s24, 1
      %p110 = por %p108, %p109
      %p112 = scmp.ne.s32.totalorder %s97, %s111
      %p113 = scmp.eq.s32.totalorder %s24, 0
      %p114 = por %p112, %p113
      %s116 = sadd.s32 %s115, 1
      %p119 = scmp.eq.s32.totalorder %s18, 1
      %p120 = scmp.ne.s32.totalorder %s115, %s117
      %p121 = scmp.eq.s32.totalorder %s18, 0
      %p122 = por %p120, %p121
      %p123 = scmp.ne.s32.totalorder %s115, %s117
      %p124 = scmp.eq.s32.totalorder %s23, 1
      %p125 = por %p123, %p124
      %p126 = scmp.ne.s32.totalorder %s117, %s118
      %p127 = scmp.eq.s32.totalorder %s23, 0
      %p128 = por %p126, %p127
      %p129 = scmp.ne.s32.totalorder %s117, %s118
      %p130 = scmp.eq.s32.totalorder %s24, 1
      %p131 = por %p129, %p130
      %p133 = scmp.ne.s32.totalorder %s118, %s132
      %p134 = scmp.eq.s32.totalorder %s24, 0
      %p135 = por %p133, %p134
      %s137 = sadd.s32 %s136, 1
      %p140 = scmp.eq.s32.totalorder %s18, 1
      %p141 = scmp.ne.s32.totalorder %s136, %s138
      %p142 = scmp.eq.s32.totalorder %s18, 0
      %p143 = por %p141, %p142
      %p144 = scmp.ne.s32.totalorder %s136, %s138
      %p145 = scmp.eq.s32.totalorder %s23, 1
      %p146 = por %p144, %p145
      %p147 = scmp.ne.s32.totalorder %s138, %s139
      %p148 = scmp.eq.s32.totalorder %s23, 0
      %p149 = por %p147, %p148
      %p150 = scmp.ne.s32.totalorder %s138, %s139
      %p151 = scmp.eq.s32.totalorder %s24, 1
      %p152 = por %p150, %p151
      %p154 = scmp.ne.s32.totalorder %s139, %s153
      %p155 = scmp.eq.s32.totalorder %s24, 0
      %p156 = por %p154, %p155
      %s158 = sadd.s32 %s157, 1
      %p161 = scmp.eq.s32.totalorder %s18, 1
      %p162 = scmp.ne.s32.totalorder %s157, %s159
      %p163 = scmp.eq.s32.totalorder %s18, 0
      %p164 = por %p162, %p163
      %p165 = scmp.ne.s32.totalorder %s157, %s159
      %p166 = scmp.eq.s32.totalorder %s23, 1
      %p167 = por %p165, %p166
      %p168 = scmp.ne.s32.totalorder %s159, %s160
      %p169 = scmp.eq.s32.totalorder %s23, 0
      %p170 = por %p168, %p169
      %p171 = scmp.ne.s32.totalorder %s159, %s160
      %p172 = scmp.eq.s32.totalorder %s24, 1
      %p173 = por %p171, %p172
      %p175 = scmp.ne.s32.totalorder %s160, %s174
      %p176 = scmp.eq.s32.totalorder %s24, 0
      %p177 = por %p175, %p176
      %s179 = sadd.s32 %s178, 1
      %p182 = scmp.eq.s32.totalorder %s18, 1
      %p183 = scmp.ne.s32.totalorder %s178, %s180
      %p184 = scmp.eq.s32.totalorder %s18, 0
      %p185 = por %p183, %p184
      %p186 = scmp.ne.s32.totalorder %s178, %s180
      %p187 = scmp.eq.s32.totalorder %s23, 1
      %p188 = por %p186, %p187
      %p189 = scmp.ne.s32.totalorder %s180, %s181
      %p190 = scmp.eq.s32.totalorder %s23, 0
      %p191 = por %p189, %p190
      %p192 = scmp.ne.s32.totalorder %s180, %s181
      %p193 = scmp.eq.s32.totalorder %s24, 1
      %p194 = por %p192, %p193
      %p196 = scmp.ne.s32.totalorder %s181, %s195
      %p197 = scmp.eq.s32.totalorder %s24, 0
      %p198 = por %p196, %p197
      %s200 = sadd.s32 %s199, 1
      %p203 = scmp.eq.s32.totalorder %s18, 1
      %p204 = scmp.ne.s32.totalorder %s199, %s201
      %p205 = scmp.eq.s32.totalorder %s18, 0
      %p206 = por %p204, %p205
      %p207 = scmp.ne.s32.totalorder %s199, %s201
      %p208 = scmp.eq.s32.totalorder %s23, 1
      %p209 = por %p207, %p208
      %p210 = scmp.ne.s32.totalorder %s201, %s202
      %p211 = scmp.eq.s32.totalorder %s23, 0
      %p212 = por %p210, %p211
      %p213 = scmp.ne.s32.totalorder %s201, %s202
      %p214 = scmp.eq.s32.totalorder %s24, 1
      %p215 = por %p213, %p214
      %p217 = scmp.ne.s32.totalorder %s202, %s216
      %p218 = scmp.eq.s32.totalorder %s24, 0
      %p219 = por %p217, %p218
      %s220 = ssub.s32 %s18, %s25
      %p221 = scmp.eq.s32.totalorder %s220, 0
      %s223 = sadd.s32 %s222, 1
      %s224 = scalar_select %p221, %s222, %s223
      %p227 = pneg %p221
      %p228 = scmp.eq.s32.totalorder %s18, 1
      %p229 = por %p227, %p228
      %p230 = scmp.ne.s32.totalorder %s222, %s225
      %p231 = scmp.eq.s32.totalorder %s18, 0
      %p232 = por %p230, %p231
      %p233 = scmp.ne.s32.totalorder %s222, %s225
      %p234 = scmp.eq.s32.totalorder %s23, 1
      %p235 = por %p233, %p234
      %p236 = scmp.ne.s32.totalorder %s225, %s226
      %p237 = scmp.eq.s32.totalorder %s23, 0
      %p238 = por %p236, %p237
      %p239 = scmp.ne.s32.totalorder %s225, %s226
      %p240 = scmp.eq.s32.totalorder %s24, 1
      %p241 = por %p239, %p240
      %p243 = scmp.ne.s32.totalorder %s226, %s242
      %p244 = scmp.eq.s32.totalorder %s24, 0
      %p245 = por %p243, %p244
      %p246 = scmp.le.s32.totalorder 1, %s18
      %p247 = scmp.lt.s32.totalorder %s18, 3
      %p248 = pnand %p246, %p247
      %p249 = pneg %p248
      // Predicated region
      $region9: #{forward.1} parent=5 // pred_check
        _
      $region10: #{forward.1} parent=5 // pred_check_branch
        %251 = sbr.rel (%p248) target = $region12
      $region11: #{forward.1} parent=5 // pred_region
        %s252 = ssub.s32 %s18, 1
        // Predicated region
        $region13: #{forward.1} parent=11 // pred_check
          %p253 = pneg %p65
        $region14: #{forward.1} parent=11 // pred_check_branch
          %255 = sbr.rel (%p253) target = $region16
        $region15: #{forward.1} parent=11 // pred_region
          _
        $region16: #{forward.1} parent=11 // pred_fallthru
          _
        // Predicated region
        $region17: #{forward.1} parent=11 // pred_check
          %p256 = pneg %p86
        $region18: #{forward.1} parent=11 // pred_check_branch
          %258 = sbr.rel (%p256) target = $region20
        $region19: #{forward.1} parent=11 // pred_region
          _
        $region20: #{forward.1} parent=11 // pred_fallthru
          _
        // Predicated region
        $region21: #{forward.1} parent=11 // pred_check
          %p259 = pneg %p107
        $region22: #{forward.1} parent=11 // pred_check_branch
          %261 = sbr.rel (%p259) target = $region24
        $region23: #{forward.1} parent=11 // pred_region
          _
        $region24: #{forward.1} parent=11 // pred_fallthru
          _
        // Predicated region
        $region25: #{forward.1} parent=11 // pred_check
          %p262 = pneg %p128
        $region26: #{forward.1} parent=11 // pred_check_branch
          %264 = sbr.rel (%p262) target = $region28
        $region27: #{forward.1} parent=11 // pred_region
          _
        $region28: #{forward.1} parent=11 // pred_fallthru
          _
        // Predicated region
        $region29: #{forward.1} parent=11 // pred_check
          %p265 = pneg %p149
        $region30: #{forward.1} parent=11 // pred_check_branch
          %267 = sbr.rel (%p265) target = $region32
        $region31: #{forward.1} parent=11 // pred_region
          _
        $region32: #{forward.1} parent=11 // pred_fallthru
          _
        // Predicated region
        $region33: #{forward.1} parent=11 // pred_check
          %p268 = pneg %p170
        $region34: #{forward.1} parent=11 // pred_check_branch
          %270 = sbr.rel (%p268) target = $region36
        $region35: #{forward.1} parent=11 // pred_region
          _
        $region36: #{forward.1} parent=11 // pred_fallthru
          _
        // Predicated region
        $region37: #{forward.1} parent=11 // pred_check
          %p271 = pneg %p191
        $region38: #{forward.1} parent=11 // pred_check_branch
          %273 = sbr.rel (%p271) target = $region40
        $region39: #{forward.1} parent=11 // pred_region
          _
        $region40: #{forward.1} parent=11 // pred_fallthru
          _
        // Predicated region
        $region41: #{forward.1} parent=11 // pred_check
          %p274 = pneg %p212
        $region42: #{forward.1} parent=11 // pred_check_branch
          %276 = sbr.rel (%p274) target = $region44
        $region43: #{forward.1} parent=11 // pred_region
          _
        $region44: #{forward.1} parent=11 // pred_fallthru
          _
      $region12: #{forward.1} parent=5 // pred_fallthru
        _
      %p277 = scmp.lt.s32.totalorder %s18, 2
      // Predicated region
      $region45: #{forward.1} parent=5 // pred_check
        %p278 = pneg %p277
      $region46: #{forward.1} parent=5 // pred_check_branch
        %280 = sbr.rel (%p278) target = $region48
      $region47: #{forward.1} parent=5 // pred_region
        // Predicated region
        $region49: #{forward.1} parent=47 // pred_check
          %p281 = pneg %p38
        $region50: #{forward.1} parent=47 // pred_check_branch
          %283 = sbr.rel (%p281) target = $region52
        $region51: #{forward.1} parent=47 // pred_region
          %p284 = scmp.lt.s32.totalorder %s18, 1
          %s285 = scalar_select %p284, %s18, 1
          %s286 = smul.addr %s285, 5
          %s287 = smul.addr %s286, 8
          %s288 = scalar_lea.vmem %s0, %s287
        $region52: #{forward.1} parent=47 // pred_fallthru
          _
      $region48: #{forward.1} parent=5 // pred_fallthru
        _
      %p289 = scmp.le.s32.totalorder 1, %s18
      %p290 = scmp.lt.s32.totalorder %s18, 3
      %p291 = pnand %p289, %p290
      %p292 = pneg %p291
      // Predicated region
      $region53: #{forward.1} parent=5 // pred_check
        _
      $region54: #{forward.1} parent=5 // pred_check_branch
        %294 = sbr.rel (%p291) target = $region56
      $region55: #{forward.1} parent=5 // pred_region
        %s295 = ssub.s32 %s18, 1
        %p296 = scmp.lt.s32.totalorder %s23, 1
        %s297 = scalar_select %p296, %s23, 1
        %s298 = smul.addr %s297, 5
        %s299 = smul.addr %s298, 8
        %s300 = scalar_lea.vmem %s0, %s299
        %p301 = pneg %p44
        %p302 = pneg %p41
        %p303 = pneg %p65
        %p304 = pneg %p62
        %p305 = pneg %p86
        %p306 = pneg %p83
        %p307 = pneg %p107
        %p308 = pneg %p104
        %p309 = pneg %p128
        %p310 = pneg %p125
        %p311 = pneg %p149
        %p312 = pneg %p146
        %p313 = pneg %p170
        %p314 = pneg %p167
        %p315 = pneg %p191
        %p316 = pneg %p188
        %p317 = pneg %p212
        %p318 = pneg %p209
        %p319 = pneg %p238
        %p320 = pneg %p235
        %s321 = sand.u32 %s225, 1
        %s322 = scalar_lea.sflag [#allocation5], %s321
        %s323 = sand.u32 %s225, 1
        %s324 = scalar_lea.vmem [#allocation4], %s323
        %p325 = scmp.lt.s32.totalorder %s23, 1
        %s326 = scalar_select %p325, %s23, 1
        %s327 = smul.addr %s326, 5
        %s328 = smul.addr %s327, 8
        %s329 = scalar_lea.vmem %s0, %s328
        %v331 = vld [vmem:[%s329] sm:$0xff]
        %v332 = vld [vmem:[%s329 + $0x8] sm:$0xff]
        %v333 = vld [vmem:[%s329 + $0x10] sm:$0xff]
        %v334 = vld [vmem:[%s329 + $0x18] sm:$0xff]
        %v335 = vld [vmem:[%s329 + $0x20] sm:$0x1]
        %v336 = vpack.c.bf16 %v332, %v331
        %v337 = vpack.c.bf16 %v334, %v333
        %v338 = vpack.c.bf16 %v335, %v335
        %v339 = vld [vmem:[%s1] sm:$0xff]
        %v340 = vld [vmem:[%s1 + $0x8] sm:$0xf]
        %v341 = vld [vmem:[%s1 + $0xc] sm:$0xff]
        %v342 = vld [vmem:[%s1 + $0x14] sm:$0xf]
        %v343 = vld [vmem:[%s1 + $0x18] sm:$0xff]
        %v344 = vld [vmem:[%s1 + $0x20] sm:$0xf]
        %v345 = vld [vmem:[%s1 + $0x24] sm:$0xff]
        %v346 = vld [vmem:[%s1 + $0x2c] sm:$0xf]
        %v347 = vld [vmem:[%s1 + $0x30] sm:$0xff]
        %v348 = vld [vmem:[%s1 + $0x38] sm:$0xf]
        %v349 = vld [vmem:[%s1 + $0x3c] sm:$0xff]
        %v350 = vld [vmem:[%s1 + $0x44] sm:$0xf]
        %v351 = vld [vmem:[%s1 + $0x48] sm:$0xff]
        %v352 = vld [vmem:[%s1 + $0x50] sm:$0xf]
        %v353 = vld [vmem:[%s1 + $0x54] sm:$0xff]
        %v354 = vld [vmem:[%s1 + $0x5c] sm:$0xf]
        %v355 = vld [vmem:[%s1 + $0x60] sm:$0xff]
        %v356 = vld [vmem:[%s1 + $0x68] sm:$0xf]
        %v357 = vld [vmem:[%s1 + $0x6c] sm:$0xff]
        %v358 = vld [vmem:[%s1 + $0x74] sm:$0xf]
        %v359 = vld [vmem:[%s1 + $0x78] sm:$0xff]
        %v360 = vld [vmem:[%s1 + $0x80] sm:$0xf]
        %v361 = vld [vmem:[%s1 + $0x84] sm:$0xff]
        %v362 = vld [vmem:[%s1 + $0x8c] sm:$0xf]
        %v363 = vld [vmem:[%s1 + $0x90] sm:$0xff]
        %v364 = vld [vmem:[%s1 + $0x98] sm:$0xf]
        %v365 = vld [vmem:[%s1 + $0x9c] sm:$0xff]
        %v366 = vld [vmem:[%s1 + $0xa4] sm:$0xf]
        %v367 = vld [vmem:[%s1 + $0xa8] sm:$0xff]
        %v368 = vld [vmem:[%s1 + $0xb0] sm:$0xf]
        %v369 = vld [vmem:[%s329 + $0x1] sm:$0xff]
        %v370 = vld [vmem:[%s329 + $0x9] sm:$0xff]
        %v371 = vld [vmem:[%s329 + $0x11] sm:$0xff]
        %v372 = vld [vmem:[%s329 + $0x19] sm:$0xff]
        %v373 = vld [vmem:[%s329 + $0x21] sm:$0x1]
        %v374 = vpack.c.bf16 %v370, %v369
        %v375 = vpack.c.bf16 %v372, %v371
        %v376 = vpack.c.bf16 %v373, %v373
        %s377 = scalar_lea.vmem %s1, 180
        %v378 = vld [vmem:[%s377] sm:$0xff]
        %v379 = vld [vmem:[%s377 + $0x8] sm:$0xf]
        %v380 = vld [vmem:[%s377 + $0xc] sm:$0xff]
        %v381 = vld [vmem:[%s377 + $0x14] sm:$0xf]
        %v382 = vld [vmem:[%s377 + $0x18] sm:$0xff]
        %v383 = vld [vmem:[%s377 + $0x20] sm:$0xf]
        %v384 = vld [vmem:[%s377 + $0x24] sm:$0xff]
        %v385 = vld [vmem:[%s377 + $0x2c] sm:$0xf]
        %v386 = vld [vmem:[%s377 + $0x30] sm:$0xff]
        %v387 = vld [vmem:[%s377 + $0x38] sm:$0xf]
        %v388 = vld [vmem:[%s377 + $0x3c] sm:$0xff]
        %v389 = vld [vmem:[%s377 + $0x44] sm:$0xf]
        %v390 = vld [vmem:[%s377 + $0x48] sm:$0xff]
        %v391 = vld [vmem:[%s377 + $0x50] sm:$0xf]
        %v392 = vld [vmem:[%s377 + $0x54] sm:$0xff]
        %v393 = vld [vmem:[%s377 + $0x5c] sm:$0xf]
        %v394 = vld [vmem:[%s377 + $0x60] sm:$0xff]
        %v395 = vld [vmem:[%s377 + $0x68] sm:$0xf]
        %v396 = vld [vmem:[%s377 + $0x6c] sm:$0xff]
        %v397 = vld [vmem:[%s377 + $0x74] sm:$0xf]
        %v398 = vld [vmem:[%s377 + $0x78] sm:$0xff]
        %v399 = vld [vmem:[%s377 + $0x80] sm:$0xf]
        %v400 = vld [vmem:[%s377 + $0x84] sm:$0xff]
        %v401 = vld [vmem:[%s377 + $0x8c] sm:$0xf]
        %v402 = vld [vmem:[%s377 + $0x90] sm:$0xff]
        %v403 = vld [vmem:[%s377 + $0x98] sm:$0xf]
        %v404 = vld [vmem:[%s377 + $0x9c] sm:$0xff]
        %v405 = vld [vmem:[%s377 + $0xa4] sm:$0xf]
        %v406 = vld [vmem:[%s377 + $0xa8] sm:$0xff]
        %v407 = vld [vmem:[%s377 + $0xb0] sm:$0xf]
        %v438 = vunpack.c.l.b16 %v378
        %v439 = vunpack.c.h.b16 %v378
        %v440 = vunpack.c.l.b16 %v379
        %v441 = vunpack.c.l.b16 %v380
        %v442 = vunpack.c.h.b16 %v380
        %v443 = vunpack.c.l.b16 %v381
        %v444 = vunpack.c.l.b16 %v382
        %v445 = vunpack.c.h.b16 %v382
        %v446 = vunpack.c.l.b16 %v383
        %v447 = vunpack.c.l.b16 %v384
        %v448 = vunpack.c.h.b16 %v384
        %v449 = vunpack.c.l.b16 %v385
        %v450 = vunpack.c.l.b16 %v386
        %v451 = vunpack.c.h.b16 %v386
        %v452 = vunpack.c.l.b16 %v387
        %v453 = vunpack.c.l.b16 %v388
        %v454 = vunpack.c.h.b16 %v388
        %v455 = vunpack.c.l.b16 %v389
        %v456 = vunpack.c.l.b16 %v390
        %v457 = vunpack.c.h.b16 %v390
        %v458 = vunpack.c.l.b16 %v391
        %v459 = vunpack.c.l.b16 %v392
        %v460 = vunpack.c.h.b16 %v392
        %v461 = vunpack.c.l.b16 %v393
        %v462 = vunpack.c.l.b16 %v394
        %v463 = vunpack.c.h.b16 %v394
        %v464 = vunpack.c.l.b16 %v395
        %v465 = vunpack.c.l.b16 %v396
        %v466 = vunpack.c.h.b16 %v396
        %v467 = vunpack.c.l.b16 %v397
        %v468 = vunpack.c.l.b16 %v398
        %v469 = vunpack.c.h.b16 %v398
        %v470 = vunpack.c.l.b16 %v399
        %v471 = vunpack.c.l.b16 %v400
        %v472 = vunpack.c.h.b16 %v400
        %v473 = vunpack.c.l.b16 %v401
        %v474 = vunpack.c.l.b16 %v402
        %v475 = vunpack.c.h.b16 %v402
        %v476 = vunpack.c.l.b16 %v403
        %v477 = vunpack.c.l.b16 %v404
        %v478 = vunpack.c.h.b16 %v404
        %v479 = vunpack.c.l.b16 %v405
        %v480 = vunpack.c.l.b16 %v406
        %v481 = vunpack.c.h.b16 %v406
        %v482 = vunpack.c.l.b16 %v407
        %v483 = vpack.c.b16 %v441, %v438
        %v484 = vpack.c.b16 %v442, %v439
        %v485 = vpack.c.b16 %v443, %v440
        %v486 = vpack.c.b16 %v447, %v444
        %v487 = vpack.c.b16 %v448, %v445
        %v488 = vpack.c.b16 %v449, %v446
        %v489 = vpack.c.b16 %v453, %v450
        %v490 = vpack.c.b16 %v454, %v451
        %v491 = vpack.c.b16 %v455, %v452
        %v492 = vpack.c.b16 %v459, %v456
        %v493 = vpack.c.b16 %v460, %v457
        %v494 = vpack.c.b16 %v461, %v458
        %v495 = vpack.c.b16 %v465, %v462
        %v496 = vpack.c.b16 %v466, %v463
        %v497 = vpack.c.b16 %v467, %v464
        %v498 = vpack.c.b16 %v471, %v468
        %v499 = vpack.c.b16 %v472, %v469
        %v500 = vpack.c.b16 %v473, %v470
        %v501 = vpack.c.b16 %v477, %v474
        %v502 = vpack.c.b16 %v478, %v475
        %v503 = vpack.c.b16 %v479, %v476
        %v504 = vpack.c.b16 %v480, %v480
        %v505 = vpack.c.b16 %v481, %v481
        %v506 = vpack.c.b16 %v482, %v482
        %vm528 = vcmask 982016
        %v530 = vsel %vm528, %v374, 0
        %v533 = vsel %vm528, %v375, 0
        %v536 = vsel %vm528, %v376, 0
        %vm538 = vcmask 1043456
        %v540 = vsel %vm538, %v504, 0
        %v543 = vsel %vm538, %v505, 0
        %v546 = vsel %vm538, %v506, 0
        %548 = vmatpush.bf16.msra.mxu0 %v540
        %549 = vmatpush.bf16.msra.mxu0 %v501
        %550 = vmatpush.bf16.msra.mxu0 %v498
        %551 = vmatpush.bf16.msra.mxu0 %v495
        %552 = vmatpush.bf16.msra.mxu0 %v492
        %553 = vmatpush.bf16.msra.mxu0 %v489
        %554 = vmatpush.bf16.msra.mxu0 %v486
        %555 = vmatpush.bf16.msra.mxu0 %v483
        %556 = vmatmul.bf16.gmra.mxu0 %v530
        %v557 = vpop.f32.mrf.mxu0
        %v558 = vadd.f32 0.0, %v557
        %v559 = vpop.f32.mrf.mxu0
        %v560 = vadd.f32 0.0, %v559
        %561 = vmatmul.bf16.gmra.mxu0 %v533
        %v562 = vpop.f32.mrf.mxu0
        %v563 = vadd.f32 0.0, %v562
        %v564 = vpop.f32.mrf.mxu0
        %v565 = vadd.f32 0.0, %v564
        %566 = vmatmul.bf16.gmra.mxu0 %v536
        %v567 = vpop.f32.mrf.mxu0
        %v568 = vadd.f32 0.0, %v567
        %v569 = vpop.f32.mrf.mxu0
        %570 = vdwg.mxu0
        %571 = vmatpush.bf16.msra.mxu0 %v543
        %572 = vmatpush.bf16.msra.mxu0 %v502
        %573 = vmatpush.bf16.msra.mxu0 %v499
        %574 = vmatpush.bf16.msra.mxu0 %v496
        %575 = vmatpush.bf16.msra.mxu0 %v493
        %576 = vmatpush.bf16.msra.mxu0 %v490
        %577 = vmatpush.bf16.msra.mxu0 %v487
        %578 = vmatpush.bf16.msra.mxu0 %v484
        %579 = vmatmul.bf16.gmra.mxu0 %v530
        %v580 = vpop.f32.mrf.mxu0
        %v581 = vadd.f32 0.0, %v580
        %v582 = vpop.f32.mrf.mxu0
        %v583 = vadd.f32 0.0, %v582
        %584 = vmatmul.bf16.gmra.mxu0 %v533
        %v585 = vpop.f32.mrf.mxu0
        %v586 = vadd.f32 0.0, %v585
        %v587 = vpop.f32.mrf.mxu0
        %v588 = vadd.f32 0.0, %v587
        %589 = vmatmul.bf16.gmra.mxu0 %v536
        %v590 = vpop.f32.mrf.mxu0
        %v591 = vadd.f32 0.0, %v590
        %v592 = vpop.f32.mrf.mxu0
        %593 = vdwg.mxu0
        %594 = vmatpush.bf16.msra.mxu0 %v546
        %595 = vmatpush.bf16.msra.mxu0 %v503
        %596 = vmatpush.bf16.msra.mxu0 %v500
        %597 = vmatpush.bf16.msra.mxu0 %v497
        %598 = vmatpush.bf16.msra.mxu0 %v494
        %599 = vmatpush.bf16.msra.mxu0 %v491
        %600 = vmatpush.bf16.msra.mxu0 %v488
        %601 = vmatpush.bf16.msra.mxu0 %v485
        %602 = vmatmul.bf16.gmra.mxu0 %v530
        %v603 = vpop.f32.mrf.mxu0
        %v604 = vadd.f32 0.0, %v603
        %v605 = vpop.f32.mrf.mxu0
        %v606 = vadd.f32 0.0, %v605
        %607 = vmatmul.bf16.gmra.mxu0 %v533
        %v608 = vpop.f32.mrf.mxu0
        %v609 = vadd.f32 0.0, %v608
        %v610 = vpop.f32.mrf.mxu0
        %v611 = vadd.f32 0.0, %v610
        %612 = vmatmul.bf16.gmra.mxu0 %v536
        %v613 = vpop.f32.mrf.mxu0
        %v614 = vadd.f32 0.0, %v613
        %v615 = vpop.f32.mrf.mxu0
        %616 = vdwg.mxu0
        %v647 = vunpack.c.l.b16 %v339
        %v648 = vunpack.c.h.b16 %v339
        %v649 = vunpack.c.l.b16 %v340
        %v650 = vunpack.c.l.b16 %v341
        %v651 = vunpack.c.h.b16 %v341
        %v652 = vunpack.c.l.b16 %v342
        %v653 = vunpack.c.l.b16 %v343
        %v654 = vunpack.c.h.b16 %v343
        %v655 = vunpack.c.l.b16 %v344
        %v656 = vunpack.c.l.b16 %v345
        %v657 = vunpack.c.h.b16 %v345
        %v658 = vunpack.c.l.b16 %v346
        %v659 = vunpack.c.l.b16 %v347
        %v660 = vunpack.c.h.b16 %v347
        %v661 = vunpack.c.l.b16 %v348
        %v662 = vunpack.c.l.b16 %v349
        %v663 = vunpack.c.h.b16 %v349
        %v664 = vunpack.c.l.b16 %v350
        %v665 = vunpack.c.l.b16 %v351
        %v666 = vunpack.c.h.b16 %v351
        %v667 = vunpack.c.l.b16 %v352
        %v668 = vunpack.c.l.b16 %v353
        %v669 = vunpack.c.h.b16 %v353
        %v670 = vunpack.c.l.b16 %v354
        %v671 = vunpack.c.l.b16 %v355
        %v672 = vunpack.c.h.b16 %v355
        %v673 = vunpack.c.l.b16 %v356
        %v674 = vunpack.c.l.b16 %v357
        %v675 = vunpack.c.h.b16 %v357
        %v676 = vunpack.c.l.b16 %v358
        %v677 = vunpack.c.l.b16 %v359
        %v678 = vunpack.c.h.b16 %v359
        %v679 = vunpack.c.l.b16 %v360
        %v680 = vunpack.c.l.b16 %v361
        %v681 = vunpack.c.h.b16 %v361
        %v682 = vunpack.c.l.b16 %v362
        %v683 = vunpack.c.l.b16 %v363
        %v684 = vunpack.c.h.b16 %v363
        %v685 = vunpack.c.l.b16 %v364
        %v686 = vunpack.c.l.b16 %v365
        %v687 = vunpack.c.h.b16 %v365
        %v688 = vunpack.c.l.b16 %v366
        %v689 = vunpack.c.l.b16 %v367
        %v690 = vunpack.c.h.b16 %v367
        %v691 = vunpack.c.l.b16 %v368
        %v692 = vpack.c.b16 %v650, %v647
        %v693 = vpack.c.b16 %v651, %v648
        %v694 = vpack.c.b16 %v652, %v649
        %v695 = vpack.c.b16 %v656, %v653
        %v696 = vpack.c.b16 %v657, %v654
        %v697 = vpack.c.b16 %v658, %v655
        %v698 = vpack.c.b16 %v662, %v659
        %v699 = vpack.c.b16 %v663, %v660
        %v700 = vpack.c.b16 %v664, %v661
        %v701 = vpack.c.b16 %v668, %v665
        %v702 = vpack.c.b16 %v669, %v666
        %v703 = vpack.c.b16 %v670, %v667
        %v704 = vpack.c.b16 %v674, %v671
        %v705 = vpack.c.b16 %v675, %v672
        %v706 = vpack.c.b16 %v676, %v673
        %v707 = vpack.c.b16 %v680, %v677
        %v708 = vpack.c.b16 %v681, %v678
        %v709 = vpack.c.b16 %v682, %v679
        %v710 = vpack.c.b16 %v686, %v683
        %v711 = vpack.c.b16 %v687, %v684
        %v712 = vpack.c.b16 %v688, %v685
        %v713 = vpack.c.b16 %v689, %v689
        %v714 = vpack.c.b16 %v690, %v690
        %v715 = vpack.c.b16 %v691, %v691
        %v738 = vsel %vm528, %v336, 0
        %v741 = vsel %vm528, %v337, 0
        %v744 = vsel %vm528, %v338, 0
        %v747 = vsel %vm538, %v713, 0
        %v750 = vsel %vm538, %v714, 0
        %v753 = vsel %vm538, %v715, 0
        %755 = vmatpush.bf16.msra.mxu0 %v747
        %756 = vmatpush.bf16.msra.mxu0 %v710
        %757 = vmatpush.bf16.msra.mxu0 %v707
        %758 = vmatpush.bf16.msra.mxu0 %v704
        %759 = vmatpush.bf16.msra.mxu0 %v701
        %760 = vmatpush.bf16.msra.mxu0 %v698
        %761 = vmatpush.bf16.msra.mxu0 %v695
        %762 = vmatpush.bf16.msra.mxu0 %v692
        %763 = vmatmul.bf16.gmra.mxu0 %v738
        %v764 = vpop.f32.mrf.mxu0
        %v765 = vadd.f32 %v558, %v764
        %v766 = vpop.f32.mrf.mxu0
        %v767 = vadd.f32 %v560, %v766
        %768 = vmatmul.bf16.gmra.mxu0 %v741
        %v769 = vpop.f32.mrf.mxu0
        %v770 = vadd.f32 %v563, %v769
        %v771 = vpop.f32.mrf.mxu0
        %v772 = vadd.f32 %v565, %v771
        %773 = vmatmul.bf16.gmra.mxu0 %v744
        %v774 = vpop.f32.mrf.mxu0
        %v775 = vadd.f32 %v568, %v774
        %v776 = vpop.f32.mrf.mxu0
        %777 = vdwg.mxu0
        %778 = vmatpush.bf16.msra.mxu0 %v750
        %779 = vmatpush.bf16.msra.mxu0 %v711
        %780 = vmatpush.bf16.msra.mxu0 %v708
        %781 = vmatpush.bf16.msra.mxu0 %v705
        %782 = vmatpush.bf16.msra.mxu0 %v702
        %783 = vmatpush.bf16.msra.mxu0 %v699
        %784 = vmatpush.bf16.msra.mxu0 %v696
        %785 = vmatpush.bf16.msra.mxu0 %v693
        %786 = vmatmul.bf16.gmra.mxu0 %v738
        %v787 = vpop.f32.mrf.mxu0
        %v788 = vadd.f32 %v581, %v787
        %v789 = vpop.f32.mrf.mxu0
        %v790 = vadd.f32 %v583, %v789
        %791 = vmatmul.bf16.gmra.mxu0 %v741
        %v792 = vpop.f32.mrf.mxu0
        %v793 = vadd.f32 %v586, %v792
        %v794 = vpop.f32.mrf.mxu0
        %v795 = vadd.f32 %v588, %v794
        %796 = vmatmul.bf16.gmra.mxu0 %v744
        %v797 = vpop.f32.mrf.mxu0
        %v798 = vadd.f32 %v591, %v797
        %v799 = vpop.f32.mrf.mxu0
        %800 = vdwg.mxu0
        %801 = vmatpush.bf16.msra.mxu0 %v753
        %802 = vmatpush.bf16.msra.mxu0 %v712
        %803 = vmatpush.bf16.msra.mxu0 %v709
        %804 = vmatpush.bf16.msra.mxu0 %v706
        %805 = vmatpush.bf16.msra.mxu0 %v703
        %806 = vmatpush.bf16.msra.mxu0 %v700
        %807 = vmatpush.bf16.msra.mxu0 %v697
        %808 = vmatpush.bf16.msra.mxu0 %v694
        %809 = vmatmul.bf16.gmra.mxu0 %v738
        %v810 = vpop.f32.mrf.mxu0
        %v811 = vadd.f32 %v604, %v810
        %v812 = vpop.f32.mrf.mxu0
        %v813 = vadd.f32 %v606, %v812
        %814 = vmatmul.bf16.gmra.mxu0 %v741
        %v815 = vpop.f32.mrf.mxu0
        %v816 = vadd.f32 %v609, %v815
        %v817 = vpop.f32.mrf.mxu0
        %v818 = vadd.f32 %v611, %v817
        %819 = vmatmul.bf16.gmra.mxu0 %v744
        %v820 = vpop.f32.mrf.mxu0
        %v821 = vadd.f32 %v614, %v820
        %v822 = vpop.f32.mrf.mxu0
        %823 = vdwg.mxu0
        %v824 = vld [vmem:[%s329 + $0x2] sm:$0xff]
        %v825 = vld [vmem:[%s329 + $0xa] sm:$0xff]
        %v826 = vld [vmem:[%s329 + $0x12] sm:$0xff]
        %v827 = vld [vmem:[%s329 + $0x1a] sm:$0xff]
        %v828 = vld [vmem:[%s329 + $0x22] sm:$0x1]
        %v829 = vpack.c.bf16 %v825, %v824
        %v830 = vpack.c.bf16 %v827, %v826
        %v831 = vpack.c.bf16 %v828, %v828
        %s832 = scalar_lea.vmem %s1, 360
        %v833 = vld [vmem:[%s832] sm:$0xff]
        %v834 = vld [vmem:[%s832 + $0x8] sm:$0xf]
        %v835 = vld [vmem:[%s832 + $0xc] sm:$0xff]
        %v836 = vld [vmem:[%s832 + $0x14] sm:$0xf]
        %v837 = vld [vmem:[%s832 + $0x18] sm:$0xff]
        %v838 = vld [vmem:[%s832 + $0x20] sm:$0xf]
        %v839 = vld [vmem:[%s832 + $0x24] sm:$0xff]
        %v840 = vld [vmem:[%s832 + $0x2c] sm:$0xf]
        %v841 = vld [vmem:[%s832 + $0x30] sm:$0xff]
        %v842 = vld [vmem:[%s832 + $0x38] sm:$0xf]
        %v843 = vld [vmem:[%s832 + $0x3c] sm:$0xff]
        %v844 = vld [vmem:[%s832 + $0x44] sm:$0xf]
        %v845 = vld [vmem:[%s832 + $0x48] sm:$0xff]
        %v846 = vld [vmem:[%s832 + $0x50] sm:$0xf]
        %v847 = vld [vmem:[%s832 + $0x54] sm:$0xff]
        %v848 = vld [vmem:[%s832 + $0x5c] sm:$0xf]
        %v849 = vld [vmem:[%s832 + $0x60] sm:$0xff]
        %v850 = vld [vmem:[%s832 + $0x68] sm:$0xf]
        %v851 = vld [vmem:[%s832 + $0x6c] sm:$0xff]
        %v852 = vld [vmem:[%s832 + $0x74] sm:$0xf]
        %v853 = vld [vmem:[%s832 + $0x78] sm:$0xff]
        %v854 = vld [vmem:[%s832 + $0x80] sm:$0xf]
        %v855 = vld [vmem:[%s832 + $0x84] sm:$0xff]
        %v856 = vld [vmem:[%s832 + $0x8c] sm:$0xf]
        %v857 = vld [vmem:[%s832 + $0x90] sm:$0xff]
        %v858 = vld [vmem:[%s832 + $0x98] sm:$0xf]
        %v859 = vld [vmem:[%s832 + $0x9c] sm:$0xff]
        %v860 = vld [vmem:[%s832 + $0xa4] sm:$0xf]
        %v861 = vld [vmem:[%s832 + $0xa8] sm:$0xff]
        %v862 = vld [vmem:[%s832 + $0xb0] sm:$0xf]
        %v893 = vunpack.c.l.b16 %v833
        %v894 = vunpack.c.h.b16 %v833
        %v895 = vunpack.c.l.b16 %v834
        %v896 = vunpack.c.l.b16 %v835
        %v897 = vunpack.c.h.b16 %v835
        %v898 = vunpack.c.l.b16 %v836
        %v899 = vunpack.c.l.b16 %v837
        %v900 = vunpack.c.h.b16 %v837
        %v901 = vunpack.c.l.b16 %v838
        %v902 = vunpack.c.l.b16 %v839
        %v903 = vunpack.c.h.b16 %v839
        %v904 = vunpack.c.l.b16 %v840
        %v905 = vunpack.c.l.b16 %v841
        %v906 = vunpack.c.h.b16 %v841
        %v907 = vunpack.c.l.b16 %v842
        %v908 = vunpack.c.l.b16 %v843
        %v909 = vunpack.c.h.b16 %v843
        %v910 = vunpack.c.l.b16 %v844
        %v911 = vunpack.c.l.b16 %v845
        %v912 = vunpack.c.h.b16 %v845
        %v913 = vunpack.c.l.b16 %v846
        %v914 = vunpack.c.l.b16 %v847
        %v915 = vunpack.c.h.b16 %v847
        %v916 = vunpack.c.l.b16 %v848
        %v917 = vunpack.c.l.b16 %v849
        %v918 = vunpack.c.h.b16 %v849
        %v919 = vunpack.c.l.b16 %v850
        %v920 = vunpack.c.l.b16 %v851
        %v921 = vunpack.c.h.b16 %v851
        %v922 = vunpack.c.l.b16 %v852
        %v923 = vunpack.c.l.b16 %v853
        %v924 = vunpack.c.h.b16 %v853
        %v925 = vunpack.c.l.b16 %v854
        %v926 = vunpack.c.l.b16 %v855
        %v927 = vunpack.c.h.b16 %v855
        %v928 = vunpack.c.l.b16 %v856
        %v929 = vunpack.c.l.b16 %v857
        %v930 = vunpack.c.h.b16 %v857
        %v931 = vunpack.c.l.b16 %v858
        %v932 = vunpack.c.l.b16 %v859
        %v933 = vunpack.c.h.b16 %v859
        %v934 = vunpack.c.l.b16 %v860
        %v935 = vunpack.c.l.b16 %v861
        %v936 = vunpack.c.h.b16 %v861
        %v937 = vunpack.c.l.b16 %v862
        %v938 = vpack.c.b16 %v896, %v893
        %v939 = vpack.c.b16 %v897, %v894
        %v940 = vpack.c.b16 %v898, %v895
        %v941 = vpack.c.b16 %v902, %v899
        %v942 = vpack.c.b16 %v903, %v900
        %v943 = vpack.c.b16 %v904, %v901
        %v944 = vpack.c.b16 %v908, %v905
        %v945 = vpack.c.b16 %v909, %v906
        %v946 = vpack.c.b16 %v910, %v907
        %v947 = vpack.c.b16 %v914, %v911
        %v948 = vpack.c.b16 %v915, %v912
        %v949 = vpack.c.b16 %v916, %v913
        %v950 = vpack.c.b16 %v920, %v917
        %v951 = vpack.c.b16 %v921, %v918
        %v952 = vpack.c.b16 %v922, %v919
        %v953 = vpack.c.b16 %v926, %v923
        %v954 = vpack.c.b16 %v927, %v924
        %v955 = vpack.c.b16 %v928, %v925
        %v956 = vpack.c.b16 %v932, %v929
        %v957 = vpack.c.b16 %v933, %v930
        %v958 = vpack.c.b16 %v934, %v931
        %v959 = vpack.c.b16 %v935, %v935
        %v960 = vpack.c.b16 %v936, %v936
        %v961 = vpack.c.b16 %v937, %v937
        %v984 = vsel %vm528, %v829, 0
        %v987 = vsel %vm528, %v830, 0
        %v990 = vsel %vm528, %v831, 0
        %v993 = vsel %vm538, %v959, 0
        %v996 = vsel %vm538, %v960, 0
        %v999 = vsel %vm538, %v961, 0
        %1001 = vmatpush.bf16.msra.mxu0 %v993
        %1002 = vmatpush.bf16.msra.mxu0 %v956
        %1003 = vmatpush.bf16.msra.mxu0 %v953
        %1004 = vmatpush.bf16.msra.mxu0 %v950
        %1005 = vmatpush.bf16.msra.mxu0 %v947
        %1006 = vmatpush.bf16.msra.mxu0 %v944
        %1007 = vmatpush.bf16.msra.mxu0 %v941
        %1008 = vmatpush.bf16.msra.mxu0 %v938
        %1009 = vmatmul.bf16.gmra.mxu0 %v984
        %v1010 = vpop.f32.mrf.mxu0
        %v1011 = vadd.f32 0.0, %v1010
        %v1012 = vpop.f32.mrf.mxu0
        %v1013 = vadd.f32 0.0, %v1012
        %1014 = vmatmul.bf16.gmra.mxu0 %v987
        %v1015 = vpop.f32.mrf.mxu0
        %v1016 = vadd.f32 0.0, %v1015
        %v1017 = vpop.f32.mrf.mxu0
        %v1018 = vadd.f32 0.0, %v1017
        %1019 = vmatmul.bf16.gmra.mxu0 %v990
        %v1020 = vpop.f32.mrf.mxu0
        %v1021 = vadd.f32 0.0, %v1020
        %v1022 = vpop.f32.mrf.mxu0
        %1023 = vdwg.mxu0
        %1024 = vmatpush.bf16.msra.mxu0 %v996
        %1025 = vmatpush.bf16.msra.mxu0 %v957
        %1026 = vmatpush.bf16.msra.mxu0 %v954
        %1027 = vmatpush.bf16.msra.mxu0 %v951
        %1028 = vmatpush.bf16.msra.mxu0 %v948
        %1029 = vmatpush.bf16.msra.mxu0 %v945
        %1030 = vmatpush.bf16.msra.mxu0 %v942
        %1031 = vmatpush.bf16.msra.mxu0 %v939
        %1032 = vmatmul.bf16.gmra.mxu0 %v984
        %v1033 = vpop.f32.mrf.mxu0
        %v1034 = vadd.f32 0.0, %v1033
        %v1035 = vpop.f32.mrf.mxu0
        %v1036 = vadd.f32 0.0, %v1035
        %1037 = vmatmul.bf16.gmra.mxu0 %v987
        %v1038 = vpop.f32.mrf.mxu0
        %v1039 = vadd.f32 0.0, %v1038
        %v1040 = vpop.f32.mrf.mxu0
        %v1041 = vadd.f32 0.0, %v1040
        %1042 = vmatmul.bf16.gmra.mxu0 %v990
        %v1043 = vpop.f32.mrf.mxu0
        %v1044 = vadd.f32 0.0, %v1043
        %v1045 = vpop.f32.mrf.mxu0
        %1046 = vdwg.mxu0
        %1047 = vmatpush.bf16.msra.mxu0 %v999
        %1048 = vmatpush.bf16.msra.mxu0 %v958
        %1049 = vmatpush.bf16.msra.mxu0 %v955
        %1050 = vmatpush.bf16.msra.mxu0 %v952
        %1051 = vmatpush.bf16.msra.mxu0 %v949
        %1052 = vmatpush.bf16.msra.mxu0 %v946
        %1053 = vmatpush.bf16.msra.mxu0 %v943
        %1054 = vmatpush.bf16.msra.mxu0 %v940
        %1055 = vmatmul.bf16.gmra.mxu0 %v984
        %v1056 = vpop.f32.mrf.mxu0
        %v1057 = vadd.f32 0.0, %v1056
        %v1058 = vpop.f32.mrf.mxu0
        %v1059 = vadd.f32 0.0, %v1058
        %1060 = vmatmul.bf16.gmra.mxu0 %v987
        %v1061 = vpop.f32.mrf.mxu0
        %v1062 = vadd.f32 0.0, %v1061
        %v1063 = vpop.f32.mrf.mxu0
        %v1064 = vadd.f32 0.0, %v1063
        %1065 = vmatmul.bf16.gmra.mxu0 %v990
        %v1066 = vpop.f32.mrf.mxu0
        %v1067 = vadd.f32 0.0, %v1066
        %v1068 = vpop.f32.mrf.mxu0
        %1069 = vdwg.mxu0
        %v1070 = vadd.f32 %v765, %v1011
        %v1071 = vadd.f32 %v788, %v1034
        %v1072 = vadd.f32 %v811, %v1057
        %v1073 = vadd.f32 %v767, %v1013
        %v1074 = vadd.f32 %v790, %v1036
        %v1075 = vadd.f32 %v813, %v1059
        %v1076 = vadd.f32 %v770, %v1016
        %v1077 = vadd.f32 %v793, %v1039
        %v1078 = vadd.f32 %v816, %v1062
        %v1079 = vadd.f32 %v772, %v1018
        %v1080 = vadd.f32 %v795, %v1041
        %v1081 = vadd.f32 %v818, %v1064
        %v1082 = vadd.f32 %v775, %v1021
        %v1083 = vadd.f32 %v798, %v1044
        %v1084 = vadd.f32 %v821, %v1067
        %v1085 = vld [vmem:[%s329 + $0x3] sm:$0xff]
        %v1086 = vld [vmem:[%s329 + $0xb] sm:$0xff]
        %v1087 = vld [vmem:[%s329 + $0x13] sm:$0xff]
        %v1088 = vld [vmem:[%s329 + $0x1b] sm:$0xff]
        %v1089 = vld [vmem:[%s329 + $0x23] sm:$0x1]
        %v1090 = vpack.c.bf16 %v1086, %v1085
        %v1091 = vpack.c.bf16 %v1088, %v1087
        %v1092 = vpack.c.bf16 %v1089, %v1089
        %s1093 = scalar_lea.vmem %s1, 540
        %v1094 = vld [vmem:[%s1093] sm:$0xff]
        %v1095 = vld [vmem:[%s1093 + $0x8] sm:$0xf]
        %v1096 = vld [vmem:[%s1093 + $0xc] sm:$0xff]
        %v1097 = vld [vmem:[%s1093 + $0x14] sm:$0xf]
        %v1098 = vld [vmem:[%s1093 + $0x18] sm:$0xff]
        %v1099 = vld [vmem:[%s1093 + $0x20] sm:$0xf]
        %v1100 = vld [vmem:[%s1093 + $0x24] sm:$0xff]
        %v1101 = vld [vmem:[%s1093 + $0x2c] sm:$0xf]
        %v1102 = vld [vmem:[%s1093 + $0x30] sm:$0xff]
        %v1103 = vld [vmem:[%s1093 + $0x38] sm:$0xf]
        %v1104 = vld [vmem:[%s1093 + $0x3c] sm:$0xff]
        %v1105 = vld [vmem:[%s1093 + $0x44] sm:$0xf]
        %v1106 = vld [vmem:[%s1093 + $0x48] sm:$0xff]
        %v1107 = vld [vmem:[%s1093 + $0x50] sm:$0xf]
        %v1108 = vld [vmem:[%s1093 + $0x54] sm:$0xff]
        %v1109 = vld [vmem:[%s1093 + $0x5c] sm:$0xf]
        %v1110 = vld [vmem:[%s1093 + $0x60] sm:$0xff]
        %v1111 = vld [vmem:[%s1093 + $0x68] sm:$0xf]
        %v1112 = vld [vmem:[%s1093 + $0x6c] sm:$0xff]
        %v1113 = vld [vmem:[%s1093 + $0x74] sm:$0xf]
        %v1114 = vld [vmem:[%s1093 + $0x78] sm:$0xff]
        %v1115 = vld [vmem:[%s1093 + $0x80] sm:$0xf]
        %v1116 = vld [vmem:[%s1093 + $0x84] sm:$0xff]
        %v1117 = vld [vmem:[%s1093 + $0x8c] sm:$0xf]
        %v1118 = vld [vmem:[%s1093 + $0x90] sm:$0xff]
        %v1119 = vld [vmem:[%s1093 + $0x98] sm:$0xf]
        %v1120 = vld [vmem:[%s1093 + $0x9c] sm:$0xff]
        %v1121 = vld [vmem:[%s1093 + $0xa4] sm:$0xf]
        %v1122 = vld [vmem:[%s1093 + $0xa8] sm:$0xff]
        %v1123 = vld [vmem:[%s1093 + $0xb0] sm:$0xf]
        %v1154 = vunpack.c.l.b16 %v1094
        %v1155 = vunpack.c.h.b16 %v1094
        %v1156 = vunpack.c.l.b16 %v1095
        %v1157 = vunpack.c.l.b16 %v1096
        %v1158 = vunpack.c.h.b16 %v1096
        %v1159 = vunpack.c.l.b16 %v1097
        %v1160 = vunpack.c.l.b16 %v1098
        %v1161 = vunpack.c.h.b16 %v1098
        %v1162 = vunpack.c.l.b16 %v1099
        %v1163 = vunpack.c.l.b16 %v1100
        %v1164 = vunpack.c.h.b16 %v1100
        %v1165 = vunpack.c.l.b16 %v1101
        %v1166 = vunpack.c.l.b16 %v1102
        %v1167 = vunpack.c.h.b16 %v1102
        %v1168 = vunpack.c.l.b16 %v1103
        %v1169 = vunpack.c.l.b16 %v1104
        %v1170 = vunpack.c.h.b16 %v1104
        %v1171 = vunpack.c.l.b16 %v1105
        %v1172 = vunpack.c.l.b16 %v1106
        %v1173 = vunpack.c.h.b16 %v1106
        %v1174 = vunpack.c.l.b16 %v1107
        %v1175 = vunpack.c.l.b16 %v1108
        %v1176 = vunpack.c.h.b16 %v1108
        %v1177 = vunpack.c.l.b16 %v1109
        %v1178 = vunpack.c.l.b16 %v1110
        %v1179 = vunpack.c.h.b16 %v1110
        %v1180 = vunpack.c.l.b16 %v1111
        %v1181 = vunpack.c.l.b16 %v1112
        %v1182 = vunpack.c.h.b16 %v1112
        %v1183 = vunpack.c.l.b16 %v1113
        %v1184 = vunpack.c.l.b16 %v1114
        %v1185 = vunpack.c.h.b16 %v1114
        %v1186 = vunpack.c.l.b16 %v1115
        %v1187 = vunpack.c.l.b16 %v1116
        %v1188 = vunpack.c.h.b16 %v1116
        %v1189 = vunpack.c.l.b16 %v1117
        %v1190 = vunpack.c.l.b16 %v1118
        %v1191 = vunpack.c.h.b16 %v1118
        %v1192 = vunpack.c.l.b16 %v1119
        %v1193 = vunpack.c.l.b16 %v1120
        %v1194 = vunpack.c.h.b16 %v1120
        %v1195 = vunpack.c.l.b16 %v1121
        %v1196 = vunpack.c.l.b16 %v1122
        %v1197 = vunpack.c.h.b16 %v1122
        %v1198 = vunpack.c.l.b16 %v1123
        %v1199 = vpack.c.b16 %v1157, %v1154
        %v1200 = vpack.c.b16 %v1158, %v1155
        %v1201 = vpack.c.b16 %v1159, %v1156
        %v1202 = vpack.c.b16 %v1163, %v1160
        %v1203 = vpack.c.b16 %v1164, %v1161
        %v1204 = vpack.c.b16 %v1165, %v1162
        %v1205 = vpack.c.b16 %v1169, %v1166
        %v1206 = vpack.c.b16 %v1170, %v1167
        %v1207 = vpack.c.b16 %v1171, %v1168
        %v1208 = vpack.c.b16 %v1175, %v1172
        %v1209 = vpack.c.b16 %v1176, %v1173
        %v1210 = vpack.c.b16 %v1177, %v1174
        %v1211 = vpack.c.b16 %v1181, %v1178
        %v1212 = vpack.c.b16 %v1182, %v1179
        %v1213 = vpack.c.b16 %v1183, %v1180
        %v1214 = vpack.c.b16 %v1187, %v1184
        %v1215 = vpack.c.b16 %v1188, %v1185
        %v1216 = vpack.c.b16 %v1189, %v1186
        %v1217 = vpack.c.b16 %v1193, %v1190
        %v1218 = vpack.c.b16 %v1194, %v1191
        %v1219 = vpack.c.b16 %v1195, %v1192
        %v1220 = vpack.c.b16 %v1196, %v1196
        %v1221 = vpack.c.b16 %v1197, %v1197
        %v1222 = vpack.c.b16 %v1198, %v1198
        %v1245 = vsel %vm528, %v1090, 0
        %v1248 = vsel %vm528, %v1091, 0
        %v1251 = vsel %vm528, %v1092, 0
        %v1254 = vsel %vm538, %v1220, 0
        %v1257 = vsel %vm538, %v1221, 0
        %v1260 = vsel %vm538, %v1222, 0
        %1262 = vmatpush.bf16.msra.mxu0 %v1254
        %1263 = vmatpush.bf16.msra.mxu0 %v1217
        %1264 = vmatpush.bf16.msra.mxu0 %v1214
        %1265 = vmatpush.bf16.msra.mxu0 %v1211
        %1266 = vmatpush.bf16.msra.mxu0 %v1208
        %1267 = vmatpush.bf16.msra.mxu0 %v1205
        %1268 = vmatpush.bf16.msra.mxu0 %v1202
        %1269 = vmatpush.bf16.msra.mxu0 %v1199
        %1270 = vmatmul.bf16.gmra.mxu0 %v1245
        %v1271 = vpop.f32.mrf.mxu0
        %v1272 = vadd.f32 0.0, %v1271
        %v1273 = vpop.f32.mrf.mxu0
        %v1274 = vadd.f32 0.0, %v1273
        %1275 = vmatmul.bf16.gmra.mxu0 %v1248
        %v1276 = vpop.f32.mrf.mxu0
        %v1277 = vadd.f32 0.0, %v1276
        %v1278 = vpop.f32.mrf.mxu0
        %v1279 = vadd.f32 0.0, %v1278
        %1280 = vmatmul.bf16.gmra.mxu0 %v1251
        %v1281 = vpop.f32.mrf.mxu0
        %v1282 = vadd.f32 0.0, %v1281
        %v1283 = vpop.f32.mrf.mxu0
        %1284 = vdwg.mxu0
        %1285 = vmatpush.bf16.msra.mxu0 %v1257
        %1286 = vmatpush.bf16.msra.mxu0 %v1218
        %1287 = vmatpush.bf16.msra.mxu0 %v1215
        %1288 = vmatpush.bf16.msra.mxu0 %v1212
        %1289 = vmatpush.bf16.msra.mxu0 %v1209
        %1290 = vmatpush.bf16.msra.mxu0 %v1206
        %1291 = vmatpush.bf16.msra.mxu0 %v1203
        %1292 = vmatpush.bf16.msra.mxu0 %v1200
        %1293 = vmatmul.bf16.gmra.mxu0 %v1245
        %v1294 = vpop.f32.mrf.mxu0
        %v1295 = vadd.f32 0.0, %v1294
        %v1296 = vpop.f32.mrf.mxu0
        %v1297 = vadd.f32 0.0, %v1296
        %1298 = vmatmul.bf16.gmra.mxu0 %v1248
        %v1299 = vpop.f32.mrf.mxu0
        %v1300 = vadd.f32 0.0, %v1299
        %v1301 = vpop.f32.mrf.mxu0
        %v1302 = vadd.f32 0.0, %v1301
        %1303 = vmatmul.bf16.gmra.mxu0 %v1251
        %v1304 = vpop.f32.mrf.mxu0
        %v1305 = vadd.f32 0.0, %v1304
        %v1306 = vpop.f32.mrf.mxu0
        %1307 = vdwg.mxu0
        %1308 = vmatpush.bf16.msra.mxu0 %v1260
        %1309 = vmatpush.bf16.msra.mxu0 %v1219
        %1310 = vmatpush.bf16.msra.mxu0 %v1216
        %1311 = vmatpush.bf16.msra.mxu0 %v1213
        %1312 = vmatpush.bf16.msra.mxu0 %v1210
        %1313 = vmatpush.bf16.msra.mxu0 %v1207
        %1314 = vmatpush.bf16.msra.mxu0 %v1204
        %1315 = vmatpush.bf16.msra.mxu0 %v1201
        %1316 = vmatmul.bf16.gmra.mxu0 %v1245
        %v1317 = vpop.f32.mrf.mxu0
        %v1318 = vadd.f32 0.0, %v1317
        %v1319 = vpop.f32.mrf.mxu0
        %v1320 = vadd.f32 0.0, %v1319
        %1321 = vmatmul.bf16.gmra.mxu0 %v1248
        %v1322 = vpop.f32.mrf.mxu0
        %v1323 = vadd.f32 0.0, %v1322
        %v1324 = vpop.f32.mrf.mxu0
        %v1325 = vadd.f32 0.0, %v1324
        %1326 = vmatmul.bf16.gmra.mxu0 %v1251
        %v1327 = vpop.f32.mrf.mxu0
        %v1328 = vadd.f32 0.0, %v1327
        %v1329 = vpop.f32.mrf.mxu0
        %1330 = vdwg.mxu0
        %v1331 = vadd.f32 %v1070, %v1272
        %v1332 = vadd.f32 %v1071, %v1295
        %v1333 = vadd.f32 %v1072, %v1318
        %v1334 = vadd.f32 %v1073, %v1274
        %v1335 = vadd.f32 %v1074, %v1297
        %v1336 = vadd.f32 %v1075, %v1320
        %v1337 = vadd.f32 %v1076, %v1277
        %v1338 = vadd.f32 %v1077, %v1300
        %v1339 = vadd.f32 %v1078, %v1323
        %v1340 = vadd.f32 %v1079, %v1279
        %v1341 = vadd.f32 %v1080, %v1302
        %v1342 = vadd.f32 %v1081, %v1325
        %v1343 = vadd.f32 %v1082, %v1282
        %v1344 = vadd.f32 %v1083, %v1305
        %v1345 = vadd.f32 %v1084, %v1328
        %v1346 = vld [vmem:[%s329 + $0x4] sm:$0xff]
        %v1347 = vld [vmem:[%s329 + $0xc] sm:$0xff]
        %v1348 = vld [vmem:[%s329 + $0x14] sm:$0xff]
        %v1349 = vld [vmem:[%s329 + $0x1c] sm:$0xff]
        %v1350 = vld [vmem:[%s329 + $0x24] sm:$0x1]
        %v1351 = vpack.c.bf16 %v1347, %v1346
        %v1352 = vpack.c.bf16 %v1349, %v1348
        %v1353 = vpack.c.bf16 %v1350, %v1350
        %s1354 = scalar_lea.vmem %s1, 720
        %v1355 = vld [vmem:[%s1354] sm:$0xff]
        %v1356 = vld [vmem:[%s1354 + $0x8] sm:$0xf]
        %v1357 = vld [vmem:[%s1354 + $0xc] sm:$0xff]
        %v1358 = vld [vmem:[%s1354 + $0x14] sm:$0xf]
        %v1359 = vld [vmem:[%s1354 + $0x18] sm:$0xff]
        %v1360 = vld [vmem:[%s1354 + $0x20] sm:$0xf]
        %v1361 = vld [vmem:[%s1354 + $0x24] sm:$0xff]
        %v1362 = vld [vmem:[%s1354 + $0x2c] sm:$0xf]
        %v1363 = vld [vmem:[%s1354 + $0x30] sm:$0xff]
        %v1364 = vld [vmem:[%s1354 + $0x38] sm:$0xf]
        %v1365 = vld [vmem:[%s1354 + $0x3c] sm:$0xff]
        %v1366 = vld [vmem:[%s1354 + $0x44] sm:$0xf]
        %v1367 = vld [vmem:[%s1354 + $0x48] sm:$0xff]
        %v1368 = vld [vmem:[%s1354 + $0x50] sm:$0xf]
        %v1369 = vld [vmem:[%s1354 + $0x54] sm:$0xff]
        %v1370 = vld [vmem:[%s1354 + $0x5c] sm:$0xf]
        %v1371 = vld [vmem:[%s1354 + $0x60] sm:$0xff]
        %v1372 = vld [vmem:[%s1354 + $0x68] sm:$0xf]
        %v1373 = vld [vmem:[%s1354 + $0x6c] sm:$0xff]
        %v1374 = vld [vmem:[%s1354 + $0x74] sm:$0xf]
        %v1375 = vld [vmem:[%s1354 + $0x78] sm:$0xff]
        %v1376 = vld [vmem:[%s1354 + $0x80] sm:$0xf]
        %v1377 = vld [vmem:[%s1354 + $0x84] sm:$0xff]
        %v1378 = vld [vmem:[%s1354 + $0x8c] sm:$0xf]
        %v1379 = vld [vmem:[%s1354 + $0x90] sm:$0xff]
        %v1380 = vld [vmem:[%s1354 + $0x98] sm:$0xf]
        %v1381 = vld [vmem:[%s1354 + $0x9c] sm:$0xff]
        %v1382 = vld [vmem:[%s1354 + $0xa4] sm:$0xf]
        %v1383 = vld [vmem:[%s1354 + $0xa8] sm:$0xff]
        %v1384 = vld [vmem:[%s1354 + $0xb0] sm:$0xf]
        %v1415 = vunpack.c.l.b16 %v1355
        %v1416 = vunpack.c.h.b16 %v1355
        %v1417 = vunpack.c.l.b16 %v1356
        %v1418 = vunpack.c.l.b16 %v1357
        %v1419 = vunpack.c.h.b16 %v1357
        %v1420 = vunpack.c.l.b16 %v1358
        %v1421 = vunpack.c.l.b16 %v1359
        %v1422 = vunpack.c.h.b16 %v1359
        %v1423 = vunpack.c.l.b16 %v1360
        %v1424 = vunpack.c.l.b16 %v1361
        %v1425 = vunpack.c.h.b16 %v1361
        %v1426 = vunpack.c.l.b16 %v1362
        %v1427 = vunpack.c.l.b16 %v1363
        %v1428 = vunpack.c.h.b16 %v1363
        %v1429 = vunpack.c.l.b16 %v1364
        %v1430 = vunpack.c.l.b16 %v1365
        %v1431 = vunpack.c.h.b16 %v1365
        %v1432 = vunpack.c.l.b16 %v1366
        %v1433 = vunpack.c.l.b16 %v1367
        %v1434 = vunpack.c.h.b16 %v1367
        %v1435 = vunpack.c.l.b16 %v1368
        %v1436 = vunpack.c.l.b16 %v1369
        %v1437 = vunpack.c.h.b16 %v1369
        %v1438 = vunpack.c.l.b16 %v1370
        %v1439 = vunpack.c.l.b16 %v1371
        %v1440 = vunpack.c.h.b16 %v1371
        %v1441 = vunpack.c.l.b16 %v1372
        %v1442 = vunpack.c.l.b16 %v1373
        %v1443 = vunpack.c.h.b16 %v1373
        %v1444 = vunpack.c.l.b16 %v1374
        %v1445 = vunpack.c.l.b16 %v1375
        %v1446 = vunpack.c.h.b16 %v1375
        %v1447 = vunpack.c.l.b16 %v1376
        %v1448 = vunpack.c.l.b16 %v1377
        %v1449 = vunpack.c.h.b16 %v1377
        %v1450 = vunpack.c.l.b16 %v1378
        %v1451 = vunpack.c.l.b16 %v1379
        %v1452 = vunpack.c.h.b16 %v1379
        %v1453 = vunpack.c.l.b16 %v1380
        %v1454 = vunpack.c.l.b16 %v1381
        %v1455 = vunpack.c.h.b16 %v1381
        %v1456 = vunpack.c.l.b16 %v1382
        %v1457 = vunpack.c.l.b16 %v1383
        %v1458 = vunpack.c.h.b16 %v1383
        %v1459 = vunpack.c.l.b16 %v1384
        %v1460 = vpack.c.b16 %v1418, %v1415
        %v1461 = vpack.c.b16 %v1419, %v1416
        %v1462 = vpack.c.b16 %v1420, %v1417
        %v1463 = vpack.c.b16 %v1424, %v1421
        %v1464 = vpack.c.b16 %v1425, %v1422
        %v1465 = vpack.c.b16 %v1426, %v1423
        %v1466 = vpack.c.b16 %v1430, %v1427
        %v1467 = vpack.c.b16 %v1431, %v1428
        %v1468 = vpack.c.b16 %v1432, %v1429
        %v1469 = vpack.c.b16 %v1436, %v1433
        %v1470 = vpack.c.b16 %v1437, %v1434
        %v1471 = vpack.c.b16 %v1438, %v1435
        %v1472 = vpack.c.b16 %v1442, %v1439
        %v1473 = vpack.c.b16 %v1443, %v1440
        %v1474 = vpack.c.b16 %v1444, %v1441
        %v1475 = vpack.c.b16 %v1448, %v1445
        %v1476 = vpack.c.b16 %v1449, %v1446
        %v1477 = vpack.c.b16 %v1450, %v1447
        %v1478 = vpack.c.b16 %v1454, %v1451
        %v1479 = vpack.c.b16 %v1455, %v1452
        %v1480 = vpack.c.b16 %v1456, %v1453
        %v1481 = vpack.c.b16 %v1457, %v1457
        %v1482 = vpack.c.b16 %v1458, %v1458
        %v1483 = vpack.c.b16 %v1459, %v1459
        %v1506 = vsel %vm528, %v1351, 0
        %v1509 = vsel %vm528, %v1352, 0
        %v1512 = vsel %vm528, %v1353, 0
        %v1515 = vsel %vm538, %v1481, 0
        %v1518 = vsel %vm538, %v1482, 0
        %v1521 = vsel %vm538, %v1483, 0
        %1523 = vmatpush.bf16.msra.mxu0 %v1515
        %1524 = vmatpush.bf16.msra.mxu0 %v1478
        %1525 = vmatpush.bf16.msra.mxu0 %v1475
        %1526 = vmatpush.bf16.msra.mxu0 %v1472
        %1527 = vmatpush.bf16.msra.mxu0 %v1469
        %1528 = vmatpush.bf16.msra.mxu0 %v1466
        %1529 = vmatpush.bf16.msra.mxu0 %v1463
        %1530 = vmatpush.bf16.msra.mxu0 %v1460
        %1531 = vmatmul.bf16.gmra.mxu0 %v1506
        %v1532 = vpop.f32.mrf.mxu0
        %v1533 = vadd.f32 0.0, %v1532
        %v1534 = vpop.f32.mrf.mxu0
        %v1535 = vadd.f32 0.0, %v1534
        %1536 = vmatmul.bf16.gmra.mxu0 %v1509
        %v1537 = vpop.f32.mrf.mxu0
        %v1538 = vadd.f32 0.0, %v1537
        %v1539 = vpop.f32.mrf.mxu0
        %v1540 = vadd.f32 0.0, %v1539
        %1541 = vmatmul.bf16.gmra.mxu0 %v1512
        %v1542 = vpop.f32.mrf.mxu0
        %v1543 = vadd.f32 0.0, %v1542
        %v1544 = vpop.f32.mrf.mxu0
        %1545 = vdwg.mxu0
        %1546 = vmatpush.bf16.msra.mxu0 %v1518
        %1547 = vmatpush.bf16.msra.mxu0 %v1479
        %1548 = vmatpush.bf16.msra.mxu0 %v1476
        %1549 = vmatpush.bf16.msra.mxu0 %v1473
        %1550 = vmatpush.bf16.msra.mxu0 %v1470
        %1551 = vmatpush.bf16.msra.mxu0 %v1467
        %1552 = vmatpush.bf16.msra.mxu0 %v1464
        %1553 = vmatpush.bf16.msra.mxu0 %v1461
        %1554 = vmatmul.bf16.gmra.mxu0 %v1506
        %v1555 = vpop.f32.mrf.mxu0
        %v1556 = vadd.f32 0.0, %v1555
        %v1557 = vpop.f32.mrf.mxu0
        %v1558 = vadd.f32 0.0, %v1557
        %1559 = vmatmul.bf16.gmra.mxu0 %v1509
        %v1560 = vpop.f32.mrf.mxu0
        %v1561 = vadd.f32 0.0, %v1560
        %v1562 = vpop.f32.mrf.mxu0
        %v1563 = vadd.f32 0.0, %v1562
        %1564 = vmatmul.bf16.gmra.mxu0 %v1512
        %v1565 = vpop.f32.mrf.mxu0
        %v1566 = vadd.f32 0.0, %v1565
        %v1567 = vpop.f32.mrf.mxu0
        %1568 = vdwg.mxu0
        %1569 = vmatpush.bf16.msra.mxu0 %v1521
        %1570 = vmatpush.bf16.msra.mxu0 %v1480
        %1571 = vmatpush.bf16.msra.mxu0 %v1477
        %1572 = vmatpush.bf16.msra.mxu0 %v1474
        %1573 = vmatpush.bf16.msra.mxu0 %v1471
        %1574 = vmatpush.bf16.msra.mxu0 %v1468
        %1575 = vmatpush.bf16.msra.mxu0 %v1465
        %1576 = vmatpush.bf16.msra.mxu0 %v1462
        %1577 = vmatmul.bf16.gmra.mxu0 %v1506
        %v1578 = vpop.f32.mrf.mxu0
        %v1579 = vadd.f32 0.0, %v1578
        %v1580 = vpop.f32.mrf.mxu0
        %v1581 = vadd.f32 0.0, %v1580
        %1582 = vmatmul.bf16.gmra.mxu0 %v1509
        %v1583 = vpop.f32.mrf.mxu0
        %v1584 = vadd.f32 0.0, %v1583
        %v1585 = vpop.f32.mrf.mxu0
        %v1586 = vadd.f32 0.0, %v1585
        %1587 = vmatmul.bf16.gmra.mxu0 %v1512
        %v1588 = vpop.f32.mrf.mxu0
        %v1589 = vadd.f32 0.0, %v1588
        %v1590 = vpop.f32.mrf.mxu0
        %1591 = vdwg.mxu0
        %v1592 = vadd.f32 %v1331, %v1533
        %v1593 = vadd.f32 %v1332, %v1556
        %v1594 = vadd.f32 %v1333, %v1579
        %v1595 = vadd.f32 %v1334, %v1535
        %v1596 = vadd.f32 %v1335, %v1558
        %v1597 = vadd.f32 %v1336, %v1581
        %v1598 = vadd.f32 %v1337, %v1538
        %v1599 = vadd.f32 %v1338, %v1561
        %v1600 = vadd.f32 %v1339, %v1584
        %v1601 = vadd.f32 %v1340, %v1540
        %v1602 = vadd.f32 %v1341, %v1563
        %v1603 = vadd.f32 %v1342, %v1586
        %v1604 = vadd.f32 %v1343, %v1543
        %v1605 = vadd.f32 %v1344, %v1566
        %v1606 = vadd.f32 %v1345, %v1589
        %v1607 = vld [vmem:[%s2] sm:$0x7]
        %v1609 = vperm.slane %v1607, 0
        %v1610 = vperm.slane %v1607, 1
        %v1611 = vperm.slane %v1607, 2
        %v1615 = vadd.f32 %v1592, %v1609
        %v1616 = vadd.f32 %v1593, %v1610
        %v1617 = vadd.f32 %v1594, %v1611
        %v1618 = vadd.f32 %v1595, %v1609
        %v1619 = vadd.f32 %v1596, %v1610
        %v1620 = vadd.f32 %v1597, %v1611
        %v1621 = vadd.f32 %v1598, %v1609
        %v1622 = vadd.f32 %v1599, %v1610
        %v1623 = vadd.f32 %v1600, %v1611
        %v1624 = vadd.f32 %v1601, %v1609
        %v1625 = vadd.f32 %v1602, %v1610
        %v1626 = vadd.f32 %v1603, %v1611
        %v1627 = vadd.f32 %v1604, %v1609
        %v1628 = vadd.f32 %v1605, %v1610
        %v1629 = vadd.f32 %v1606, %v1611
        %v1630 = vmax.f32 %v1615, 0.0
        %v1631 = vmax.f32 %v1616, 0.0
        %v1632 = vmax.f32 %v1617, 0.0
        %v1633 = vmax.f32 %v1618, 0.0
        %v1634 = vmax.f32 %v1619, 0.0
        %v1635 = vmax.f32 %v1620, 0.0
        %v1636 = vmax.f32 %v1621, 0.0
        %v1637 = vmax.f32 %v1622, 0.0
        %v1638 = vmax.f32 %v1623, 0.0
        %v1639 = vmax.f32 %v1624, 0.0
        %v1640 = vmax.f32 %v1625, 0.0
        %v1641 = vmax.f32 %v1626, 0.0
        %v1642 = vmax.f32 %v1627, 0.0
        %v1643 = vmax.f32 %v1628, 0.0
        %v1644 = vmax.f32 %v1629, 0.0
        %1645 = vst [vmem:[#allocation2] sm:$0xff] %v1630
        %1646 = vst [vmem:[#allocation2 + $0x8] sm:$0xff] %v1631
        %vm1647 = vcmask 261120
        %1648 = vst.msk [vmem:[#allocation2 + $0x10] sm:$0xff] %vm1647, %v1632
        %1649 = vst [vmem:[#allocation2 + $0x18] sm:$0xff] %v1633
        %1650 = vst [vmem:[#allocation2 + $0x20] sm:$0xff] %v1634
        %1651 = vst.msk [vmem:[#allocation2 + $0x28] sm:$0xff] %vm1647, %v1635
        %1652 = vst [vmem:[#allocation2 + $0x30] sm:$0xff] %v1636
        %1653 = vst [vmem:[#allocation2 + $0x38] sm:$0xff] %v1637
        %1654 = vst.msk [vmem:[#allocation2 + $0x40] sm:$0xff] %vm1647, %v1638
        %1655 = vst [vmem:[#allocation2 + $0x48] sm:$0xff] %v1639
        %1656 = vst [vmem:[#allocation2 + $0x50] sm:$0xff] %v1640
        %1657 = vst.msk [vmem:[#allocation2 + $0x58] sm:$0xff] %vm1647, %v1641
        %1658 = vst [vmem:[#allocation2 + $0x60] sm:$0x1] %v1642
        %1659 = vst [vmem:[#allocation2 + $0x68] sm:$0x1] %v1643
        %vm1660 = vcmask 253952
        %1661 = vst.msk [vmem:[#allocation2 + $0x70] sm:$0x1] %vm1660, %v1644
        %v1662 = vld [vmem:[#allocation2] sm:$0xff]
        %v1663 = vld [vmem:[#allocation2 + $0x8] sm:$0xff]
        %v1664 = vld [vmem:[#allocation2 + $0x10] sm:$0xff]
        %v1665 = vld [vmem:[#allocation2 + $0x18] sm:$0xff]
        %v1666 = vld [vmem:[#allocation2 + $0x20] sm:$0xff]
        %v1667 = vld [vmem:[#allocation2 + $0x28] sm:$0xff]
        %v1668 = vld [vmem:[#allocation2 + $0x30] sm:$0xff]
        %v1669 = vld [vmem:[#allocation2 + $0x38] sm:$0xff]
        %v1670 = vld [vmem:[#allocation2 + $0x40] sm:$0xff]
        %v1671 = vld [vmem:[#allocation2 + $0x48] sm:$0x1]
        %v1672 = vld [vmem:[#allocation2 + $0x50] sm:$0x1]
        %v1673 = vld [vmem:[#allocation2 + $0x58] sm:$0x1]
        %v1674 = vpack.c.bf16 %v1665, %v1662
        %v1675 = vpack.c.bf16 %v1666, %v1663
        %v1676 = vpack.c.bf16 %v1667, %v1664
        %v1677 = vpack.c.bf16 %v1671, %v1668
        %v1678 = vpack.c.bf16 %v1672, %v1669
        %v1679 = vpack.c.bf16 %v1673, %v1670
        %v1680 = vld [vmem:[%s3] sm:$0xff]
        %v1681 = vld [vmem:[%s3 + $0x8] sm:$0xff]
        %v1682 = vld [vmem:[%s3 + $0x10] sm:$0xff]
        %v1683 = vld [vmem:[%s3 + $0x18] sm:$0xff]
        %v1684 = vld [vmem:[%s3 + $0x20] sm:$0xff]
        %v1685 = vld [vmem:[%s3 + $0x28] sm:$0xff]
        %v1686 = vld [vmem:[%s3 + $0x30] sm:$0xff]
        %v1687 = vld [vmem:[%s3 + $0x38] sm:$0xff]
        %v1688 = vld [vmem:[%s3 + $0x40] sm:$0xff]
        %v1689 = vld [vmem:[%s3 + $0x48] sm:$0xff]
        %v1690 = vld [vmem:[%s3 + $0x50] sm:$0xff]
        %v1691 = vld [vmem:[%s3 + $0x58] sm:$0xff]
        %v1692 = vld [vmem:[%s3 + $0x60] sm:$0xff]
        %v1693 = vld [vmem:[%s3 + $0x68] sm:$0xff]
        %v1694 = vld [vmem:[%s3 + $0x70] sm:$0xff]
        %v1695 = vld [vmem:[%s3 + $0x78] sm:$0xff]
        %v1696 = vld [vmem:[%s3 + $0x80] sm:$0xff]
        %v1697 = vld [vmem:[%s3 + $0x88] sm:$0xff]
        %v1698 = vld [vmem:[%s3 + $0x90] sm:$0xff]
        %v1699 = vld [vmem:[%s3 + $0x98] sm:$0xff]
        %v1700 = vld [vmem:[%s3 + $0xa0] sm:$0xff]
        %v1701 = vld [vmem:[%s3 + $0xa8] sm:$0xff]
        %v1702 = vld [vmem:[%s3 + $0xb0] sm:$0xff]
        %v1703 = vld [vmem:[%s3 + $0xb8] sm:$0xff]
        %v1704 = vld [vmem:[%s3 + $0xc0] sm:$0xff]
        %v1705 = vld [vmem:[%s3 + $0xc8] sm:$0xff]
        %v1706 = vld [vmem:[%s3 + $0xd0] sm:$0xff]
        %v1707 = vld [vmem:[%s3 + $0xd8] sm:$0xff]
        %v1708 = vld [vmem:[%s3 + $0xe0] sm:$0xff]
        %v1709 = vld [vmem:[%s3 + $0xe8] sm:$0xff]
        %v1710 = vld [vmem:[%s3 + $0xf0] sm:$0xff]
        %v1711 = vld [vmem:[%s3 + $0xf8] sm:$0xff]
        %v1712 = vld [vmem:[%s3 + $0x100] sm:$0xff]
        %v1713 = vld [vmem:[%s3 + $0x108] sm:$0xff]
        %v1714 = vld [vmem:[%s3 + $0x110] sm:$0xff]
        %v1715 = vld [vmem:[%s3 + $0x118] sm:$0xff]
        %v1716 = vld [vmem:[#allocation2] sm:$0xfc]
        %v1717 = vld [vmem:[#allocation2 + $0x8] sm:$0xfc]
        %v1718 = vld [vmem:[#allocation2 + $0x10] sm:$0xfc]
        %v1719 = vld [vmem:[#allocation2 + $0x48] sm:$0x7]
        %v1720 = vld [vmem:[#allocation2 + $0x50] sm:$0x7]
        %v1721 = vld [vmem:[#allocation2 + $0x58] sm:$0x7]
        %v1722 = vpack.c.bf16 %v1665, %v1716
        %v1723 = vpack.c.bf16 %v1666, %v1717
        %v1724 = vpack.c.bf16 %v1667, %v1718
        %v1725 = vpack.c.bf16 %v1719, %v1668
        %v1726 = vpack.c.bf16 %v1720, %v1669
        %v1727 = vpack.c.bf16 %v1721, %v1670
        %s1728 = scalar_lea.vmem %s3, 288
        %v1729 = vld [vmem:[%s1728] sm:$0xff]
        %v1730 = vld [vmem:[%s1728 + $0x8] sm:$0xff]
        %v1731 = vld [vmem:[%s1728 + $0x10] sm:$0xff]
        %v1732 = vld [vmem:[%s1728 + $0x18] sm:$0xff]
        %v1733 = vld [vmem:[%s1728 + $0x20] sm:$0xff]
        %v1734 = vld [vmem:[%s1728 + $0x28] sm:$0xff]
        %v1735 = vld [vmem:[%s1728 + $0x30] sm:$0xff]
        %v1736 = vld [vmem:[%s1728 + $0x38] sm:$0xff]
        %v1737 = vld [vmem:[%s1728 + $0x40] sm:$0xff]
        %v1738 = vld [vmem:[%s1728 + $0x48] sm:$0xff]
        %v1739 = vld [vmem:[%s1728 + $0x50] sm:$0xff]
        %v1740 = vld [vmem:[%s1728 + $0x58] sm:$0xff]
        %v1741 = vld [vmem:[%s1728 + $0x60] sm:$0xff]
        %v1742 = vld [vmem:[%s1728 + $0x68] sm:$0xff]
        %v1743 = vld [vmem:[%s1728 + $0x70] sm:$0xff]
        %v1744 = vld [vmem:[%s1728 + $0x78] sm:$0xff]
        %v1745 = vld [vmem:[%s1728 + $0x80] sm:$0xff]
        %v1746 = vld [vmem:[%s1728 + $0x88] sm:$0xff]
        %v1747 = vld [vmem:[%s1728 + $0x90] sm:$0xff]
        %v1748 = vld [vmem:[%s1728 + $0x98] sm:$0xff]
        %v1749 = vld [vmem:[%s1728 + $0xa0] sm:$0xff]
        %v1750 = vld [vmem:[%s1728 + $0xa8] sm:$0xff]
        %v1751 = vld [vmem:[%s1728 + $0xb0] sm:$0xff]
        %v1752 = vld [vmem:[%s1728 + $0xb8] sm:$0xff]
        %v1753 = vld [vmem:[%s1728 + $0xc0] sm:$0xff]
        %v1754 = vld [vmem:[%s1728 + $0xc8] sm:$0xff]
        %v1755 = vld [vmem:[%s1728 + $0xd0] sm:$0xff]
        %v1756 = vld [vmem:[%s1728 + $0xd8] sm:$0xff]
        %v1757 = vld [vmem:[%s1728 + $0xe0] sm:$0xff]
        %v1758 = vld [vmem:[%s1728 + $0xe8] sm:$0xff]
        %v1759 = vld [vmem:[%s1728 + $0xf0] sm:$0xff]
        %v1760 = vld [vmem:[%s1728 + $0xf8] sm:$0xff]
        %v1761 = vld [vmem:[%s1728 + $0x100] sm:$0xff]
        %v1762 = vld [vmem:[%s1728 + $0x108] sm:$0xff]
        %v1763 = vld [vmem:[%s1728 + $0x110] sm:$0xff]
        %v1764 = vld [vmem:[%s1728 + $0x118] sm:$0xff]
        %vm1771 = vcmask 1046528
        %v1772 = vrot.slane %v1722, 1
        %v1773 = vrot.slane %v1725, 1
        %v1774 = vsel %vm1771, %v1772, %v1773
        %v1775 = vrot.slane %v1723, 1
        %v1776 = vrot.slane %v1726, 1
        %v1777 = vsel %vm1771, %v1775, %v1776
        %v1778 = vrot.slane %v1724, 1
        %v1779 = vrot.slane %v1727, 1
        %v1780 = vsel %vm1771, %v1778, %v1779
        %v1821 = vunpack.c.l.b16 %v1729
        %v1822 = vunpack.c.h.b16 %v1729
        %v1823 = vunpack.c.l.b16 %v1730
        %v1824 = vunpack.c.h.b16 %v1730
        %v1825 = vunpack.c.l.b16 %v1731
        %v1826 = vunpack.c.h.b16 %v1731
        %v1827 = vunpack.c.l.b16 %v1732
        %v1828 = vunpack.c.h.b16 %v1732
        %v1829 = vunpack.c.l.b16 %v1733
        %v1830 = vunpack.c.h.b16 %v1733
        %v1831 = vunpack.c.l.b16 %v1734
        %v1832 = vunpack.c.h.b16 %v1734
        %v1833 = vunpack.c.l.b16 %v1735
        %v1834 = vunpack.c.h.b16 %v1735
        %v1835 = vunpack.c.l.b16 %v1736
        %v1836 = vunpack.c.h.b16 %v1736
        %v1837 = vunpack.c.l.b16 %v1737
        %v1838 = vunpack.c.h.b16 %v1737
        %v1839 = vunpack.c.l.b16 %v1738
        %v1840 = vunpack.c.h.b16 %v1738
        %v1841 = vunpack.c.l.b16 %v1739
        %v1842 = vunpack.c.h.b16 %v1739
        %v1843 = vunpack.c.l.b16 %v1740
        %v1844 = vunpack.c.h.b16 %v1740
        %v1845 = vunpack.c.l.b16 %v1741
        %v1846 = vunpack.c.h.b16 %v1741
        %v1847 = vunpack.c.l.b16 %v1742
        %v1848 = vunpack.c.h.b16 %v1742
        %v1849 = vunpack.c.l.b16 %v1743
        %v1850 = vunpack.c.h.b16 %v1743
        %v1851 = vunpack.c.l.b16 %v1744
        %v1852 = vunpack.c.h.b16 %v1744
        %v1853 = vunpack.c.l.b16 %v1745
        %v1854 = vunpack.c.h.b16 %v1745
        %v1855 = vunpack.c.l.b16 %v1746
        %v1856 = vunpack.c.h.b16 %v1746
        %v1857 = vunpack.c.l.b16 %v1747
        %v1858 = vunpack.c.h.b16 %v1747
        %v1859 = vunpack.c.l.b16 %v1748
        %v1860 = vunpack.c.h.b16 %v1748
        %v1861 = vunpack.c.l.b16 %v1749
        %v1862 = vunpack.c.h.b16 %v1749
        %v1863 = vunpack.c.l.b16 %v1750
        %v1864 = vunpack.c.h.b16 %v1750
        %v1865 = vunpack.c.l.b16 %v1751
        %v1866 = vunpack.c.h.b16 %v1751
        %v1867 = vunpack.c.l.b16 %v1752
        %v1868 = vunpack.c.h.b16 %v1752
        %v1869 = vunpack.c.l.b16 %v1753
        %v1870 = vunpack.c.h.b16 %v1753
        %v1871 = vunpack.c.l.b16 %v1754
        %v1872 = vunpack.c.h.b16 %v1754
        %v1873 = vunpack.c.l.b16 %v1755
        %v1874 = vunpack.c.h.b16 %v1755
        %v1875 = vunpack.c.l.b16 %v1756
        %v1876 = vunpack.c.h.b16 %v1756
        %v1877 = vunpack.c.l.b16 %v1757
        %v1878 = vunpack.c.h.b16 %v1757
        %v1879 = vunpack.c.l.b16 %v1758
        %v1880 = vunpack.c.h.b16 %v1758
        %v1881 = vunpack.c.l.b16 %v1759
        %v1882 = vunpack.c.h.b16 %v1759
        %v1883 = vunpack.c.l.b16 %v1760
        %v1884 = vunpack.c.h.b16 %v1760
        %v1885 = vunpack.c.l.b16 %v1761
        %v1886 = vunpack.c.h.b16 %v1761
        %v1887 = vunpack.c.l.b16 %v1762
        %v1888 = vunpack.c.h.b16 %v1762
        %v1889 = vunpack.c.l.b16 %v1763
        %v1890 = vunpack.c.h.b16 %v1763
        %v1891 = vunpack.c.l.b16 %v1764
        %v1892 = vunpack.c.h.b16 %v1764
        %v1893 = vpack.c.b16 %v1823, %v1821
        %v1894 = vpack.c.b16 %v1824, %v1822
        %v1895 = vpack.c.b16 %v1827, %v1825
        %v1896 = vpack.c.b16 %v1828, %v1826
        %v1897 = vpack.c.b16 %v1831, %v1829
        %v1898 = vpack.c.b16 %v1832, %v1830
        %v1899 = vpack.c.b16 %v1835, %v1833
        %v1900 = vpack.c.b16 %v1836, %v1834
        %v1901 = vpack.c.b16 %v1839, %v1837
        %v1902 = vpack.c.b16 %v1840, %v1838
        %v1903 = vpack.c.b16 %v1843, %v1841
        %v1904 = vpack.c.b16 %v1844, %v1842
        %v1905 = vpack.c.b16 %v1847, %v1845
        %v1906 = vpack.c.b16 %v1848, %v1846
        %v1907 = vpack.c.b16 %v1851, %v1849
        %v1908 = vpack.c.b16 %v1852, %v1850
        %v1909 = vpack.c.b16 %v1855, %v1853
        %v1910 = vpack.c.b16 %v1856, %v1854
        %v1911 = vpack.c.b16 %v1859, %v1857
        %v1912 = vpack.c.b16 %v1860, %v1858
        %v1913 = vpack.c.b16 %v1863, %v1861
        %v1914 = vpack.c.b16 %v1864, %v1862
        %v1915 = vpack.c.b16 %v1867, %v1865
        %v1916 = vpack.c.b16 %v1868, %v1866
        %v1917 = vpack.c.b16 %v1871, %v1869
        %v1918 = vpack.c.b16 %v1872, %v1870
        %v1919 = vpack.c.b16 %v1875, %v1873
        %v1920 = vpack.c.b16 %v1876, %v1874
        %v1921 = vpack.c.b16 %v1879, %v1877
        %v1922 = vpack.c.b16 %v1880, %v1878
        %v1923 = vpack.c.b16 %v1883, %v1881
        %v1924 = vpack.c.b16 %v1884, %v1882
        %v1925 = vpack.c.b16 %v1887, %v1885
        %v1926 = vpack.c.b16 %v1888, %v1886
        %v1927 = vpack.c.b16 %v1891, %v1889
        %v1928 = vpack.c.b16 %v1892, %v1890
        %v1966 = vsel %vm1647, %v1780, 0
        %v1969 = vsel %vm1647, %v1779, 0
        %1971 = vmatpush.bf16.msra.mxu0 %v1907
        %1972 = vmatpush.bf16.msra.mxu0 %v1905
        %1973 = vmatpush.bf16.msra.mxu0 %v1903
        %1974 = vmatpush.bf16.msra.mxu0 %v1901
        %1975 = vmatpush.bf16.msra.mxu0 %v1899
        %1976 = vmatpush.bf16.msra.mxu0 %v1897
        %1977 = vmatpush.bf16.msra.mxu0 %v1895
        %1978 = vmatpush.bf16.msra.mxu0 %v1893
        %1979 = vmatmul.bf16.gmra.mxu0 %v1774
        %v1980 = vpop.f32.mrf.mxu0
        %v1981 = vadd.f32 0.0, %v1980
        %v1982 = vpop.f32.mrf.mxu0
        %v1983 = vadd.f32 0.0, %v1982
        %1984 = vmatmul.bf16.gmra.mxu0 %v1773
        %v1985 = vpop.f32.mrf.mxu0
        %v1986 = vadd.f32 0.0, %v1985
        %v1987 = vpop.f32.mrf.mxu0
        %v1988 = vadd.f32 0.0, %v1987
        %1989 = vdwg.mxu0
        %1990 = vmatpush.bf16.msra.mxu0 %v1923
        %1991 = vmatpush.bf16.msra.mxu0 %v1921
        %1992 = vmatpush.bf16.msra.mxu0 %v1919
        %1993 = vmatpush.bf16.msra.mxu0 %v1917
        %1994 = vmatpush.bf16.msra.mxu0 %v1915
        %1995 = vmatpush.bf16.msra.mxu0 %v1913
        %1996 = vmatpush.bf16.msra.mxu0 %v1911
        %1997 = vmatpush.bf16.msra.mxu0 %v1909
        %1998 = vmatmul.bf16.gmra.mxu0 %v1777
        %v1999 = vpop.f32.mrf.mxu0
        %v2000 = vadd.f32 %v1981, %v1999
        %v2001 = vpop.f32.mrf.mxu0
        %v2002 = vadd.f32 %v1983, %v2001
        %2003 = vmatmul.bf16.gmra.mxu0 %v1776
        %v2004 = vpop.f32.mrf.mxu0
        %v2005 = vadd.f32 %v1986, %v2004
        %v2006 = vpop.f32.mrf.mxu0
        %v2007 = vadd.f32 %v1988, %v2006
        %2008 = vdwg.mxu0
        %2009 = vmatpush.bf16.msra.mxu0 0
        %2010 = vmatpush.bf16.msra.mxu0 0
        %2011 = vmatpush.bf16.msra.mxu0 0
        %2012 = vmatpush.bf16.msra.mxu0 0
        %2013 = vmatpush.bf16.msra.mxu0 0
        %2014 = vmatpush.bf16.msra.mxu0 0
        %2015 = vmatpush.bf16.msra.mxu0 %v1927
        %2016 = vmatpush.bf16.msra.mxu0 %v1925
        %2017 = vmatmul.bf16.gmra.mxu0 %v1966
        %v2018 = vpop.f32.mrf.mxu0
        %v2019 = vadd.f32 %v2000, %v2018
        %v2020 = vpop.f32.mrf.mxu0
        %v2021 = vadd.f32 %v2002, %v2020
        %2022 = vmatmul.bf16.gmra.mxu0 %v1969
        %v2023 = vpop.f32.mrf.mxu0
        %v2024 = vadd.f32 %v2005, %v2023
        %v2025 = vpop.f32.mrf.mxu0
        %v2026 = vadd.f32 %v2007, %v2025
        %2027 = vdwg.mxu0
        %2028 = vmatpush.bf16.msra.mxu0 %v1908
        %2029 = vmatpush.bf16.msra.mxu0 %v1906
        %2030 = vmatpush.bf16.msra.mxu0 %v1904
        %2031 = vmatpush.bf16.msra.mxu0 %v1902
        %2032 = vmatpush.bf16.msra.mxu0 %v1900
        %2033 = vmatpush.bf16.msra.mxu0 %v1898
        %2034 = vmatpush.bf16.msra.mxu0 %v1896
        %2035 = vmatpush.bf16.msra.mxu0 %v1894
        %2036 = vmatmul.bf16.gmra.mxu0 %v1774
        %v2037 = vpop.f32.mrf.mxu0
        %v2038 = vadd.f32 0.0, %v2037
        %v2039 = vpop.f32.mrf.mxu0
        %v2040 = vadd.f32 0.0, %v2039
        %2041 = vmatmul.bf16.gmra.mxu0 %v1773
        %v2042 = vpop.f32.mrf.mxu0
        %v2043 = vadd.f32 0.0, %v2042
        %v2044 = vpop.f32.mrf.mxu0
        %v2045 = vadd.f32 0.0, %v2044
        %2046 = vdwg.mxu0
        %2047 = vmatpush.bf16.msra.mxu0 %v1924
        %2048 = vmatpush.bf16.msra.mxu0 %v1922
        %2049 = vmatpush.bf16.msra.mxu0 %v1920
        %2050 = vmatpush.bf16.msra.mxu0 %v1918
        %2051 = vmatpush.bf16.msra.mxu0 %v1916
        %2052 = vmatpush.bf16.msra.mxu0 %v1914
        %2053 = vmatpush.bf16.msra.mxu0 %v1912
        %2054 = vmatpush.bf16.msra.mxu0 %v1910
        %2055 = vmatmul.bf16.gmra.mxu0 %v1777
        %v2056 = vpop.f32.mrf.mxu0
        %v2057 = vadd.f32 %v2038, %v2056
        %v2058 = vpop.f32.mrf.mxu0
        %v2059 = vadd.f32 %v2040, %v2058
        %2060 = vmatmul.bf16.gmra.mxu0 %v1776
        %v2061 = vpop.f32.mrf.mxu0
        %v2062 = vadd.f32 %v2043, %v2061
        %v2063 = vpop.f32.mrf.mxu0
        %v2064 = vadd.f32 %v2045, %v2063
        %2065 = vdwg.mxu0
        %2066 = vmatpush.bf16.msra.mxu0 0
        %2067 = vmatpush.bf16.msra.mxu0 0
        %2068 = vmatpush.bf16.msra.mxu0 0
        %2069 = vmatpush.bf16.msra.mxu0 0
        %2070 = vmatpush.bf16.msra.mxu0 0
        %2071 = vmatpush.bf16.msra.mxu0 0
        %2072 = vmatpush.bf16.msra.mxu0 %v1928
        %2073 = vmatpush.bf16.msra.mxu0 %v1926
        %2074 = vmatmul.bf16.gmra.mxu0 %v1966
        %v2075 = vpop.f32.mrf.mxu0
        %v2076 = vadd.f32 %v2057, %v2075
        %v2077 = vpop.f32.mrf.mxu0
        %v2078 = vadd.f32 %v2059, %v2077
        %2079 = vmatmul.bf16.gmra.mxu0 %v1969
        %v2080 = vpop.f32.mrf.mxu0
        %v2081 = vadd.f32 %v2062, %v2080
        %v2082 = vpop.f32.mrf.mxu0
        %v2083 = vadd.f32 %v2064, %v2082
        %2084 = vdwg.mxu0
        %v2121 = vunpack.c.l.b16 %v1680
        %v2122 = vunpack.c.h.b16 %v1680
        %v2123 = vunpack.c.l.b16 %v1681
        %v2124 = vunpack.c.h.b16 %v1681
        %v2125 = vunpack.c.l.b16 %v1682
        %v2126 = vunpack.c.h.b16 %v1682
        %v2127 = vunpack.c.l.b16 %v1683
        %v2128 = vunpack.c.h.b16 %v1683
        %v2129 = vunpack.c.l.b16 %v1684
        %v2130 = vunpack.c.h.b16 %v1684
        %v2131 = vunpack.c.l.b16 %v1685
        %v2132 = vunpack.c.h.b16 %v1685
        %v2133 = vunpack.c.l.b16 %v1686
        %v2134 = vunpack.c.h.b16 %v1686
        %v2135 = vunpack.c.l.b16 %v1687
        %v2136 = vunpack.c.h.b16 %v1687
        %v2137 = vunpack.c.l.b16 %v1688
        %v2138 = vunpack.c.h.b16 %v1688
        %v2139 = vunpack.c.l.b16 %v1689
        %v2140 = vunpack.c.h.b16 %v1689
        %v2141 = vunpack.c.l.b16 %v1690
        %v2142 = vunpack.c.h.b16 %v1690
        %v2143 = vunpack.c.l.b16 %v1691
        %v2144 = vunpack.c.h.b16 %v1691
        %v2145 = vunpack.c.l.b16 %v1692
        %v2146 = vunpack.c.h.b16 %v1692
        %v2147 = vunpack.c.l.b16 %v1693
        %v2148 = vunpack.c.h.b16 %v1693
        %v2149 = vunpack.c.l.b16 %v1694
        %v2150 = vunpack.c.h.b16 %v1694
        %v2151 = vunpack.c.l.b16 %v1695
        %v2152 = vunpack.c.h.b16 %v1695
        %v2153 = vunpack.c.l.b16 %v1696
        %v2154 = vunpack.c.h.b16 %v1696
        %v2155 = vunpack.c.l.b16 %v1697
        %v2156 = vunpack.c.h.b16 %v1697
        %v2157 = vunpack.c.l.b16 %v1698
        %v2158 = vunpack.c.h.b16 %v1698
        %v2159 = vunpack.c.l.b16 %v1699
        %v2160 = vunpack.c.h.b16 %v1699
        %v2161 = vunpack.c.l.b16 %v1700
        %v2162 = vunpack.c.h.b16 %v1700
        %v2163 = vunpack.c.l.b16 %v1701
        %v2164 = vunpack.c.h.b16 %v1701
        %v2165 = vunpack.c.l.b16 %v1702
        %v2166 = vunpack.c.h.b16 %v1702
        %v2167 = vunpack.c.l.b16 %v1703
        %v2168 = vunpack.c.h.b16 %v1703
        %v2169 = vunpack.c.l.b16 %v1704
        %v2170 = vunpack.c.h.b16 %v1704
        %v2171 = vunpack.c.l.b16 %v1705
        %v2172 = vunpack.c.h.b16 %v1705
        %v2173 = vunpack.c.l.b16 %v1706
        %v2174 = vunpack.c.h.b16 %v1706
        %v2175 = vunpack.c.l.b16 %v1707
        %v2176 = vunpack.c.h.b16 %v1707
        %v2177 = vunpack.c.l.b16 %v1708
        %v2178 = vunpack.c.h.b16 %v1708
        %v2179 = vunpack.c.l.b16 %v1709
        %v2180 = vunpack.c.h.b16 %v1709
        %v2181 = vunpack.c.l.b16 %v1710
        %v2182 = vunpack.c.h.b16 %v1710
        %v2183 = vunpack.c.l.b16 %v1711
        %v2184 = vunpack.c.h.b16 %v1711
        %v2185 = vunpack.c.l.b16 %v1712
        %v2186 = vunpack.c.h.b16 %v1712
        %v2187 = vunpack.c.l.b16 %v1713
        %v2188 = vunpack.c.h.b16 %v1713
        %v2189 = vunpack.c.l.b16 %v1714
        %v2190 = vunpack.c.h.b16 %v1714
        %v2191 = vunpack.c.l.b16 %v1715
        %v2192 = vunpack.c.h.b16 %v1715
        %v2193 = vpack.c.b16 %v2123, %v2121
        %v2194 = vpack.c.b16 %v2124, %v2122
        %v2195 = vpack.c.b16 %v2127, %v2125
        %v2196 = vpack.c.b16 %v2128, %v2126
        %v2197 = vpack.c.b16 %v2131, %v2129
        %v2198 = vpack.c.b16 %v2132, %v2130
        %v2199 = vpack.c.b16 %v2135, %v2133
        %v2200 = vpack.c.b16 %v2136, %v2134
        %v2201 = vpack.c.b16 %v2139, %v2137
        %v2202 = vpack.c.b16 %v2140, %v2138
        %v2203 = vpack.c.b16 %v2143, %v2141
        %v2204 = vpack.c.b16 %v2144, %v2142
        %v2205 = vpack.c.b16 %v2147, %v2145
        %v2206 = vpack.c.b16 %v2148, %v2146
        %v2207 = vpack.c.b16 %v2151, %v2149
        %v2208 = vpack.c.b16 %v2152, %v2150
        %v2209 = vpack.c.b16 %v2155, %v2153
        %v2210 = vpack.c.b16 %v2156, %v2154
        %v2211 = vpack.c.b16 %v2159, %v2157
        %v2212 = vpack.c.b16 %v2160, %v2158
        %v2213 = vpack.c.b16 %v2163, %v2161
        %v2214 = vpack.c.b16 %v2164, %v2162
        %v2215 = vpack.c.b16 %v2167, %v2165
        %v2216 = vpack.c.b16 %v2168, %v2166
        %v2217 = vpack.c.b16 %v2171, %v2169
        %v2218 = vpack.c.b16 %v2172, %v2170
        %v2219 = vpack.c.b16 %v2175, %v2173
        %v2220 = vpack.c.b16 %v2176, %v2174
        %v2221 = vpack.c.b16 %v2179, %v2177
        %v2222 = vpack.c.b16 %v2180, %v2178
        %v2223 = vpack.c.b16 %v2183, %v2181
        %v2224 = vpack.c.b16 %v2184, %v2182
        %v2225 = vpack.c.b16 %v2187, %v2185
        %v2226 = vpack.c.b16 %v2188, %v2186
        %v2227 = vpack.c.b16 %v2191, %v2189
        %v2228 = vpack.c.b16 %v2192, %v2190
        %v2266 = vsel %vm1647, %v1676, 0
        %v2269 = vsel %vm1647, %v1679, 0
        %2271 = vmatpush.bf16.msra.mxu0 %v2207
        %2272 = vmatpush.bf16.msra.mxu0 %v2205
        %2273 = vmatpush.bf16.msra.mxu0 %v2203
        %2274 = vmatpush.bf16.msra.mxu0 %v2201
        %2275 = vmatpush.bf16.msra.mxu0 %v2199
        %2276 = vmatpush.bf16.msra.mxu0 %v2197
        %2277 = vmatpush.bf16.msra.mxu0 %v2195
        %2278 = vmatpush.bf16.msra.mxu0 %v2193
        %2279 = vmatmul.bf16.gmra.mxu0 %v1674
        %v2280 = vpop.f32.mrf.mxu0
        %v2281 = vadd.f32 %v2019, %v2280
        %v2282 = vpop.f32.mrf.mxu0
        %v2283 = vadd.f32 %v2021, %v2282
        %2284 = vmatmul.bf16.gmra.mxu0 %v1677
        %v2285 = vpop.f32.mrf.mxu0
        %v2286 = vadd.f32 %v2024, %v2285
        %v2287 = vpop.f32.mrf.mxu0
        %v2288 = vadd.f32 %v2026, %v2287
        %2289 = vdwg.mxu0
        %2290 = vmatpush.bf16.msra.mxu0 %v2223
        %2291 = vmatpush.bf16.msra.mxu0 %v2221
        %2292 = vmatpush.bf16.msra.mxu0 %v2219
        %2293 = vmatpush.bf16.msra.mxu0 %v2217
        %2294 = vmatpush.bf16.msra.mxu0 %v2215
        %2295 = vmatpush.bf16.msra.mxu0 %v2213
        %2296 = vmatpush.bf16.msra.mxu0 %v2211
        %2297 = vmatpush.bf16.msra.mxu0 %v2209
        %2298 = vmatmul.bf16.gmra.mxu0 %v1675
        %v2299 = vpop.f32.mrf.mxu0
        %v2300 = vadd.f32 %v2281, %v2299
        %v2301 = vpop.f32.mrf.mxu0
        %v2302 = vadd.f32 %v2283, %v2301
        %2303 = vmatmul.bf16.gmra.mxu0 %v1678
        %v2304 = vpop.f32.mrf.mxu0
        %v2305 = vadd.f32 %v2286, %v2304
        %v2306 = vpop.f32.mrf.mxu0
        %v2307 = vadd.f32 %v2288, %v2306
        %2308 = vdwg.mxu0
        %2309 = vmatpush.bf16.msra.mxu0 0
        %2310 = vmatpush.bf16.msra.mxu0 0
        %2311 = vmatpush.bf16.msra.mxu0 0
        %2312 = vmatpush.bf16.msra.mxu0 0
        %2313 = vmatpush.bf16.msra.mxu0 0
        %2314 = vmatpush.bf16.msra.mxu0 0
        %2315 = vmatpush.bf16.msra.mxu0 %v2227
        %2316 = vmatpush.bf16.msra.mxu0 %v2225
        %2317 = vmatmul.bf16.gmra.mxu0 %v2266
        %v2318 = vpop.f32.mrf.mxu0
        %v2319 = vadd.f32 %v2300, %v2318
        %v2320 = vpop.f32.mrf.mxu0
        %v2321 = vadd.f32 %v2302, %v2320
        %2322 = vmatmul.bf16.gmra.mxu0 %v2269
        %v2323 = vpop.f32.mrf.mxu0
        %v2324 = vadd.f32 %v2305, %v2323
        %v2325 = vpop.f32.mrf.mxu0
        %v2326 = vadd.f32 %v2307, %v2325
        %2327 = vdwg.mxu0
        %2328 = vmatpush.bf16.msra.mxu0 %v2208
        %2329 = vmatpush.bf16.msra.mxu0 %v2206
        %2330 = vmatpush.bf16.msra.mxu0 %v2204
        %2331 = vmatpush.bf16.msra.mxu0 %v2202
        %2332 = vmatpush.bf16.msra.mxu0 %v2200
        %2333 = vmatpush.bf16.msra.mxu0 %v2198
        %2334 = vmatpush.bf16.msra.mxu0 %v2196
        %2335 = vmatpush.bf16.msra.mxu0 %v2194
        %2336 = vmatmul.bf16.gmra.mxu0 %v1674
        %v2337 = vpop.f32.mrf.mxu0
        %v2338 = vadd.f32 %v2076, %v2337
        %v2339 = vpop.f32.mrf.mxu0
        %v2340 = vadd.f32 %v2078, %v2339
        %2341 = vmatmul.bf16.gmra.mxu0 %v1677
        %v2342 = vpop.f32.mrf.mxu0
        %v2343 = vadd.f32 %v2081, %v2342
        %v2344 = vpop.f32.mrf.mxu0
        %v2345 = vadd.f32 %v2083, %v2344
        %2346 = vdwg.mxu0
        %2347 = vmatpush.bf16.msra.mxu0 %v2224
        %2348 = vmatpush.bf16.msra.mxu0 %v2222
        %2349 = vmatpush.bf16.msra.mxu0 %v2220
        %2350 = vmatpush.bf16.msra.mxu0 %v2218
        %2351 = vmatpush.bf16.msra.mxu0 %v2216
        %2352 = vmatpush.bf16.msra.mxu0 %v2214
        %2353 = vmatpush.bf16.msra.mxu0 %v2212
        %2354 = vmatpush.bf16.msra.mxu0 %v2210
        %2355 = vmatmul.bf16.gmra.mxu0 %v1675
        %v2356 = vpop.f32.mrf.mxu0
        %v2357 = vadd.f32 %v2338, %v2356
        %v2358 = vpop.f32.mrf.mxu0
        %v2359 = vadd.f32 %v2340, %v2358
        %2360 = vmatmul.bf16.gmra.mxu0 %v1678
        %v2361 = vpop.f32.mrf.mxu0
        %v2362 = vadd.f32 %v2343, %v2361
        %v2363 = vpop.f32.mrf.mxu0
        %v2364 = vadd.f32 %v2345, %v2363
        %2365 = vdwg.mxu0
        %2366 = vmatpush.bf16.msra.mxu0 0
        %2367 = vmatpush.bf16.msra.mxu0 0
        %2368 = vmatpush.bf16.msra.mxu0 0
        %2369 = vmatpush.bf16.msra.mxu0 0
        %2370 = vmatpush.bf16.msra.mxu0 0
        %2371 = vmatpush.bf16.msra.mxu0 0
        %2372 = vmatpush.bf16.msra.mxu0 %v2228
        %2373 = vmatpush.bf16.msra.mxu0 %v2226
        %2374 = vmatmul.bf16.gmra.mxu0 %v2266
        %v2375 = vpop.f32.mrf.mxu0
        %v2376 = vadd.f32 %v2357, %v2375
        %v2377 = vpop.f32.mrf.mxu0
        %v2378 = vadd.f32 %v2359, %v2377
        %2379 = vmatmul.bf16.gmra.mxu0 %v2269
        %v2380 = vpop.f32.mrf.mxu0
        %v2381 = vadd.f32 %v2362, %v2380
        %v2382 = vpop.f32.mrf.mxu0
        %v2383 = vadd.f32 %v2364, %v2382
        %2384 = vdwg.mxu0
        %v2385 = vld [vmem:[#allocation2] sm:$0xf0]
        %v2386 = vld [vmem:[#allocation2 + $0x8] sm:$0xf0]
        %v2387 = vld [vmem:[#allocation2 + $0x10] sm:$0xf0]
        %v2388 = vld [vmem:[#allocation2 + $0x48] sm:$0x1f]
        %v2389 = vld [vmem:[#allocation2 + $0x50] sm:$0x1f]
        %v2390 = vld [vmem:[#allocation2 + $0x58] sm:$0x1f]
        %v2391 = vpack.c.bf16 %v1665, %v2385
        %v2392 = vpack.c.bf16 %v1666, %v2386
        %v2393 = vpack.c.bf16 %v1667, %v2387
        %v2394 = vpack.c.bf16 %v2388, %v1668
        %v2395 = vpack.c.bf16 %v2389, %v1669
        %v2396 = vpack.c.bf16 %v2390, %v1670
        %s2397 = scalar_lea.vmem %s3, 576
        %v2398 = vld [vmem:[%s2397] sm:$0xff]
        %v2399 = vld [vmem:[%s2397 + $0x8] sm:$0xff]
        %v2400 = vld [vmem:[%s2397 + $0x10] sm:$0xff]
        %v2401 = vld [vmem:[%s2397 + $0x18] sm:$0xff]
        %v2402 = vld [vmem:[%s2397 + $0x20] sm:$0xff]
        %v2403 = vld [vmem:[%s2397 + $0x28] sm:$0xff]
        %v2404 = vld [vmem:[%s2397 + $0x30] sm:$0xff]
        %v2405 = vld [vmem:[%s2397 + $0x38] sm:$0xff]
        %v2406 = vld [vmem:[%s2397 + $0x40] sm:$0xff]
        %v2407 = vld [vmem:[%s2397 + $0x48] sm:$0xff]
        %v2408 = vld [vmem:[%s2397 + $0x50] sm:$0xff]
        %v2409 = vld [vmem:[%s2397 + $0x58] sm:$0xff]
        %v2410 = vld [vmem:[%s2397 + $0x60] sm:$0xff]
        %v2411 = vld [vmem:[%s2397 + $0x68] sm:$0xff]
        %v2412 = vld [vmem:[%s2397 + $0x70] sm:$0xff]
        %v2413 = vld [vmem:[%s2397 + $0x78] sm:$0xff]
        %v2414 = vld [vmem:[%s2397 + $0x80] sm:$0xff]
        %v2415 = vld [vmem:[%s2397 + $0x88] sm:$0xff]
        %v2416 = vld [vmem:[%s2397 + $0x90] sm:$0xff]
        %v2417 = vld [vmem:[%s2397 + $0x98] sm:$0xff]
        %v2418 = vld [vmem:[%s2397 + $0xa0] sm:$0xff]
        %v2419 = vld [vmem:[%s2397 + $0xa8] sm:$0xff]
        %v2420 = vld [vmem:[%s2397 + $0xb0] sm:$0xff]
        %v2421 = vld [vmem:[%s2397 + $0xb8] sm:$0xff]
        %v2422 = vld [vmem:[%s2397 + $0xc0] sm:$0xff]
        %v2423 = vld [vmem:[%s2397 + $0xc8] sm:$0xff]
        %v2424 = vld [vmem:[%s2397 + $0xd0] sm:$0xff]
        %v2425 = vld [vmem:[%s2397 + $0xd8] sm:$0xff]
        %v2426 = vld [vmem:[%s2397 + $0xe0] sm:$0xff]
        %v2427 = vld [vmem:[%s2397 + $0xe8] sm:$0xff]
        %v2428 = vld [vmem:[%s2397 + $0xf0] sm:$0xff]
        %v2429 = vld [vmem:[%s2397 + $0xf8] sm:$0xff]
        %v2430 = vld [vmem:[%s2397 + $0x100] sm:$0xff]
        %v2431 = vld [vmem:[%s2397 + $0x108] sm:$0xff]
        %v2432 = vld [vmem:[%s2397 + $0x110] sm:$0xff]
        %v2433 = vld [vmem:[%s2397 + $0x118] sm:$0xff]
        %vm2440 = vcmask 1045504
        %v2441 = vrot.slane %v2391, 2
        %v2442 = vrot.slane %v2394, 2
        %v2443 = vsel %vm2440, %v2441, %v2442
        %v2444 = vrot.slane %v2392, 2
        %v2445 = vrot.slane %v2395, 2
        %v2446 = vsel %vm2440, %v2444, %v2445
        %v2447 = vrot.slane %v2393, 2
        %v2448 = vrot.slane %v2396, 2
        %v2449 = vsel %vm2440, %v2447, %v2448
        %v2490 = vunpack.c.l.b16 %v2398
        %v2491 = vunpack.c.h.b16 %v2398
        %v2492 = vunpack.c.l.b16 %v2399
        %v2493 = vunpack.c.h.b16 %v2399
        %v2494 = vunpack.c.l.b16 %v2400
        %v2495 = vunpack.c.h.b16 %v2400
        %v2496 = vunpack.c.l.b16 %v2401
        %v2497 = vunpack.c.h.b16 %v2401
        %v2498 = vunpack.c.l.b16 %v2402
        %v2499 = vunpack.c.h.b16 %v2402
        %v2500 = vunpack.c.l.b16 %v2403
        %v2501 = vunpack.c.h.b16 %v2403
        %v2502 = vunpack.c.l.b16 %v2404
        %v2503 = vunpack.c.h.b16 %v2404
        %v2504 = vunpack.c.l.b16 %v2405
        %v2505 = vunpack.c.h.b16 %v2405
        %v2506 = vunpack.c.l.b16 %v2406
        %v2507 = vunpack.c.h.b16 %v2406
        %v2508 = vunpack.c.l.b16 %v2407
        %v2509 = vunpack.c.h.b16 %v2407
        %v2510 = vunpack.c.l.b16 %v2408
        %v2511 = vunpack.c.h.b16 %v2408
        %v2512 = vunpack.c.l.b16 %v2409
        %v2513 = vunpack.c.h.b16 %v2409
        %v2514 = vunpack.c.l.b16 %v2410
        %v2515 = vunpack.c.h.b16 %v2410
        %v2516 = vunpack.c.l.b16 %v2411
        %v2517 = vunpack.c.h.b16 %v2411
        %v2518 = vunpack.c.l.b16 %v2412
        %v2519 = vunpack.c.h.b16 %v2412
        %v2520 = vunpack.c.l.b16 %v2413
        %v2521 = vunpack.c.h.b16 %v2413
        %v2522 = vunpack.c.l.b16 %v2414
        %v2523 = vunpack.c.h.b16 %v2414
        %v2524 = vunpack.c.l.b16 %v2415
        %v2525 = vunpack.c.h.b16 %v2415
        %v2526 = vunpack.c.l.b16 %v2416
        %v2527 = vunpack.c.h.b16 %v2416
        %v2528 = vunpack.c.l.b16 %v2417
        %v2529 = vunpack.c.h.b16 %v2417
        %v2530 = vunpack.c.l.b16 %v2418
        %v2531 = vunpack.c.h.b16 %v2418
        %v2532 = vunpack.c.l.b16 %v2419
        %v2533 = vunpack.c.h.b16 %v2419
        %v2534 = vunpack.c.l.b16 %v2420
        %v2535 = vunpack.c.h.b16 %v2420
        %v2536 = vunpack.c.l.b16 %v2421
        %v2537 = vunpack.c.h.b16 %v2421
        %v2538 = vunpack.c.l.b16 %v2422
        %v2539 = vunpack.c.h.b16 %v2422
        %v2540 = vunpack.c.l.b16 %v2423
        %v2541 = vunpack.c.h.b16 %v2423
        %v2542 = vunpack.c.l.b16 %v2424
        %v2543 = vunpack.c.h.b16 %v2424
        %v2544 = vunpack.c.l.b16 %v2425
        %v2545 = vunpack.c.h.b16 %v2425
        %v2546 = vunpack.c.l.b16 %v2426
        %v2547 = vunpack.c.h.b16 %v2426
        %v2548 = vunpack.c.l.b16 %v2427
        %v2549 = vunpack.c.h.b16 %v2427
        %v2550 = vunpack.c.l.b16 %v2428
        %v2551 = vunpack.c.h.b16 %v2428
        %v2552 = vunpack.c.l.b16 %v2429
        %v2553 = vunpack.c.h.b16 %v2429
        %v2554 = vunpack.c.l.b16 %v2430
        %v2555 = vunpack.c.h.b16 %v2430
        %v2556 = vunpack.c.l.b16 %v2431
        %v2557 = vunpack.c.h.b16 %v2431
        %v2558 = vunpack.c.l.b16 %v2432
        %v2559 = vunpack.c.h.b16 %v2432
        %v2560 = vunpack.c.l.b16 %v2433
        %v2561 = vunpack.c.h.b16 %v2433
        %v2562 = vpack.c.b16 %v2492, %v2490
        %v2563 = vpack.c.b16 %v2493, %v2491
        %v2564 = vpack.c.b16 %v2496, %v2494
        %v2565 = vpack.c.b16 %v2497, %v2495
        %v2566 = vpack.c.b16 %v2500, %v2498
        %v2567 = vpack.c.b16 %v2501, %v2499
        %v2568 = vpack.c.b16 %v2504, %v2502
        %v2569 = vpack.c.b16 %v2505, %v2503
        %v2570 = vpack.c.b16 %v2508, %v2506
        %v2571 = vpack.c.b16 %v2509, %v2507
        %v2572 = vpack.c.b16 %v2512, %v2510
        %v2573 = vpack.c.b16 %v2513, %v2511
        %v2574 = vpack.c.b16 %v2516, %v2514
        %v2575 = vpack.c.b16 %v2517, %v2515
        %v2576 = vpack.c.b16 %v2520, %v2518
        %v2577 = vpack.c.b16 %v2521, %v2519
        %v2578 = vpack.c.b16 %v2524, %v2522
        %v2579 = vpack.c.b16 %v2525, %v2523
        %v2580 = vpack.c.b16 %v2528, %v2526
        %v2581 = vpack.c.b16 %v2529, %v2527
        %v2582 = vpack.c.b16 %v2532, %v2530
        %v2583 = vpack.c.b16 %v2533, %v2531
        %v2584 = vpack.c.b16 %v2536, %v2534
        %v2585 = vpack.c.b16 %v2537, %v2535
        %v2586 = vpack.c.b16 %v2540, %v2538
        %v2587 = vpack.c.b16 %v2541, %v2539
        %v2588 = vpack.c.b16 %v2544, %v2542
        %v2589 = vpack.c.b16 %v2545, %v2543
        %v2590 = vpack.c.b16 %v2548, %v2546
        %v2591 = vpack.c.b16 %v2549, %v2547
        %v2592 = vpack.c.b16 %v2552, %v2550
        %v2593 = vpack.c.b16 %v2553, %v2551
        %v2594 = vpack.c.b16 %v2556, %v2554
        %v2595 = vpack.c.b16 %v2557, %v2555
        %v2596 = vpack.c.b16 %v2560, %v2558
        %v2597 = vpack.c.b16 %v2561, %v2559
        %v2635 = vsel %vm1647, %v2449, 0
        %v2638 = vsel %vm1647, %v2448, 0
        %2640 = vmatpush.bf16.msra.mxu0 %v2576
        %2641 = vmatpush.bf16.msra.mxu0 %v2574
        %2642 = vmatpush.bf16.msra.mxu0 %v2572
        %2643 = vmatpush.bf16.msra.mxu0 %v2570
        %2644 = vmatpush.bf16.msra.mxu0 %v2568
        %2645 = vmatpush.bf16.msra.mxu0 %v2566
        %2646 = vmatpush.bf16.msra.mxu0 %v2564
        %2647 = vmatpush.bf16.msra.mxu0 %v2562
        %2648 = vmatmul.bf16.gmra.mxu0 %v2443
        %v2649 = vpop.f32.mrf.mxu0
        %v2650 = vadd.f32 0.0, %v2649
        %v2651 = vpop.f32.mrf.mxu0
        %v2652 = vadd.f32 0.0, %v2651
        %2653 = vmatmul.bf16.gmra.mxu0 %v2442
        %v2654 = vpop.f32.mrf.mxu0
        %v2655 = vadd.f32 0.0, %v2654
        %v2656 = vpop.f32.mrf.mxu0
        %v2657 = vadd.f32 0.0, %v2656
        %2658 = vdwg.mxu0
        %2659 = vmatpush.bf16.msra.mxu0 %v2592
        %2660 = vmatpush.bf16.msra.mxu0 %v2590
        %2661 = vmatpush.bf16.msra.mxu0 %v2588
        %2662 = vmatpush.bf16.msra.mxu0 %v2586
        %2663 = vmatpush.bf16.msra.mxu0 %v2584
        %2664 = vmatpush.bf16.msra.mxu0 %v2582
        %2665 = vmatpush.bf16.msra.mxu0 %v2580
        %2666 = vmatpush.bf16.msra.mxu0 %v2578
        %2667 = vmatmul.bf16.gmra.mxu0 %v2446
        %v2668 = vpop.f32.mrf.mxu0
        %v2669 = vadd.f32 %v2650, %v2668
        %v2670 = vpop.f32.mrf.mxu0
        %v2671 = vadd.f32 %v2652, %v2670
        %2672 = vmatmul.bf16.gmra.mxu0 %v2445
        %v2673 = vpop.f32.mrf.mxu0
        %v2674 = vadd.f32 %v2655, %v2673
        %v2675 = vpop.f32.mrf.mxu0
        %v2676 = vadd.f32 %v2657, %v2675
        %2677 = vdwg.mxu0
        %2678 = vmatpush.bf16.msra.mxu0 0
        %2679 = vmatpush.bf16.msra.mxu0 0
        %2680 = vmatpush.bf16.msra.mxu0 0
        %2681 = vmatpush.bf16.msra.mxu0 0
        %2682 = vmatpush.bf16.msra.mxu0 0
        %2683 = vmatpush.bf16.msra.mxu0 0
        %2684 = vmatpush.bf16.msra.mxu0 %v2596
        %2685 = vmatpush.bf16.msra.mxu0 %v2594
        %2686 = vmatmul.bf16.gmra.mxu0 %v2635
        %v2687 = vpop.f32.mrf.mxu0
        %v2688 = vadd.f32 %v2669, %v2687
        %v2689 = vpop.f32.mrf.mxu0
        %v2690 = vadd.f32 %v2671, %v2689
        %2691 = vmatmul.bf16.gmra.mxu0 %v2638
        %v2692 = vpop.f32.mrf.mxu0
        %v2693 = vadd.f32 %v2674, %v2692
        %v2694 = vpop.f32.mrf.mxu0
        %v2695 = vadd.f32 %v2676, %v2694
        %2696 = vdwg.mxu0
        %2697 = vmatpush.bf16.msra.mxu0 %v2577
        %2698 = vmatpush.bf16.msra.mxu0 %v2575
        %2699 = vmatpush.bf16.msra.mxu0 %v2573
        %2700 = vmatpush.bf16.msra.mxu0 %v2571
        %2701 = vmatpush.bf16.msra.mxu0 %v2569
        %2702 = vmatpush.bf16.msra.mxu0 %v2567
        %2703 = vmatpush.bf16.msra.mxu0 %v2565
        %2704 = vmatpush.bf16.msra.mxu0 %v2563
        %2705 = vmatmul.bf16.gmra.mxu0 %v2443
        %v2706 = vpop.f32.mrf.mxu0
        %v2707 = vadd.f32 0.0, %v2706
        %v2708 = vpop.f32.mrf.mxu0
        %v2709 = vadd.f32 0.0, %v2708
        %2710 = vmatmul.bf16.gmra.mxu0 %v2442
        %v2711 = vpop.f32.mrf.mxu0
        %v2712 = vadd.f32 0.0, %v2711
        %v2713 = vpop.f32.mrf.mxu0
        %v2714 = vadd.f32 0.0, %v2713
        %2715 = vdwg.mxu0
        %2716 = vmatpush.bf16.msra.mxu0 %v2593
        %2717 = vmatpush.bf16.msra.mxu0 %v2591
        %2718 = vmatpush.bf16.msra.mxu0 %v2589
        %2719 = vmatpush.bf16.msra.mxu0 %v2587
        %2720 = vmatpush.bf16.msra.mxu0 %v2585
        %2721 = vmatpush.bf16.msra.mxu0 %v2583
        %2722 = vmatpush.bf16.msra.mxu0 %v2581
        %2723 = vmatpush.bf16.msra.mxu0 %v2579
        %2724 = vmatmul.bf16.gmra.mxu0 %v2446
        %v2725 = vpop.f32.mrf.mxu0
        %v2726 = vadd.f32 %v2707, %v2725
        %v2727 = vpop.f32.mrf.mxu0
        %v2728 = vadd.f32 %v2709, %v2727
        %2729 = vmatmul.bf16.gmra.mxu0 %v2445
        %v2730 = vpop.f32.mrf.mxu0
        %v2731 = vadd.f32 %v2712, %v2730
        %v2732 = vpop.f32.mrf.mxu0
        %v2733 = vadd.f32 %v2714, %v2732
        %2734 = vdwg.mxu0
        %2735 = vmatpush.bf16.msra.mxu0 0
        %2736 = vmatpush.bf16.msra.mxu0 0
        %2737 = vmatpush.bf16.msra.mxu0 0
        %2738 = vmatpush.bf16.msra.mxu0 0
        %2739 = vmatpush.bf16.msra.mxu0 0
        %2740 = vmatpush.bf16.msra.mxu0 0
        %2741 = vmatpush.bf16.msra.mxu0 %v2597
        %2742 = vmatpush.bf16.msra.mxu0 %v2595
        %2743 = vmatmul.bf16.gmra.mxu0 %v2635
        %v2744 = vpop.f32.mrf.mxu0
        %v2745 = vadd.f32 %v2726, %v2744
        %v2746 = vpop.f32.mrf.mxu0
        %v2747 = vadd.f32 %v2728, %v2746
        %2748 = vmatmul.bf16.gmra.mxu0 %v2638
        %v2749 = vpop.f32.mrf.mxu0
        %v2750 = vadd.f32 %v2731, %v2749
        %v2751 = vpop.f32.mrf.mxu0
        %v2752 = vadd.f32 %v2733, %v2751
        %2753 = vdwg.mxu0
        %v2754 = vadd.f32 %v2319, %v2688
        %v2755 = vadd.f32 %v2376, %v2745
        %v2756 = vadd.f32 %v2321, %v2690
        %v2757 = vadd.f32 %v2378, %v2747
        %v2758 = vadd.f32 %v2324, %v2693
        %v2759 = vadd.f32 %v2381, %v2750
        %v2760 = vadd.f32 %v2326, %v2695
        %v2761 = vadd.f32 %v2383, %v2752
        %v2762 = vld [vmem:[#allocation2] sm:$0xc0]
        %v2763 = vld [vmem:[#allocation2 + $0x8] sm:$0xc0]
        %v2764 = vld [vmem:[#allocation2 + $0x10] sm:$0xc0]
        %v2765 = vld [vmem:[#allocation2 + $0x48] sm:$0x7f]
        %v2766 = vld [vmem:[#allocation2 + $0x50] sm:$0x7f]
        %v2767 = vld [vmem:[#allocation2 + $0x58] sm:$0x7f]
        %v2768 = vpack.c.bf16 %v1665, %v2762
        %v2769 = vpack.c.bf16 %v1666, %v2763
        %v2770 = vpack.c.bf16 %v1667, %v2764
        %v2771 = vpack.c.bf16 %v2765, %v1668
        %v2772 = vpack.c.bf16 %v2766, %v1669
        %v2773 = vpack.c.bf16 %v2767, %v1670
        %s2774 = scalar_lea.vmem %s3, 864
        %v2775 = vld [vmem:[%s2774] sm:$0xff]
        %v2776 = vld [vmem:[%s2774 + $0x8] sm:$0xff]
        %v2777 = vld [vmem:[%s2774 + $0x10] sm:$0xff]
        %v2778 = vld [vmem:[%s2774 + $0x18] sm:$0xff]
        %v2779 = vld [vmem:[%s2774 + $0x20] sm:$0xff]
        %v2780 = vld [vmem:[%s2774 + $0x28] sm:$0xff]
        %v2781 = vld [vmem:[%s2774 + $0x30] sm:$0xff]
        %v2782 = vld [vmem:[%s2774 + $0x38] sm:$0xff]
        %v2783 = vld [vmem:[%s2774 + $0x40] sm:$0xff]
        %v2784 = vld [vmem:[%s2774 + $0x48] sm:$0xff]
        %v2785 = vld [vmem:[%s2774 + $0x50] sm:$0xff]
        %v2786 = vld [vmem:[%s2774 + $0x58] sm:$0xff]
        %v2787 = vld [vmem:[%s2774 + $0x60] sm:$0xff]
        %v2788 = vld [vmem:[%s2774 + $0x68] sm:$0xff]
        %v2789 = vld [vmem:[%s2774 + $0x70] sm:$0xff]
        %v2790 = vld [vmem:[%s2774 + $0x78] sm:$0xff]
        %v2791 = vld [vmem:[%s2774 + $0x80] sm:$0xff]
        %v2792 = vld [vmem:[%s2774 + $0x88] sm:$0xff]
        %v2793 = vld [vmem:[%s2774 + $0x90] sm:$0xff]
        %v2794 = vld [vmem:[%s2774 + $0x98] sm:$0xff]
        %v2795 = vld [vmem:[%s2774 + $0xa0] sm:$0xff]
        %v2796 = vld [vmem:[%s2774 + $0xa8] sm:$0xff]
        %v2797 = vld [vmem:[%s2774 + $0xb0] sm:$0xff]
        %v2798 = vld [vmem:[%s2774 + $0xb8] sm:$0xff]
        %v2799 = vld [vmem:[%s2774 + $0xc0] sm:$0xff]
        %v2800 = vld [vmem:[%s2774 + $0xc8] sm:$0xff]
        %v2801 = vld [vmem:[%s2774 + $0xd0] sm:$0xff]
        %v2802 = vld [vmem:[%s2774 + $0xd8] sm:$0xff]
        %v2803 = vld [vmem:[%s2774 + $0xe0] sm:$0xff]
        %v2804 = vld [vmem:[%s2774 + $0xe8] sm:$0xff]
        %v2805 = vld [vmem:[%s2774 + $0xf0] sm:$0xff]
        %v2806 = vld [vmem:[%s2774 + $0xf8] sm:$0xff]
        %v2807 = vld [vmem:[%s2774 + $0x100] sm:$0xff]
        %v2808 = vld [vmem:[%s2774 + $0x108] sm:$0xff]
        %v2809 = vld [vmem:[%s2774 + $0x110] sm:$0xff]
        %v2810 = vld [vmem:[%s2774 + $0x118] sm:$0xff]
        %vm2817 = vcmask 1044480
        %v2818 = vrot.slane %v2768, 3
        %v2819 = vrot.slane %v2771, 3
        %v2820 = vsel %vm2817, %v2818, %v2819
        %v2821 = vrot.slane %v2769, 3
        %v2822 = vrot.slane %v2772, 3
        %v2823 = vsel %vm2817, %v2821, %v2822
        %v2824 = vrot.slane %v2770, 3
        %v2825 = vrot.slane %v2773, 3
        %v2826 = vsel %vm2817, %v2824, %v2825
        %v2867 = vunpack.c.l.b16 %v2775
        %v2868 = vunpack.c.h.b16 %v2775
        %v2869 = vunpack.c.l.b16 %v2776
        %v2870 = vunpack.c.h.b16 %v2776
        %v2871 = vunpack.c.l.b16 %v2777
        %v2872 = vunpack.c.h.b16 %v2777
        %v2873 = vunpack.c.l.b16 %v2778
        %v2874 = vunpack.c.h.b16 %v2778
        %v2875 = vunpack.c.l.b16 %v2779
        %v2876 = vunpack.c.h.b16 %v2779
        %v2877 = vunpack.c.l.b16 %v2780
        %v2878 = vunpack.c.h.b16 %v2780
        %v2879 = vunpack.c.l.b16 %v2781
        %v2880 = vunpack.c.h.b16 %v2781
        %v2881 = vunpack.c.l.b16 %v2782
        %v2882 = vunpack.c.h.b16 %v2782
        %v2883 = vunpack.c.l.b16 %v2783
        %v2884 = vunpack.c.h.b16 %v2783
        %v2885 = vunpack.c.l.b16 %v2784
        %v2886 = vunpack.c.h.b16 %v2784
        %v2887 = vunpack.c.l.b16 %v2785
        %v2888 = vunpack.c.h.b16 %v2785
        %v2889 = vunpack.c.l.b16 %v2786
        %v2890 = vunpack.c.h.b16 %v2786
        %v2891 = vunpack.c.l.b16 %v2787
        %v2892 = vunpack.c.h.b16 %v2787
        %v2893 = vunpack.c.l.b16 %v2788
        %v2894 = vunpack.c.h.b16 %v2788
        %v2895 = vunpack.c.l.b16 %v2789
        %v2896 = vunpack.c.h.b16 %v2789
        %v2897 = vunpack.c.l.b16 %v2790
        %v2898 = vunpack.c.h.b16 %v2790
        %v2899 = vunpack.c.l.b16 %v2791
        %v2900 = vunpack.c.h.b16 %v2791
        %v2901 = vunpack.c.l.b16 %v2792
        %v2902 = vunpack.c.h.b16 %v2792
        %v2903 = vunpack.c.l.b16 %v2793
        %v2904 = vunpack.c.h.b16 %v2793
        %v2905 = vunpack.c.l.b16 %v2794
        %v2906 = vunpack.c.h.b16 %v2794
        %v2907 = vunpack.c.l.b16 %v2795
        %v2908 = vunpack.c.h.b16 %v2795
        %v2909 = vunpack.c.l.b16 %v2796
        %v2910 = vunpack.c.h.b16 %v2796
        %v2911 = vunpack.c.l.b16 %v2797
        %v2912 = vunpack.c.h.b16 %v2797
        %v2913 = vunpack.c.l.b16 %v2798
        %v2914 = vunpack.c.h.b16 %v2798
        %v2915 = vunpack.c.l.b16 %v2799
        %v2916 = vunpack.c.h.b16 %v2799
        %v2917 = vunpack.c.l.b16 %v2800
        %v2918 = vunpack.c.h.b16 %v2800
        %v2919 = vunpack.c.l.b16 %v2801
        %v2920 = vunpack.c.h.b16 %v2801
        %v2921 = vunpack.c.l.b16 %v2802
        %v2922 = vunpack.c.h.b16 %v2802
        %v2923 = vunpack.c.l.b16 %v2803
        %v2924 = vunpack.c.h.b16 %v2803
        %v2925 = vunpack.c.l.b16 %v2804
        %v2926 = vunpack.c.h.b16 %v2804
        %v2927 = vunpack.c.l.b16 %v2805
        %v2928 = vunpack.c.h.b16 %v2805
        %v2929 = vunpack.c.l.b16 %v2806
        %v2930 = vunpack.c.h.b16 %v2806
        %v2931 = vunpack.c.l.b16 %v2807
        %v2932 = vunpack.c.h.b16 %v2807
        %v2933 = vunpack.c.l.b16 %v2808
        %v2934 = vunpack.c.h.b16 %v2808
        %v2935 = vunpack.c.l.b16 %v2809
        %v2936 = vunpack.c.h.b16 %v2809
        %v2937 = vunpack.c.l.b16 %v2810
        %v2938 = vunpack.c.h.b16 %v2810
        %v2939 = vpack.c.b16 %v2869, %v2867
        %v2940 = vpack.c.b16 %v2870, %v2868
        %v2941 = vpack.c.b16 %v2873, %v2871
        %v2942 = vpack.c.b16 %v2874, %v2872
        %v2943 = vpack.c.b16 %v2877, %v2875
        %v2944 = vpack.c.b16 %v2878, %v2876
        %v2945 = vpack.c.b16 %v2881, %v2879
        %v2946 = vpack.c.b16 %v2882, %v2880
        %v2947 = vpack.c.b16 %v2885, %v2883
        %v2948 = vpack.c.b16 %v2886, %v2884
        %v2949 = vpack.c.b16 %v2889, %v2887
        %v2950 = vpack.c.b16 %v2890, %v2888
        %v2951 = vpack.c.b16 %v2893, %v2891
        %v2952 = vpack.c.b16 %v2894, %v2892
        %v2953 = vpack.c.b16 %v2897, %v2895
        %v2954 = vpack.c.b16 %v2898, %v2896
        %v2955 = vpack.c.b16 %v2901, %v2899
        %v2956 = vpack.c.b16 %v2902, %v2900
        %v2957 = vpack.c.b16 %v2905, %v2903
        %v2958 = vpack.c.b16 %v2906, %v2904
        %v2959 = vpack.c.b16 %v2909, %v2907
        %v2960 = vpack.c.b16 %v2910, %v2908
        %v2961 = vpack.c.b16 %v2913, %v2911
        %v2962 = vpack.c.b16 %v2914, %v2912
        %v2963 = vpack.c.b16 %v2917, %v2915
        %v2964 = vpack.c.b16 %v2918, %v2916
        %v2965 = vpack.c.b16 %v2921, %v2919
        %v2966 = vpack.c.b16 %v2922, %v2920
        %v2967 = vpack.c.b16 %v2925, %v2923
        %v2968 = vpack.c.b16 %v2926, %v2924
        %v2969 = vpack.c.b16 %v2929, %v2927
        %v2970 = vpack.c.b16 %v2930, %v2928
        %v2971 = vpack.c.b16 %v2933, %v2931
        %v2972 = vpack.c.b16 %v2934, %v2932
        %v2973 = vpack.c.b16 %v2937, %v2935
        %v2974 = vpack.c.b16 %v2938, %v2936
        %v3012 = vsel %vm1647, %v2826, 0
        %v3015 = vsel %vm1647, %v2825, 0
        %3017 = vmatpush.bf16.msra.mxu0 %v2953
        %3018 = vmatpush.bf16.msra.mxu0 %v2951
        %3019 = vmatpush.bf16.msra.mxu0 %v2949
        %3020 = vmatpush.bf16.msra.mxu0 %v2947
        %3021 = vmatpush.bf16.msra.mxu0 %v2945
        %3022 = vmatpush.bf16.msra.mxu0 %v2943
        %3023 = vmatpush.bf16.msra.mxu0 %v2941
        %3024 = vmatpush.bf16.msra.mxu0 %v2939
        %3025 = vmatmul.bf16.gmra.mxu0 %v2820
        %v3026 = vpop.f32.mrf.mxu0
        %v3027 = vadd.f32 0.0, %v3026
        %v3028 = vpop.f32.mrf.mxu0
        %v3029 = vadd.f32 0.0, %v3028
        %3030 = vmatmul.bf16.gmra.mxu0 %v2819
        %v3031 = vpop.f32.mrf.mxu0
        %v3032 = vadd.f32 0.0, %v3031
        %v3033 = vpop.f32.mrf.mxu0
        %v3034 = vadd.f32 0.0, %v3033
        %3035 = vdwg.mxu0
        %3036 = vmatpush.bf16.msra.mxu0 %v2969
        %3037 = vmatpush.bf16.msra.mxu0 %v2967
        %3038 = vmatpush.bf16.msra.mxu0 %v2965
        %3039 = vmatpush.bf16.msra.mxu0 %v2963
        %3040 = vmatpush.bf16.msra.mxu0 %v2961
        %3041 = vmatpush.bf16.msra.mxu0 %v2959
        %3042 = vmatpush.bf16.msra.mxu0 %v2957
        %3043 = vmatpush.bf16.msra.mxu0 %v2955
        %3044 = vmatmul.bf16.gmra.mxu0 %v2823
        %v3045 = vpop.f32.mrf.mxu0
        %v3046 = vadd.f32 %v3027, %v3045
        %v3047 = vpop.f32.mrf.mxu0
        %v3048 = vadd.f32 %v3029, %v3047
        %3049 = vmatmul.bf16.gmra.mxu0 %v2822
        %v3050 = vpop.f32.mrf.mxu0
        %v3051 = vadd.f32 %v3032, %v3050
        %v3052 = vpop.f32.mrf.mxu0
        %v3053 = vadd.f32 %v3034, %v3052
        %3054 = vdwg.mxu0
        %3055 = vmatpush.bf16.msra.mxu0 0
        %3056 = vmatpush.bf16.msra.mxu0 0
        %3057 = vmatpush.bf16.msra.mxu0 0
        %3058 = vmatpush.bf16.msra.mxu0 0
        %3059 = vmatpush.bf16.msra.mxu0 0
        %3060 = vmatpush.bf16.msra.mxu0 0
        %3061 = vmatpush.bf16.msra.mxu0 %v2973
        %3062 = vmatpush.bf16.msra.mxu0 %v2971
        %3063 = vmatmul.bf16.gmra.mxu0 %v3012
        %v3064 = vpop.f32.mrf.mxu0
        %v3065 = vadd.f32 %v3046, %v3064
        %v3066 = vpop.f32.mrf.mxu0
        %v3067 = vadd.f32 %v3048, %v3066
        %3068 = vmatmul.bf16.gmra.mxu0 %v3015
        %v3069 = vpop.f32.mrf.mxu0
        %v3070 = vadd.f32 %v3051, %v3069
        %v3071 = vpop.f32.mrf.mxu0
        %v3072 = vadd.f32 %v3053, %v3071
        %3073 = vdwg.mxu0
        %3074 = vmatpush.bf16.msra.mxu0 %v2954
        %3075 = vmatpush.bf16.msra.mxu0 %v2952
        %3076 = vmatpush.bf16.msra.mxu0 %v2950
        %3077 = vmatpush.bf16.msra.mxu0 %v2948
        %3078 = vmatpush.bf16.msra.mxu0 %v2946
        %3079 = vmatpush.bf16.msra.mxu0 %v2944
        %3080 = vmatpush.bf16.msra.mxu0 %v2942
        %3081 = vmatpush.bf16.msra.mxu0 %v2940
        %3082 = vmatmul.bf16.gmra.mxu0 %v2820
        %v3083 = vpop.f32.mrf.mxu0
        %v3084 = vadd.f32 0.0, %v3083
        %v3085 = vpop.f32.mrf.mxu0
        %v3086 = vadd.f32 0.0, %v3085
        %3087 = vmatmul.bf16.gmra.mxu0 %v2819
        %v3088 = vpop.f32.mrf.mxu0
        %v3089 = vadd.f32 0.0, %v3088
        %v3090 = vpop.f32.mrf.mxu0
        %v3091 = vadd.f32 0.0, %v3090
        %3092 = vdwg.mxu0
        %3093 = vmatpush.bf16.msra.mxu0 %v2970
        %3094 = vmatpush.bf16.msra.mxu0 %v2968
        %3095 = vmatpush.bf16.msra.mxu0 %v2966
        %3096 = vmatpush.bf16.msra.mxu0 %v2964
        %3097 = vmatpush.bf16.msra.mxu0 %v2962
        %3098 = vmatpush.bf16.msra.mxu0 %v2960
        %3099 = vmatpush.bf16.msra.mxu0 %v2958
        %3100 = vmatpush.bf16.msra.mxu0 %v2956
        %3101 = vmatmul.bf16.gmra.mxu0 %v2823
        %v3102 = vpop.f32.mrf.mxu0
        %v3103 = vadd.f32 %v3084, %v3102
        %v3104 = vpop.f32.mrf.mxu0
        %v3105 = vadd.f32 %v3086, %v3104
        %3106 = vmatmul.bf16.gmra.mxu0 %v2822
        %v3107 = vpop.f32.mrf.mxu0
        %v3108 = vadd.f32 %v3089, %v3107
        %v3109 = vpop.f32.mrf.mxu0
        %v3110 = vadd.f32 %v3091, %v3109
        %3111 = vdwg.mxu0
        %3112 = vmatpush.bf16.msra.mxu0 0
        %3113 = vmatpush.bf16.msra.mxu0 0
        %3114 = vmatpush.bf16.msra.mxu0 0
        %3115 = vmatpush.bf16.msra.mxu0 0
        %3116 = vmatpush.bf16.msra.mxu0 0
        %3117 = vmatpush.bf16.msra.mxu0 0
        %3118 = vmatpush.bf16.msra.mxu0 %v2974
        %3119 = vmatpush.bf16.msra.mxu0 %v2972
        %3120 = vmatmul.bf16.gmra.mxu0 %v3012
        %v3121 = vpop.f32.mrf.mxu0
        %v3122 = vadd.f32 %v3103, %v3121
        %v3123 = vpop.f32.mrf.mxu0
        %v3124 = vadd.f32 %v3105, %v3123
        %3125 = vmatmul.bf16.gmra.mxu0 %v3015
        %v3126 = vpop.f32.mrf.mxu0
        %v3127 = vadd.f32 %v3108, %v3126
        %v3128 = vpop.f32.mrf.mxu0
        %v3129 = vadd.f32 %v3110, %v3128
        %3130 = vdwg.mxu0
        %v3131 = vadd.f32 %v2754, %v3065
        %v3132 = vadd.f32 %v2755, %v3122
        %v3133 = vadd.f32 %v2756, %v3067
        %v3134 = vadd.f32 %v2757, %v3124
        %v3135 = vadd.f32 %v2758, %v3070
        %v3136 = vadd.f32 %v2759, %v3127
        %v3137 = vadd.f32 %v2760, %v3072
        %v3138 = vadd.f32 %v2761, %v3129
        %v3139 = vld [vmem:[#allocation2 + $0x18] sm:$0xff]
        %v3140 = vld [vmem:[#allocation2 + $0x20] sm:$0xff]
        %v3141 = vld [vmem:[#allocation2 + $0x28] sm:$0xff]
        %v3142 = vld [vmem:[#allocation2 + $0x30] sm:$0xff]
        %v3143 = vld [vmem:[#allocation2 + $0x38] sm:$0xff]
        %v3144 = vld [vmem:[#allocation2 + $0x40] sm:$0xff]
        %v3145 = vld [vmem:[#allocation2 + $0x48] sm:$0xff]
        %v3146 = vld [vmem:[#allocation2 + $0x50] sm:$0xff]
        %v3147 = vld [vmem:[#allocation2 + $0x58] sm:$0xff]
        %v3148 = vld [vmem:[#allocation2 + $0x60] sm:$0x1]
        %v3149 = vld [vmem:[#allocation2 + $0x68] sm:$0x1]
        %v3150 = vld [vmem:[#allocation2 + $0x70] sm:$0x1]
        %v3151 = vpack.c.bf16 %v3142, %v3139
        %v3152 = vpack.c.bf16 %v3143, %v3140
        %v3153 = vpack.c.bf16 %v3144, %v3141
        %v3154 = vpack.c.bf16 %v3148, %v3145
        %v3155 = vpack.c.bf16 %v3149, %v3146
        %v3156 = vpack.c.bf16 %v3150, %v3147
        %s3157 = scalar_lea.vmem %s3, 1152
        %v3158 = vld [vmem:[%s3157] sm:$0xff]
        %v3159 = vld [vmem:[%s3157 + $0x8] sm:$0xff]
        %v3160 = vld [vmem:[%s3157 + $0x10] sm:$0xff]
        %v3161 = vld [vmem:[%s3157 + $0x18] sm:$0xff]
        %v3162 = vld [vmem:[%s3157 + $0x20] sm:$0xff]
        %v3163 = vld [vmem:[%s3157 + $0x28] sm:$0xff]
        %v3164 = vld [vmem:[%s3157 + $0x30] sm:$0xff]
        %v3165 = vld [vmem:[%s3157 + $0x38] sm:$0xff]
        %v3166 = vld [vmem:[%s3157 + $0x40] sm:$0xff]
        %v3167 = vld [vmem:[%s3157 + $0x48] sm:$0xff]
        %v3168 = vld [vmem:[%s3157 + $0x50] sm:$0xff]
        %v3169 = vld [vmem:[%s3157 + $0x58] sm:$0xff]
        %v3170 = vld [vmem:[%s3157 + $0x60] sm:$0xff]
        %v3171 = vld [vmem:[%s3157 + $0x68] sm:$0xff]
        %v3172 = vld [vmem:[%s3157 + $0x70] sm:$0xff]
        %v3173 = vld [vmem:[%s3157 + $0x78] sm:$0xff]
        %v3174 = vld [vmem:[%s3157 + $0x80] sm:$0xff]
        %v3175 = vld [vmem:[%s3157 + $0x88] sm:$0xff]
        %v3176 = vld [vmem:[%s3157 + $0x90] sm:$0xff]
        %v3177 = vld [vmem:[%s3157 + $0x98] sm:$0xff]
        %v3178 = vld [vmem:[%s3157 + $0xa0] sm:$0xff]
        %v3179 = vld [vmem:[%s3157 + $0xa8] sm:$0xff]
        %v3180 = vld [vmem:[%s3157 + $0xb0] sm:$0xff]
        %v3181 = vld [vmem:[%s3157 + $0xb8] sm:$0xff]
        %v3182 = vld [vmem:[%s3157 + $0xc0] sm:$0xff]
        %v3183 = vld [vmem:[%s3157 + $0xc8] sm:$0xff]
        %v3184 = vld [vmem:[%s3157 + $0xd0] sm:$0xff]
        %v3185 = vld [vmem:[%s3157 + $0xd8] sm:$0xff]
        %v3186 = vld [vmem:[%s3157 + $0xe0] sm:$0xff]
        %v3187 = vld [vmem:[%s3157 + $0xe8] sm:$0xff]
        %v3188 = vld [vmem:[%s3157 + $0xf0] sm:$0xff]
        %v3189 = vld [vmem:[%s3157 + $0xf8] sm:$0xff]
        %v3190 = vld [vmem:[%s3157 + $0x100] sm:$0xff]
        %v3191 = vld [vmem:[%s3157 + $0x108] sm:$0xff]
        %v3192 = vld [vmem:[%s3157 + $0x110] sm:$0xff]
        %v3193 = vld [vmem:[%s3157 + $0x118] sm:$0xff]
        %v3230 = vunpack.c.l.b16 %v3158
        %v3231 = vunpack.c.h.b16 %v3158
        %v3232 = vunpack.c.l.b16 %v3159
        %v3233 = vunpack.c.h.b16 %v3159
        %v3234 = vunpack.c.l.b16 %v3160
        %v3235 = vunpack.c.h.b16 %v3160
        %v3236 = vunpack.c.l.b16 %v3161
        %v3237 = vunpack.c.h.b16 %v3161
        %v3238 = vunpack.c.l.b16 %v3162
        %v3239 = vunpack.c.h.b16 %v3162
        %v3240 = vunpack.c.l.b16 %v3163
        %v3241 = vunpack.c.h.b16 %v3163
        %v3242 = vunpack.c.l.b16 %v3164
        %v3243 = vunpack.c.h.b16 %v3164
        %v3244 = vunpack.c.l.b16 %v3165
        %v3245 = vunpack.c.h.b16 %v3165
        %v3246 = vunpack.c.l.b16 %v3166
        %v3247 = vunpack.c.h.b16 %v3166
        %v3248 = vunpack.c.l.b16 %v3167
        %v3249 = vunpack.c.h.b16 %v3167
        %v3250 = vunpack.c.l.b16 %v3168
        %v3251 = vunpack.c.h.b16 %v3168
        %v3252 = vunpack.c.l.b16 %v3169
        %v3253 = vunpack.c.h.b16 %v3169
        %v3254 = vunpack.c.l.b16 %v3170
        %v3255 = vunpack.c.h.b16 %v3170
        %v3256 = vunpack.c.l.b16 %v3171
        %v3257 = vunpack.c.h.b16 %v3171
        %v3258 = vunpack.c.l.b16 %v3172
        %v3259 = vunpack.c.h.b16 %v3172
        %v3260 = vunpack.c.l.b16 %v3173
        %v3261 = vunpack.c.h.b16 %v3173
        %v3262 = vunpack.c.l.b16 %v3174
        %v3263 = vunpack.c.h.b16 %v3174
        %v3264 = vunpack.c.l.b16 %v3175
        %v3265 = vunpack.c.h.b16 %v3175
        %v3266 = vunpack.c.l.b16 %v3176
        %v3267 = vunpack.c.h.b16 %v3176
        %v3268 = vunpack.c.l.b16 %v3177
        %v3269 = vunpack.c.h.b16 %v3177
        %v3270 = vunpack.c.l.b16 %v3178
        %v3271 = vunpack.c.h.b16 %v3178
        %v3272 = vunpack.c.l.b16 %v3179
        %v3273 = vunpack.c.h.b16 %v3179
        %v3274 = vunpack.c.l.b16 %v3180
        %v3275 = vunpack.c.h.b16 %v3180
        %v3276 = vunpack.c.l.b16 %v3181
        %v3277 = vunpack.c.h.b16 %v3181
        %v3278 = vunpack.c.l.b16 %v3182
        %v3279 = vunpack.c.h.b16 %v3182
        %v3280 = vunpack.c.l.b16 %v3183
        %v3281 = vunpack.c.h.b16 %v3183
        %v3282 = vunpack.c.l.b16 %v3184
        %v3283 = vunpack.c.h.b16 %v3184
        %v3284 = vunpack.c.l.b16 %v3185
        %v3285 = vunpack.c.h.b16 %v3185
        %v3286 = vunpack.c.l.b16 %v3186
        %v3287 = vunpack.c.h.b16 %v3186
        %v3288 = vunpack.c.l.b16 %v3187
        %v3289 = vunpack.c.h.b16 %v3187
        %v3290 = vunpack.c.l.b16 %v3188
        %v3291 = vunpack.c.h.b16 %v3188
        %v3292 = vunpack.c.l.b16 %v3189
        %v3293 = vunpack.c.h.b16 %v3189
        %v3294 = vunpack.c.l.b16 %v3190
        %v3295 = vunpack.c.h.b16 %v3190
        %v3296 = vunpack.c.l.b16 %v3191
        %v3297 = vunpack.c.h.b16 %v3191
        %v3298 = vunpack.c.l.b16 %v3192
        %v3299 = vunpack.c.h.b16 %v3192
        %v3300 = vunpack.c.l.b16 %v3193
        %v3301 = vunpack.c.h.b16 %v3193
        %v3302 = vpack.c.b16 %v3232, %v3230
        %v3303 = vpack.c.b16 %v3233, %v3231
        %v3304 = vpack.c.b16 %v3236, %v3234
        %v3305 = vpack.c.b16 %v3237, %v3235
        %v3306 = vpack.c.b16 %v3240, %v3238
        %v3307 = vpack.c.b16 %v3241, %v3239
        %v3308 = vpack.c.b16 %v3244, %v3242
        %v3309 = vpack.c.b16 %v3245, %v3243
        %v3310 = vpack.c.b16 %v3248, %v3246
        %v3311 = vpack.c.b16 %v3249, %v3247
        %v3312 = vpack.c.b16 %v3252, %v3250
        %v3313 = vpack.c.b16 %v3253, %v3251
        %v3314 = vpack.c.b16 %v3256, %v3254
        %v3315 = vpack.c.b16 %v3257, %v3255
        %v3316 = vpack.c.b16 %v3260, %v3258
        %v3317 = vpack.c.b16 %v3261, %v3259
        %v3318 = vpack.c.b16 %v3264, %v3262
        %v3319 = vpack.c.b16 %v3265, %v3263
        %v3320 = vpack.c.b16 %v3268, %v3266
        %v3321 = vpack.c.b16 %v3269, %v3267
        %v3322 = vpack.c.b16 %v3272, %v3270
        %v3323 = vpack.c.b16 %v3273, %v3271
        %v3324 = vpack.c.b16 %v3276, %v3274
        %v3325 = vpack.c.b16 %v3277, %v3275
        %v3326 = vpack.c.b16 %v3280, %v3278
        %v3327 = vpack.c.b16 %v3281, %v3279
        %v3328 = vpack.c.b16 %v3284, %v3282
        %v3329 = vpack.c.b16 %v3285, %v3283
        %v3330 = vpack.c.b16 %v3288, %v3286
        %v3331 = vpack.c.b16 %v3289, %v3287
        %v3332 = vpack.c.b16 %v3292, %v3290
        %v3333 = vpack.c.b16 %v3293, %v3291
        %v3334 = vpack.c.b16 %v3296, %v3294
        %v3335 = vpack.c.b16 %v3297, %v3295
        %v3336 = vpack.c.b16 %v3300, %v3298
        %v3337 = vpack.c.b16 %v3301, %v3299
        %v3375 = vsel %vm1647, %v3153, 0
        %v3378 = vsel %vm1647, %v3156, 0
        %3380 = vmatpush.bf16.msra.mxu0 %v3316
        %3381 = vmatpush.bf16.msra.mxu0 %v3314
        %3382 = vmatpush.bf16.msra.mxu0 %v3312
        %3383 = vmatpush.bf16.msra.mxu0 %v3310
        %3384 = vmatpush.bf16.msra.mxu0 %v3308
        %3385 = vmatpush.bf16.msra.mxu0 %v3306
        %3386 = vmatpush.bf16.msra.mxu0 %v3304
        %3387 = vmatpush.bf16.msra.mxu0 %v3302
        %3388 = vmatmul.bf16.gmra.mxu0 %v3151
        %v3389 = vpop.f32.mrf.mxu0
        %v3390 = vadd.f32 0.0, %v3389
        %v3391 = vpop.f32.mrf.mxu0
        %v3392 = vadd.f32 0.0, %v3391
        %3393 = vmatmul.bf16.gmra.mxu0 %v3154
        %v3394 = vpop.f32.mrf.mxu0
        %v3395 = vadd.f32 0.0, %v3394
        %v3396 = vpop.f32.mrf.mxu0
        %v3397 = vadd.f32 0.0, %v3396
        %3398 = vdwg.mxu0
        %3399 = vmatpush.bf16.msra.mxu0 %v3332
        %3400 = vmatpush.bf16.msra.mxu0 %v3330
        %3401 = vmatpush.bf16.msra.mxu0 %v3328
        %3402 = vmatpush.bf16.msra.mxu0 %v3326
        %3403 = vmatpush.bf16.msra.mxu0 %v3324
        %3404 = vmatpush.bf16.msra.mxu0 %v3322
        %3405 = vmatpush.bf16.msra.mxu0 %v3320
        %3406 = vmatpush.bf16.msra.mxu0 %v3318
        %3407 = vmatmul.bf16.gmra.mxu0 %v3152
        %v3408 = vpop.f32.mrf.mxu0
        %v3409 = vadd.f32 %v3390, %v3408
        %v3410 = vpop.f32.mrf.mxu0
        %v3411 = vadd.f32 %v3392, %v3410
        %3412 = vmatmul.bf16.gmra.mxu0 %v3155
        %v3413 = vpop.f32.mrf.mxu0
        %v3414 = vadd.f32 %v3395, %v3413
        %v3415 = vpop.f32.mrf.mxu0
        %v3416 = vadd.f32 %v3397, %v3415
        %3417 = vdwg.mxu0
        %3418 = vmatpush.bf16.msra.mxu0 0
        %3419 = vmatpush.bf16.msra.mxu0 0
        %3420 = vmatpush.bf16.msra.mxu0 0
        %3421 = vmatpush.bf16.msra.mxu0 0
        %3422 = vmatpush.bf16.msra.mxu0 0
        %3423 = vmatpush.bf16.msra.mxu0 0
        %3424 = vmatpush.bf16.msra.mxu0 %v3336
        %3425 = vmatpush.bf16.msra.mxu0 %v3334
        %3426 = vmatmul.bf16.gmra.mxu0 %v3375
        %v3427 = vpop.f32.mrf.mxu0
        %v3428 = vadd.f32 %v3409, %v3427
        %v3429 = vpop.f32.mrf.mxu0
        %v3430 = vadd.f32 %v3411, %v3429
        %3431 = vmatmul.bf16.gmra.mxu0 %v3378
        %v3432 = vpop.f32.mrf.mxu0
        %v3433 = vadd.f32 %v3414, %v3432
        %v3434 = vpop.f32.mrf.mxu0
        %v3435 = vadd.f32 %v3416, %v3434
        %3436 = vdwg.mxu0
        %3437 = vmatpush.bf16.msra.mxu0 %v3317
        %3438 = vmatpush.bf16.msra.mxu0 %v3315
        %3439 = vmatpush.bf16.msra.mxu0 %v3313
        %3440 = vmatpush.bf16.msra.mxu0 %v3311
        %3441 = vmatpush.bf16.msra.mxu0 %v3309
        %3442 = vmatpush.bf16.msra.mxu0 %v3307
        %3443 = vmatpush.bf16.msra.mxu0 %v3305
        %3444 = vmatpush.bf16.msra.mxu0 %v3303
        %3445 = vmatmul.bf16.gmra.mxu0 %v3151
        %v3446 = vpop.f32.mrf.mxu0
        %v3447 = vadd.f32 0.0, %v3446
        %v3448 = vpop.f32.mrf.mxu0
        %v3449 = vadd.f32 0.0, %v3448
        %3450 = vmatmul.bf16.gmra.mxu0 %v3154
        %v3451 = vpop.f32.mrf.mxu0
        %v3452 = vadd.f32 0.0, %v3451
        %v3453 = vpop.f32.mrf.mxu0
        %v3454 = vadd.f32 0.0, %v3453
        %3455 = vdwg.mxu0
        %3456 = vmatpush.bf16.msra.mxu0 %v3333
        %3457 = vmatpush.bf16.msra.mxu0 %v3331
        %3458 = vmatpush.bf16.msra.mxu0 %v3329
        %3459 = vmatpush.bf16.msra.mxu0 %v3327
        %3460 = vmatpush.bf16.msra.mxu0 %v3325
        %3461 = vmatpush.bf16.msra.mxu0 %v3323
        %3462 = vmatpush.bf16.msra.mxu0 %v3321
        %3463 = vmatpush.bf16.msra.mxu0 %v3319
        %3464 = vmatmul.bf16.gmra.mxu0 %v3152
        %v3465 = vpop.f32.mrf.mxu0
        %v3466 = vadd.f32 %v3447, %v3465
        %v3467 = vpop.f32.mrf.mxu0
        %v3468 = vadd.f32 %v3449, %v3467
        %3469 = vmatmul.bf16.gmra.mxu0 %v3155
        %v3470 = vpop.f32.mrf.mxu0
        %v3471 = vadd.f32 %v3452, %v3470
        %v3472 = vpop.f32.mrf.mxu0
        %v3473 = vadd.f32 %v3454, %v3472
        %3474 = vdwg.mxu0
        %3475 = vmatpush.bf16.msra.mxu0 0
        %3476 = vmatpush.bf16.msra.mxu0 0
        %3477 = vmatpush.bf16.msra.mxu0 0
        %3478 = vmatpush.bf16.msra.mxu0 0
        %3479 = vmatpush.bf16.msra.mxu0 0
        %3480 = vmatpush.bf16.msra.mxu0 0
        %3481 = vmatpush.bf16.msra.mxu0 %v3337
        %3482 = vmatpush.bf16.msra.mxu0 %v3335
        %3483 = vmatmul.bf16.gmra.mxu0 %v3375
        %v3484 = vpop.f32.mrf.mxu0
        %v3485 = vadd.f32 %v3466, %v3484
        %v3486 = vpop.f32.mrf.mxu0
        %v3487 = vadd.f32 %v3468, %v3486
        %3488 = vmatmul.bf16.gmra.mxu0 %v3378
        %v3489 = vpop.f32.mrf.mxu0
        %v3490 = vadd.f32 %v3471, %v3489
        %v3491 = vpop.f32.mrf.mxu0
        %v3492 = vadd.f32 %v3473, %v3491
        %3493 = vdwg.mxu0
        %v3494 = vadd.f32 %v3131, %v3428
        %v3495 = vadd.f32 %v3132, %v3485
        %v3496 = vadd.f32 %v3133, %v3430
        %v3497 = vadd.f32 %v3134, %v3487
        %v3498 = vadd.f32 %v3135, %v3433
        %v3499 = vadd.f32 %v3136, %v3490
        %v3500 = vadd.f32 %v3137, %v3435
        %v3501 = vadd.f32 %v3138, %v3492
        %v3502 = vld [vmem:[%s4] sm:$0x3]
        %v3504 = vperm.slane %v3502, 0
        %v3505 = vperm.slane %v3502, 1
        %v3508 = vadd.f32 %v3494, %v3504
        %v3509 = vadd.f32 %v3495, %v3505
        %v3510 = vadd.f32 %v3496, %v3504
        %v3511 = vadd.f32 %v3497, %v3505
        %v3512 = vadd.f32 %v3498, %v3504
        %v3513 = vadd.f32 %v3499, %v3505
        %v3514 = vadd.f32 %v3500, %v3504
        %v3515 = vadd.f32 %v3501, %v3505
        %v3516 = vmax.f32 %v3508, 0.0
        %v3517 = vmax.f32 %v3509, 0.0
        %v3518 = vmax.f32 %v3510, 0.0
        %v3519 = vmax.f32 %v3511, 0.0
        %v3520 = vmax.f32 %v3512, 0.0
        %v3521 = vmax.f32 %v3513, 0.0
        %v3522 = vmax.f32 %v3514, 0.0
        %v3523 = vmax.f32 %v3515, 0.0
        %3524 = vst [vmem:[#allocation3] sm:$0xff] %v3516
        %vm3525 = vcmask 785408
        %3526 = vst.msk [vmem:[#allocation3 + $0x8] sm:$0xff] %vm3525, %v3517
        %3527 = vst [vmem:[#allocation3 + $0x10] sm:$0xff] %v3518
        %3528 = vst.msk [vmem:[#allocation3 + $0x18] sm:$0xff] %vm3525, %v3519
        %3529 = vst [vmem:[#allocation3 + $0x20] sm:$0xff] %v3520
        %3530 = vst.msk [vmem:[#allocation3 + $0x28] sm:$0xff] %vm3525, %v3521
        %3531 = vst [vmem:[#allocation3 + $0x30] sm:$0x1] %v3522
        %vm3532 = vcmask 778240
        %3533 = vst.msk [vmem:[#allocation3 + $0x38] sm:$0x1] %vm3532, %v3523
        %v3534 = vld [vmem:[%s8] sm:$0x1]
        %v3535 = vld [vmem:[#allocation3] ss:$8 sm:$0x3]
        %v3537 = vperm.slane %v3535, 0
        %v3538 = vperm.slane %v3535, 1
        %v3541 = vpack.c.bf16 %v3537, %v3537
        %v3542 = vpack.c.bf16 %v3538, %v3538
        %v3543 = vld [vmem:[%s5] sm:$0xf]
        %v3544 = vld [vmem:[%s5 + $0x4] sm:$0xf]
        %v3545 = vld [vmem:[%s5 + $0x8] sm:$0xf]
        %v3546 = vld [vmem:[%s5 + $0xc] sm:$0xf]
        %v3547 = vld [vmem:[%s5 + $0x10] sm:$0xf]
        %v3548 = vld [vmem:[%s5 + $0x14] sm:$0xf]
        %v3549 = vld [vmem:[%s5 + $0x18] sm:$0xf]
        %v3550 = vld [vmem:[%s5 + $0x1c] sm:$0xf]
        %v3551 = vld [vmem:[%s5 + $0x20] sm:$0xf]
        %v3552 = vld [vmem:[%s5 + $0x24] sm:$0xf]
        %v3553 = vld [vmem:[%s5 + $0x28] sm:$0xf]
        %v3554 = vld [vmem:[%s5 + $0x2c] sm:$0xf]
        %v3555 = vld [vmem:[%s5 + $0x30] sm:$0xf]
        %v3556 = vld [vmem:[%s5 + $0x34] sm:$0xf]
        %v3557 = vld [vmem:[%s5 + $0x38] sm:$0xf]
        %v3558 = vld [vmem:[%s5 + $0x3c] sm:$0xf]
        %v3559 = vld [vmem:[%s5 + $0x40] sm:$0xf]
        %v3560 = vld [vmem:[%s5 + $0x44] sm:$0xf]
        %v3561 = vld [vmem:[%s5 + $0x48] sm:$0xf]
        %v3562 = vld [vmem:[%s5 + $0x4c] sm:$0xf]
        %v3563 = vld [vmem:[%s5 + $0x50] sm:$0xf]
        %v3564 = vld [vmem:[%s5 + $0x54] sm:$0xf]
        %v3565 = vld [vmem:[%s5 + $0x58] sm:$0xf]
        %v3566 = vld [vmem:[%s5 + $0x5c] sm:$0xf]
        %v3567 = vld [vmem:[%s5 + $0x60] sm:$0xf]
        %v3568 = vld [vmem:[%s5 + $0x64] sm:$0xf]
        %v3569 = vld [vmem:[%s5 + $0x68] sm:$0xf]
        %v3570 = vld [vmem:[%s5 + $0x6c] sm:$0xf]
        %s3571 = scalar_lea.vmem [#allocation3], 4
        %v3572 = vld [vmem:[%s3571] ss:$8 sm:$0x3]
        %v3574 = vperm.slane %v3572, 0
        %v3575 = vperm.slane %v3572, 1
        %v3578 = vpack.c.bf16 %v3574, %v3574
        %v3579 = vpack.c.bf16 %v3575, %v3575
        %s3580 = scalar_lea.vmem %s5, 112
        %v3581 = vld [vmem:[%s3580] sm:$0xf]
        %v3582 = vld [vmem:[%s3580 + $0x4] sm:$0xf]
        %v3583 = vld [vmem:[%s3580 + $0x8] sm:$0xf]
        %v3584 = vld [vmem:[%s3580 + $0xc] sm:$0xf]
        %v3585 = vld [vmem:[%s3580 + $0x10] sm:$0xf]
        %v3586 = vld [vmem:[%s3580 + $0x14] sm:$0xf]
        %v3587 = vld [vmem:[%s3580 + $0x18] sm:$0xf]
        %v3588 = vld [vmem:[%s3580 + $0x1c] sm:$0xf]
        %v3589 = vld [vmem:[%s3580 + $0x20] sm:$0xf]
        %v3590 = vld [vmem:[%s3580 + $0x24] sm:$0xf]
        %v3591 = vld [vmem:[%s3580 + $0x28] sm:$0xf]
        %v3592 = vld [vmem:[%s3580 + $0x2c] sm:$0xf]
        %v3593 = vld [vmem:[%s3580 + $0x30] sm:$0xf]
        %v3594 = vld [vmem:[%s3580 + $0x34] sm:$0xf]
        %v3595 = vld [vmem:[%s3580 + $0x38] sm:$0xf]
        %v3596 = vld [vmem:[%s3580 + $0x3c] sm:$0xf]
        %v3597 = vld [vmem:[%s3580 + $0x40] sm:$0xf]
        %v3598 = vld [vmem:[%s3580 + $0x44] sm:$0xf]
        %v3599 = vld [vmem:[%s3580 + $0x48] sm:$0xf]
        %v3600 = vld [vmem:[%s3580 + $0x4c] sm:$0xf]
        %v3601 = vld [vmem:[%s3580 + $0x50] sm:$0xf]
        %v3602 = vld [vmem:[%s3580 + $0x54] sm:$0xf]
        %v3603 = vld [vmem:[%s3580 + $0x58] sm:$0xf]
        %v3604 = vld [vmem:[%s3580 + $0x5c] sm:$0xf]
        %v3605 = vld [vmem:[%s3580 + $0x60] sm:$0xf]
        %v3606 = vld [vmem:[%s3580 + $0x64] sm:$0xf]
        %v3607 = vld [vmem:[%s3580 + $0x68] sm:$0xf]
        %v3608 = vld [vmem:[%s3580 + $0x6c] sm:$0xf]
        %v3637 = vunpack.c.l.b16 %v3581
        %v3638 = vunpack.c.l.b16 %v3582
        %v3639 = vunpack.c.l.b16 %v3583
        %v3640 = vunpack.c.l.b16 %v3584
        %v3641 = vunpack.c.l.b16 %v3585
        %v3642 = vunpack.c.l.b16 %v3586
        %v3643 = vunpack.c.l.b16 %v3587
        %v3644 = vunpack.c.l.b16 %v3588
        %v3645 = vunpack.c.l.b16 %v3589
        %v3646 = vunpack.c.l.b16 %v3590
        %v3647 = vunpack.c.l.b16 %v3591
        %v3648 = vunpack.c.l.b16 %v3592
        %v3649 = vunpack.c.l.b16 %v3593
        %v3650 = vunpack.c.l.b16 %v3594
        %v3651 = vunpack.c.l.b16 %v3595
        %v3652 = vunpack.c.l.b16 %v3596
        %v3653 = vunpack.c.l.b16 %v3597
        %v3654 = vunpack.c.l.b16 %v3598
        %v3655 = vunpack.c.l.b16 %v3599
        %v3656 = vunpack.c.l.b16 %v3600
        %v3657 = vunpack.c.l.b16 %v3601
        %v3658 = vunpack.c.l.b16 %v3602
        %v3659 = vunpack.c.l.b16 %v3603
        %v3660 = vunpack.c.l.b16 %v3604
        %v3661 = vunpack.c.l.b16 %v3605
        %v3662 = vunpack.c.l.b16 %v3606
        %v3663 = vunpack.c.l.b16 %v3607
        %v3664 = vunpack.c.l.b16 %v3608
        %v3665 = vpack.c.b16 %v3638, %v3637
        %v3666 = vpack.c.b16 %v3640, %v3639
        %v3667 = vpack.c.b16 %v3642, %v3641
        %v3668 = vpack.c.b16 %v3644, %v3643
        %v3669 = vpack.c.b16 %v3646, %v3645
        %v3670 = vpack.c.b16 %v3648, %v3647
        %v3671 = vpack.c.b16 %v3650, %v3649
        %v3672 = vpack.c.b16 %v3652, %v3651
        %v3673 = vpack.c.b16 %v3654, %v3653
        %v3674 = vpack.c.b16 %v3656, %v3655
        %v3675 = vpack.c.b16 %v3658, %v3657
        %v3676 = vpack.c.b16 %v3660, %v3659
        %v3677 = vpack.c.b16 %v3662, %v3661
        %v3678 = vpack.c.b16 %v3664, %v3663
        %v3694 = vsel %vm3525, %v3579, 0
        %3696 = vmatpush.bf16.msra.mxu0 %v3672
        %3697 = vmatpush.bf16.msra.mxu0 %v3671
        %3698 = vmatpush.bf16.msra.mxu0 %v3670
        %3699 = vmatpush.bf16.msra.mxu0 %v3669
        %3700 = vmatpush.bf16.msra.mxu0 %v3668
        %3701 = vmatpush.bf16.msra.mxu0 %v3667
        %3702 = vmatpush.bf16.msra.mxu0 %v3666
        %3703 = vmatpush.bf16.msra.mxu0 %v3665
        %3704 = vmatmul.bf16.gmra.mxu0 %v3578
        %v3705 = vpop.f32.mrf.mxu0
        %v3706 = vadd.f32 0.0, %v3705
        %v3707 = vpop.f32.mrf.mxu0
        %3708 = vdwg.mxu0
        %3709 = vmatpush.bf16.msra.mxu0 0
        %3710 = vmatpush.bf16.msra.mxu0 0
        %3711 = vmatpush.bf16.msra.mxu0 %v3678
        %3712 = vmatpush.bf16.msra.mxu0 %v3677
        %3713 = vmatpush.bf16.msra.mxu0 %v3676
        %3714 = vmatpush.bf16.msra.mxu0 %v3675
        %3715 = vmatpush.bf16.msra.mxu0 %v3674
        %3716 = vmatpush.bf16.msra.mxu0 %v3673
        %3717 = vmatmul.bf16.gmra.mxu0 %v3694
        %v3718 = vpop.f32.mrf.mxu0
        %v3719 = vadd.f32 %v3706, %v3718
        %v3720 = vpop.f32.mrf.mxu0
        %3721 = vdwg.mxu0
        %v3750 = vunpack.c.l.b16 %v3543
        %v3751 = vunpack.c.l.b16 %v3544
        %v3752 = vunpack.c.l.b16 %v3545
        %v3753 = vunpack.c.l.b16 %v3546
        %v3754 = vunpack.c.l.b16 %v3547
        %v3755 = vunpack.c.l.b16 %v3548
        %v3756 = vunpack.c.l.b16 %v3549
        %v3757 = vunpack.c.l.b16 %v3550
        %v3758 = vunpack.c.l.b16 %v3551
        %v3759 = vunpack.c.l.b16 %v3552
        %v3760 = vunpack.c.l.b16 %v3553
        %v3761 = vunpack.c.l.b16 %v3554
        %v3762 = vunpack.c.l.b16 %v3555
        %v3763 = vunpack.c.l.b16 %v3556
        %v3764 = vunpack.c.l.b16 %v3557
        %v3765 = vunpack.c.l.b16 %v3558
        %v3766 = vunpack.c.l.b16 %v3559
        %v3767 = vunpack.c.l.b16 %v3560
        %v3768 = vunpack.c.l.b16 %v3561
        %v3769 = vunpack.c.l.b16 %v3562
        %v3770 = vunpack.c.l.b16 %v3563
        %v3771 = vunpack.c.l.b16 %v3564
        %v3772 = vunpack.c.l.b16 %v3565
        %v3773 = vunpack.c.l.b16 %v3566
        %v3774 = vunpack.c.l.b16 %v3567
        %v3775 = vunpack.c.l.b16 %v3568
        %v3776 = vunpack.c.l.b16 %v3569
        %v3777 = vunpack.c.l.b16 %v3570
        %v3778 = vpack.c.b16 %v3751, %v3750
        %v3779 = vpack.c.b16 %v3753, %v3752
        %v3780 = vpack.c.b16 %v3755, %v3754
        %v3781 = vpack.c.b16 %v3757, %v3756
        %v3782 = vpack.c.b16 %v3759, %v3758
        %v3783 = vpack.c.b16 %v3761, %v3760
        %v3784 = vpack.c.b16 %v3763, %v3762
        %v3785 = vpack.c.b16 %v3765, %v3764
        %v3786 = vpack.c.b16 %v3767, %v3766
        %v3787 = vpack.c.b16 %v3769, %v3768
        %v3788 = vpack.c.b16 %v3771, %v3770
        %v3789 = vpack.c.b16 %v3773, %v3772
        %v3790 = vpack.c.b16 %v3775, %v3774
        %v3791 = vpack.c.b16 %v3777, %v3776
        %v3807 = vsel %vm3525, %v3542, 0
        %3809 = vmatpush.bf16.msra.mxu0 %v3785
        %3810 = vmatpush.bf16.msra.mxu0 %v3784
        %3811 = vmatpush.bf16.msra.mxu0 %v3783
        %3812 = vmatpush.bf16.msra.mxu0 %v3782
        %3813 = vmatpush.bf16.msra.mxu0 %v3781
        %3814 = vmatpush.bf16.msra.mxu0 %v3780
        %3815 = vmatpush.bf16.msra.mxu0 %v3779
        %3816 = vmatpush.bf16.msra.mxu0 %v3778
        %3817 = vmatmul.bf16.gmra.mxu0 %v3541
        %v3818 = vpop.f32.mrf.mxu0
        %v3819 = vadd.f32 %v3719, %v3818
        %v3820 = vpop.f32.mrf.mxu0
        %3821 = vdwg.mxu0
        %3822 = vmatpush.bf16.msra.mxu0 0
        %3823 = vmatpush.bf16.msra.mxu0 0
        %3824 = vmatpush.bf16.msra.mxu0 %v3791
        %3825 = vmatpush.bf16.msra.mxu0 %v3790
        %3826 = vmatpush.bf16.msra.mxu0 %v3789
        %3827 = vmatpush.bf16.msra.mxu0 %v3788
        %3828 = vmatpush.bf16.msra.mxu0 %v3787
        %3829 = vmatpush.bf16.msra.mxu0 %v3786
        %3830 = vmatmul.bf16.gmra.mxu0 %v3807
        %v3831 = vpop.f32.mrf.mxu0
        %v3832 = vadd.f32 %v3819, %v3831
        %v3833 = vpop.f32.mrf.mxu0
        %3834 = vdwg.mxu0
        %s3835 = scalar_lea.vmem [#allocation3], 16
        %v3836 = vld [vmem:[%s3835] ss:$8 sm:$0x3]
        %v3838 = vperm.slane %v3836, 0
        %v3839 = vperm.slane %v3836, 1
        %v3842 = vpack.c.bf16 %v3838, %v3838
        %v3843 = vpack.c.bf16 %v3839, %v3839
        %s3844 = scalar_lea.vmem %s5, 224
        %v3845 = vld [vmem:[%s3844] sm:$0xf]
        %v3846 = vld [vmem:[%s3844 + $0x4] sm:$0xf]
        %v3847 = vld [vmem:[%s3844 + $0x8] sm:$0xf]
        %v3848 = vld [vmem:[%s3844 + $0xc] sm:$0xf]
        %v3849 = vld [vmem:[%s3844 + $0x10] sm:$0xf]
        %v3850 = vld [vmem:[%s3844 + $0x14] sm:$0xf]
        %v3851 = vld [vmem:[%s3844 + $0x18] sm:$0xf]
        %v3852 = vld [vmem:[%s3844 + $0x1c] sm:$0xf]
        %v3853 = vld [vmem:[%s3844 + $0x20] sm:$0xf]
        %v3854 = vld [vmem:[%s3844 + $0x24] sm:$0xf]
        %v3855 = vld [vmem:[%s3844 + $0x28] sm:$0xf]
        %v3856 = vld [vmem:[%s3844 + $0x2c] sm:$0xf]
        %v3857 = vld [vmem:[%s3844 + $0x30] sm:$0xf]
        %v3858 = vld [vmem:[%s3844 + $0x34] sm:$0xf]
        %v3859 = vld [vmem:[%s3844 + $0x38] sm:$0xf]
        %v3860 = vld [vmem:[%s3844 + $0x3c] sm:$0xf]
        %v3861 = vld [vmem:[%s3844 + $0x40] sm:$0xf]
        %v3862 = vld [vmem:[%s3844 + $0x44] sm:$0xf]
        %v3863 = vld [vmem:[%s3844 + $0x48] sm:$0xf]
        %v3864 = vld [vmem:[%s3844 + $0x4c] sm:$0xf]
        %v3865 = vld [vmem:[%s3844 + $0x50] sm:$0xf]
        %v3866 = vld [vmem:[%s3844 + $0x54] sm:$0xf]
        %v3867 = vld [vmem:[%s3844 + $0x58] sm:$0xf]
        %v3868 = vld [vmem:[%s3844 + $0x5c] sm:$0xf]
        %v3869 = vld [vmem:[%s3844 + $0x60] sm:$0xf]
        %v3870 = vld [vmem:[%s3844 + $0x64] sm:$0xf]
        %v3871 = vld [vmem:[%s3844 + $0x68] sm:$0xf]
        %v3872 = vld [vmem:[%s3844 + $0x6c] sm:$0xf]
        %v3901 = vunpack.c.l.b16 %v3845
        %v3902 = vunpack.c.l.b16 %v3846
        %v3903 = vunpack.c.l.b16 %v3847
        %v3904 = vunpack.c.l.b16 %v3848
        %v3905 = vunpack.c.l.b16 %v3849
        %v3906 = vunpack.c.l.b16 %v3850
        %v3907 = vunpack.c.l.b16 %v3851
        %v3908 = vunpack.c.l.b16 %v3852
        %v3909 = vunpack.c.l.b16 %v3853
        %v3910 = vunpack.c.l.b16 %v3854
        %v3911 = vunpack.c.l.b16 %v3855
        %v3912 = vunpack.c.l.b16 %v3856
        %v3913 = vunpack.c.l.b16 %v3857
        %v3914 = vunpack.c.l.b16 %v3858
        %v3915 = vunpack.c.l.b16 %v3859
        %v3916 = vunpack.c.l.b16 %v3860
        %v3917 = vunpack.c.l.b16 %v3861
        %v3918 = vunpack.c.l.b16 %v3862
        %v3919 = vunpack.c.l.b16 %v3863
        %v3920 = vunpack.c.l.b16 %v3864
        %v3921 = vunpack.c.l.b16 %v3865
        %v3922 = vunpack.c.l.b16 %v3866
        %v3923 = vunpack.c.l.b16 %v3867
        %v3924 = vunpack.c.l.b16 %v3868
        %v3925 = vunpack.c.l.b16 %v3869
        %v3926 = vunpack.c.l.b16 %v3870
        %v3927 = vunpack.c.l.b16 %v3871
        %v3928 = vunpack.c.l.b16 %v3872
        %v3929 = vpack.c.b16 %v3902, %v3901
        %v3930 = vpack.c.b16 %v3904, %v3903
        %v3931 = vpack.c.b16 %v3906, %v3905
        %v3932 = vpack.c.b16 %v3908, %v3907
        %v3933 = vpack.c.b16 %v3910, %v3909
        %v3934 = vpack.c.b16 %v3912, %v3911
        %v3935 = vpack.c.b16 %v3914, %v3913
        %v3936 = vpack.c.b16 %v3916, %v3915
        %v3937 = vpack.c.b16 %v3918, %v3917
        %v3938 = vpack.c.b16 %v3920, %v3919
        %v3939 = vpack.c.b16 %v3922, %v3921
        %v3940 = vpack.c.b16 %v3924, %v3923
        %v3941 = vpack.c.b16 %v3926, %v3925
        %v3942 = vpack.c.b16 %v3928, %v3927
        %v3958 = vsel %vm3525, %v3843, 0
        %3960 = vmatpush.bf16.msra.mxu0 %v3936
        %3961 = vmatpush.bf16.msra.mxu0 %v3935
        %3962 = vmatpush.bf16.msra.mxu0 %v3934
        %3963 = vmatpush.bf16.msra.mxu0 %v3933
        %3964 = vmatpush.bf16.msra.mxu0 %v3932
        %3965 = vmatpush.bf16.msra.mxu0 %v3931
        %3966 = vmatpush.bf16.msra.mxu0 %v3930
        %3967 = vmatpush.bf16.msra.mxu0 %v3929
        %3968 = vmatmul.bf16.gmra.mxu0 %v3842
        %v3969 = vpop.f32.mrf.mxu0
        %v3970 = vadd.f32 0.0, %v3969
        %v3971 = vpop.f32.mrf.mxu0
        %3972 = vdwg.mxu0
        %3973 = vmatpush.bf16.msra.mxu0 0
        %3974 = vmatpush.bf16.msra.mxu0 0
        %3975 = vmatpush.bf16.msra.mxu0 %v3942
        %3976 = vmatpush.bf16.msra.mxu0 %v3941
        %3977 = vmatpush.bf16.msra.mxu0 %v3940
        %3978 = vmatpush.bf16.msra.mxu0 %v3939
        %3979 = vmatpush.bf16.msra.mxu0 %v3938
        %3980 = vmatpush.bf16.msra.mxu0 %v3937
        %3981 = vmatmul.bf16.gmra.mxu0 %v3958
        %v3982 = vpop.f32.mrf.mxu0
        %v3983 = vadd.f32 %v3970, %v3982
        %v3984 = vpop.f32.mrf.mxu0
        %3985 = vdwg.mxu0
        %v3986 = vadd.f32 %v3832, %v3983
        %s3987 = scalar_lea.vmem [#allocation3], 20
        %v3988 = vld [vmem:[%s3987] ss:$8 sm:$0x3]
        %v3990 = vperm.slane %v3988, 0
        %v3991 = vperm.slane %v3988, 1
        %v3994 = vpack.c.bf16 %v3990, %v3990
        %v3995 = vpack.c.bf16 %v3991, %v3991
        %s3996 = scalar_lea.vmem %s5, 336
        %v3997 = vld [vmem:[%s3996] sm:$0xf]
        %v3998 = vld [vmem:[%s3996 + $0x4] sm:$0xf]
        %v3999 = vld [vmem:[%s3996 + $0x8] sm:$0xf]
        %v4000 = vld [vmem:[%s3996 + $0xc] sm:$0xf]
        %v4001 = vld [vmem:[%s3996 + $0x10] sm:$0xf]
        %v4002 = vld [vmem:[%s3996 + $0x14] sm:$0xf]
        %v4003 = vld [vmem:[%s3996 + $0x18] sm:$0xf]
        %v4004 = vld [vmem:[%s3996 + $0x1c] sm:$0xf]
        %v4005 = vld [vmem:[%s3996 + $0x20] sm:$0xf]
        %v4006 = vld [vmem:[%s3996 + $0x24] sm:$0xf]
        %v4007 = vld [vmem:[%s3996 + $0x28] sm:$0xf]
        %v4008 = vld [vmem:[%s3996 + $0x2c] sm:$0xf]
        %v4009 = vld [vmem:[%s3996 + $0x30] sm:$0xf]
        %v4010 = vld [vmem:[%s3996 + $0x34] sm:$0xf]
        %v4011 = vld [vmem:[%s3996 + $0x38] sm:$0xf]
        %v4012 = vld [vmem:[%s3996 + $0x3c] sm:$0xf]
        %v4013 = vld [vmem:[%s3996 + $0x40] sm:$0xf]
        %v4014 = vld [vmem:[%s3996 + $0x44] sm:$0xf]
        %v4015 = vld [vmem:[%s3996 + $0x48] sm:$0xf]
        %v4016 = vld [vmem:[%s3996 + $0x4c] sm:$0xf]
        %v4017 = vld [vmem:[%s3996 + $0x50] sm:$0xf]
        %v4018 = vld [vmem:[%s3996 + $0x54] sm:$0xf]
        %v4019 = vld [vmem:[%s3996 + $0x58] sm:$0xf]
        %v4020 = vld [vmem:[%s3996 + $0x5c] sm:$0xf]
        %v4021 = vld [vmem:[%s3996 + $0x60] sm:$0xf]
        %v4022 = vld [vmem:[%s3996 + $0x64] sm:$0xf]
        %v4023 = vld [vmem:[%s3996 + $0x68] sm:$0xf]
        %v4024 = vld [vmem:[%s3996 + $0x6c] sm:$0xf]
        %v4053 = vunpack.c.l.b16 %v3997
        %v4054 = vunpack.c.l.b16 %v3998
        %v4055 = vunpack.c.l.b16 %v3999
        %v4056 = vunpack.c.l.b16 %v4000
        %v4057 = vunpack.c.l.b16 %v4001
        %v4058 = vunpack.c.l.b16 %v4002
        %v4059 = vunpack.c.l.b16 %v4003
        %v4060 = vunpack.c.l.b16 %v4004
        %v4061 = vunpack.c.l.b16 %v4005
        %v4062 = vunpack.c.l.b16 %v4006
        %v4063 = vunpack.c.l.b16 %v4007
        %v4064 = vunpack.c.l.b16 %v4008
        %v4065 = vunpack.c.l.b16 %v4009
        %v4066 = vunpack.c.l.b16 %v4010
        %v4067 = vunpack.c.l.b16 %v4011
        %v4068 = vunpack.c.l.b16 %v4012
        %v4069 = vunpack.c.l.b16 %v4013
        %v4070 = vunpack.c.l.b16 %v4014
        %v4071 = vunpack.c.l.b16 %v4015
        %v4072 = vunpack.c.l.b16 %v4016
        %v4073 = vunpack.c.l.b16 %v4017
        %v4074 = vunpack.c.l.b16 %v4018
        %v4075 = vunpack.c.l.b16 %v4019
        %v4076 = vunpack.c.l.b16 %v4020
        %v4077 = vunpack.c.l.b16 %v4021
        %v4078 = vunpack.c.l.b16 %v4022
        %v4079 = vunpack.c.l.b16 %v4023
        %v4080 = vunpack.c.l.b16 %v4024
        %v4081 = vpack.c.b16 %v4054, %v4053
        %v4082 = vpack.c.b16 %v4056, %v4055
        %v4083 = vpack.c.b16 %v4058, %v4057
        %v4084 = vpack.c.b16 %v4060, %v4059
        %v4085 = vpack.c.b16 %v4062, %v4061
        %v4086 = vpack.c.b16 %v4064, %v4063
        %v4087 = vpack.c.b16 %v4066, %v4065
        %v4088 = vpack.c.b16 %v4068, %v4067
        %v4089 = vpack.c.b16 %v4070, %v4069
        %v4090 = vpack.c.b16 %v4072, %v4071
        %v4091 = vpack.c.b16 %v4074, %v4073
        %v4092 = vpack.c.b16 %v4076, %v4075
        %v4093 = vpack.c.b16 %v4078, %v4077
        %v4094 = vpack.c.b16 %v4080, %v4079
        %v4110 = vsel %vm3525, %v3995, 0
        %4112 = vmatpush.bf16.msra.mxu0 %v4088
        %4113 = vmatpush.bf16.msra.mxu0 %v4087
        %4114 = vmatpush.bf16.msra.mxu0 %v4086
        %4115 = vmatpush.bf16.msra.mxu0 %v4085
        %4116 = vmatpush.bf16.msra.mxu0 %v4084
        %4117 = vmatpush.bf16.msra.mxu0 %v4083
        %4118 = vmatpush.bf16.msra.mxu0 %v4082
        %4119 = vmatpush.bf16.msra.mxu0 %v4081
        %4120 = vmatmul.bf16.gmra.mxu0 %v3994
        %v4121 = vpop.f32.mrf.mxu0
        %v4122 = vadd.f32 0.0, %v4121
        %v4123 = vpop.f32.mrf.mxu0
        %4124 = vdwg.mxu0
        %4125 = vmatpush.bf16.msra.mxu0 0
        %4126 = vmatpush.bf16.msra.mxu0 0
        %4127 = vmatpush.bf16.msra.mxu0 %v4094
        %4128 = vmatpush.bf16.msra.mxu0 %v4093
        %4129 = vmatpush.bf16.msra.mxu0 %v4092
        %4130 = vmatpush.bf16.msra.mxu0 %v4091
        %4131 = vmatpush.bf16.msra.mxu0 %v4090
        %4132 = vmatpush.bf16.msra.mxu0 %v4089
        %4133 = vmatmul.bf16.gmra.mxu0 %v4110
        %v4134 = vpop.f32.mrf.mxu0
        %v4135 = vadd.f32 %v4122, %v4134
        %v4136 = vpop.f32.mrf.mxu0
        %4137 = vdwg.mxu0
        %v4138 = vadd.f32 %v3986, %v4135
        %s4139 = scalar_lea.vmem [#allocation3], 32
        %v4140 = vld [vmem:[%s4139] ss:$8 sm:$0x3]
        %v4142 = vperm.slane %v4140, 0
        %v4143 = vperm.slane %v4140, 1
        %v4146 = vpack.c.bf16 %v4142, %v4142
        %v4147 = vpack.c.bf16 %v4143, %v4143
        %s4148 = scalar_lea.vmem %s5, 448
        %v4149 = vld [vmem:[%s4148] sm:$0xf]
        %v4150 = vld [vmem:[%s4148 + $0x4] sm:$0xf]
        %v4151 = vld [vmem:[%s4148 + $0x8] sm:$0xf]
        %v4152 = vld [vmem:[%s4148 + $0xc] sm:$0xf]
        %v4153 = vld [vmem:[%s4148 + $0x10] sm:$0xf]
        %v4154 = vld [vmem:[%s4148 + $0x14] sm:$0xf]
        %v4155 = vld [vmem:[%s4148 + $0x18] sm:$0xf]
        %v4156 = vld [vmem:[%s4148 + $0x1c] sm:$0xf]
        %v4157 = vld [vmem:[%s4148 + $0x20] sm:$0xf]
        %v4158 = vld [vmem:[%s4148 + $0x24] sm:$0xf]
        %v4159 = vld [vmem:[%s4148 + $0x28] sm:$0xf]
        %v4160 = vld [vmem:[%s4148 + $0x2c] sm:$0xf]
        %v4161 = vld [vmem:[%s4148 + $0x30] sm:$0xf]
        %v4162 = vld [vmem:[%s4148 + $0x34] sm:$0xf]
        %v4163 = vld [vmem:[%s4148 + $0x38] sm:$0xf]
        %v4164 = vld [vmem:[%s4148 + $0x3c] sm:$0xf]
        %v4165 = vld [vmem:[%s4148 + $0x40] sm:$0xf]
        %v4166 = vld [vmem:[%s4148 + $0x44] sm:$0xf]
        %v4167 = vld [vmem:[%s4148 + $0x48] sm:$0xf]
        %v4168 = vld [vmem:[%s4148 + $0x4c] sm:$0xf]
        %v4169 = vld [vmem:[%s4148 + $0x50] sm:$0xf]
        %v4170 = vld [vmem:[%s4148 + $0x54] sm:$0xf]
        %v4171 = vld [vmem:[%s4148 + $0x58] sm:$0xf]
        %v4172 = vld [vmem:[%s4148 + $0x5c] sm:$0xf]
        %v4173 = vld [vmem:[%s4148 + $0x60] sm:$0xf]
        %v4174 = vld [vmem:[%s4148 + $0x64] sm:$0xf]
        %v4175 = vld [vmem:[%s4148 + $0x68] sm:$0xf]
        %v4176 = vld [vmem:[%s4148 + $0x6c] sm:$0xf]
        %v4205 = vunpack.c.l.b16 %v4149
        %v4206 = vunpack.c.l.b16 %v4150
        %v4207 = vunpack.c.l.b16 %v4151
        %v4208 = vunpack.c.l.b16 %v4152
        %v4209 = vunpack.c.l.b16 %v4153
        %v4210 = vunpack.c.l.b16 %v4154
        %v4211 = vunpack.c.l.b16 %v4155
        %v4212 = vunpack.c.l.b16 %v4156
        %v4213 = vunpack.c.l.b16 %v4157
        %v4214 = vunpack.c.l.b16 %v4158
        %v4215 = vunpack.c.l.b16 %v4159
        %v4216 = vunpack.c.l.b16 %v4160
        %v4217 = vunpack.c.l.b16 %v4161
        %v4218 = vunpack.c.l.b16 %v4162
        %v4219 = vunpack.c.l.b16 %v4163
        %v4220 = vunpack.c.l.b16 %v4164
        %v4221 = vunpack.c.l.b16 %v4165
        %v4222 = vunpack.c.l.b16 %v4166
        %v4223 = vunpack.c.l.b16 %v4167
        %v4224 = vunpack.c.l.b16 %v4168
        %v4225 = vunpack.c.l.b16 %v4169
        %v4226 = vunpack.c.l.b16 %v4170
        %v4227 = vunpack.c.l.b16 %v4171
        %v4228 = vunpack.c.l.b16 %v4172
        %v4229 = vunpack.c.l.b16 %v4173
        %v4230 = vunpack.c.l.b16 %v4174
        %v4231 = vunpack.c.l.b16 %v4175
        %v4232 = vunpack.c.l.b16 %v4176
        %v4233 = vpack.c.b16 %v4206, %v4205
        %v4234 = vpack.c.b16 %v4208, %v4207
        %v4235 = vpack.c.b16 %v4210, %v4209
        %v4236 = vpack.c.b16 %v4212, %v4211
        %v4237 = vpack.c.b16 %v4214, %v4213
        %v4238 = vpack.c.b16 %v4216, %v4215
        %v4239 = vpack.c.b16 %v4218, %v4217
        %v4240 = vpack.c.b16 %v4220, %v4219
        %v4241 = vpack.c.b16 %v4222, %v4221
        %v4242 = vpack.c.b16 %v4224, %v4223
        %v4243 = vpack.c.b16 %v4226, %v4225
        %v4244 = vpack.c.b16 %v4228, %v4227
        %v4245 = vpack.c.b16 %v4230, %v4229
        %v4246 = vpack.c.b16 %v4232, %v4231
        %v4262 = vsel %vm3525, %v4147, 0
        %4264 = vmatpush.bf16.msra.mxu0 %v4240
        %4265 = vmatpush.bf16.msra.mxu0 %v4239
        %4266 = vmatpush.bf16.msra.mxu0 %v4238
        %4267 = vmatpush.bf16.msra.mxu0 %v4237
        %4268 = vmatpush.bf16.msra.mxu0 %v4236
        %4269 = vmatpush.bf16.msra.mxu0 %v4235
        %4270 = vmatpush.bf16.msra.mxu0 %v4234
        %4271 = vmatpush.bf16.msra.mxu0 %v4233
        %4272 = vmatmul.bf16.gmra.mxu0 %v4146
        %v4273 = vpop.f32.mrf.mxu0
        %v4274 = vadd.f32 0.0, %v4273
        %v4275 = vpop.f32.mrf.mxu0
        %4276 = vdwg.mxu0
        %4277 = vmatpush.bf16.msra.mxu0 0
        %4278 = vmatpush.bf16.msra.mxu0 0
        %4279 = vmatpush.bf16.msra.mxu0 %v4246
        %4280 = vmatpush.bf16.msra.mxu0 %v4245
        %4281 = vmatpush.bf16.msra.mxu0 %v4244
        %4282 = vmatpush.bf16.msra.mxu0 %v4243
        %4283 = vmatpush.bf16.msra.mxu0 %v4242
        %4284 = vmatpush.bf16.msra.mxu0 %v4241
        %4285 = vmatmul.bf16.gmra.mxu0 %v4262
        %v4286 = vpop.f32.mrf.mxu0
        %v4287 = vadd.f32 %v4274, %v4286
        %v4288 = vpop.f32.mrf.mxu0
        %4289 = vdwg.mxu0
        %v4290 = vadd.f32 %v4138, %v4287
        %v4291 = vld [vmem:[%s6] sm:$0x1]
        %v4292 = vadd.f32 %v4290, %v4291
        %v4293 = vmax.f32 %v4292, 0.0
        %v4294 = vpack.c.bf16 %v4293, %v4293
        %v4295 = vld [vmem:[%s7] sm:$0xf]
        %v4296 = vld [vmem:[%s7 + $0x4] sm:$0xf]
        %v4297 = vld [vmem:[%s7 + $0x8] sm:$0xf]
        %v4298 = vld [vmem:[%s7 + $0xc] sm:$0xf]
        %v4299 = vld [vmem:[%s7 + $0x10] sm:$0xf]
        %v4300 = vld [vmem:[%s7 + $0x14] sm:$0xf]
        %v4301 = vld [vmem:[%s7 + $0x18] sm:$0xf]
        %v4302 = vld [vmem:[%s7 + $0x1c] sm:$0xf]
        %v4311 = vunpack.c.l.b16 %v4295
        %v4312 = vunpack.c.l.b16 %v4296
        %v4313 = vunpack.c.l.b16 %v4297
        %v4314 = vunpack.c.l.b16 %v4298
        %v4315 = vunpack.c.l.b16 %v4299
        %v4316 = vunpack.c.l.b16 %v4300
        %v4317 = vunpack.c.l.b16 %v4301
        %v4318 = vunpack.c.l.b16 %v4302
        %v4319 = vpack.c.b16 %v4312, %v4311
        %v4320 = vpack.c.b16 %v4314, %v4313
        %v4321 = vpack.c.b16 %v4316, %v4315
        %v4322 = vpack.c.b16 %v4318, %v4317
        %vm4327 = vcmask 523264
        %v4329 = vsel %vm4327, %v4294, 0
        %4331 = vmatpush.bf16.msra.mxu0 0
        %4332 = vmatpush.bf16.msra.mxu0 0
        %4333 = vmatpush.bf16.msra.mxu0 0
        %4334 = vmatpush.bf16.msra.mxu0 0
        %4335 = vmatpush.bf16.msra.mxu0 %v4322
        %4336 = vmatpush.bf16.msra.mxu0 %v4321
        %4337 = vmatpush.bf16.msra.mxu0 %v4320
        %4338 = vmatpush.bf16.msra.mxu0 %v4319
        %4339 = vmatmul.bf16.gmra.mxu0 %v4329
        %v4340 = vpop.f32.mrf.mxu0
        %v4341 = vadd.f32 0.0, %v4340
        %v4342 = vpop.f32.mrf.mxu0
        %4343 = vdwg.mxu0
        %v4344 = vadd.f32 %v3534, %v4341
        %4345 = vmatpush.bf16.msra.mxu0 %v3672
        %4346 = vmatpush.bf16.msra.mxu0 %v3671
        %4347 = vmatpush.bf16.msra.mxu0 %v3670
        %4348 = vmatpush.bf16.msra.mxu0 %v3669
        %4349 = vmatpush.bf16.msra.mxu0 %v3668
        %4350 = vmatpush.bf16.msra.mxu0 %v3667
        %4351 = vmatpush.bf16.msra.mxu0 %v3666
        %4352 = vmatpush.bf16.msra.mxu0 %v3665
        %4353 = vmatmul.bf16.gmra.mxu0 %v3994
        %v4354 = vpop.f32.mrf.mxu0
        %v4355 = vadd.f32 0.0, %v4354
        %v4356 = vpop.f32.mrf.mxu0
        %4357 = vdwg.mxu0
        %4358 = vmatpush.bf16.msra.mxu0 0
        %4359 = vmatpush.bf16.msra.mxu0 0
        %4360 = vmatpush.bf16.msra.mxu0 %v3678
        %4361 = vmatpush.bf16.msra.mxu0 %v3677
        %4362 = vmatpush.bf16.msra.mxu0 %v3676
        %4363 = vmatpush.bf16.msra.mxu0 %v3675
        %4364 = vmatpush.bf16.msra.mxu0 %v3674
        %4365 = vmatpush.bf16.msra.mxu0 %v3673
        %4366 = vmatmul.bf16.gmra.mxu0 %v4110
        %v4367 = vpop.f32.mrf.mxu0
        %v4368 = vadd.f32 %v4355, %v4367
        %v4369 = vpop.f32.mrf.mxu0
        %4370 = vdwg.mxu0
        %4371 = vmatpush.bf16.msra.mxu0 %v3785
        %4372 = vmatpush.bf16.msra.mxu0 %v3784
        %4373 = vmatpush.bf16.msra.mxu0 %v3783
        %4374 = vmatpush.bf16.msra.mxu0 %v3782
        %4375 = vmatpush.bf16.msra.mxu0 %v3781
        %4376 = vmatpush.bf16.msra.mxu0 %v3780
        %4377 = vmatpush.bf16.msra.mxu0 %v3779
        %4378 = vmatpush.bf16.msra.mxu0 %v3778
        %4379 = vmatmul.bf16.gmra.mxu0 %v3842
        %v4380 = vpop.f32.mrf.mxu0
        %v4381 = vadd.f32 %v4368, %v4380
        %v4382 = vpop.f32.mrf.mxu0
        %4383 = vdwg.mxu0
        %4384 = vmatpush.bf16.msra.mxu0 0
        %4385 = vmatpush.bf16.msra.mxu0 0
        %4386 = vmatpush.bf16.msra.mxu0 %v3791
        %4387 = vmatpush.bf16.msra.mxu0 %v3790
        %4388 = vmatpush.bf16.msra.mxu0 %v3789
        %4389 = vmatpush.bf16.msra.mxu0 %v3788
        %4390 = vmatpush.bf16.msra.mxu0 %v3787
        %4391 = vmatpush.bf16.msra.mxu0 %v3786
        %4392 = vmatmul.bf16.gmra.mxu0 %v3958
        %v4393 = vpop.f32.mrf.mxu0
        %v4394 = vadd.f32 %v4381, %v4393
        %v4395 = vpop.f32.mrf.mxu0
        %4396 = vdwg.mxu0
        %4397 = vmatpush.bf16.msra.mxu0 %v3936
        %4398 = vmatpush.bf16.msra.mxu0 %v3935
        %4399 = vmatpush.bf16.msra.mxu0 %v3934
        %4400 = vmatpush.bf16.msra.mxu0 %v3933
        %4401 = vmatpush.bf16.msra.mxu0 %v3932
        %4402 = vmatpush.bf16.msra.mxu0 %v3931
        %4403 = vmatpush.bf16.msra.mxu0 %v3930
        %4404 = vmatpush.bf16.msra.mxu0 %v3929
        %4405 = vmatmul.bf16.gmra.mxu0 %v4146
        %v4406 = vpop.f32.mrf.mxu0
        %v4407 = vadd.f32 0.0, %v4406
        %v4408 = vpop.f32.mrf.mxu0
        %4409 = vdwg.mxu0
        %4410 = vmatpush.bf16.msra.mxu0 0
        %4411 = vmatpush.bf16.msra.mxu0 0
        %4412 = vmatpush.bf16.msra.mxu0 %v3942
        %4413 = vmatpush.bf16.msra.mxu0 %v3941
        %4414 = vmatpush.bf16.msra.mxu0 %v3940
        %4415 = vmatpush.bf16.msra.mxu0 %v3939
        %4416 = vmatpush.bf16.msra.mxu0 %v3938
        %4417 = vmatpush.bf16.msra.mxu0 %v3937
        %4418 = vmatmul.bf16.gmra.mxu0 %v4262
        %v4419 = vpop.f32.mrf.mxu0
        %v4420 = vadd.f32 %v4407, %v4419
        %v4421 = vpop.f32.mrf.mxu0
        %4422 = vdwg.mxu0
        %v4423 = vadd.f32 %v4394, %v4420
        %s4424 = scalar_lea.vmem [#allocation3], 36
        %v4425 = vld [vmem:[%s4424] ss:$8 sm:$0x3]
        %v4427 = vperm.slane %v4425, 0
        %v4428 = vperm.slane %v4425, 1
        %v4431 = vpack.c.bf16 %v4427, %v4427
        %v4432 = vpack.c.bf16 %v4428, %v4428
        %v4434 = vsel %vm3525, %v4432, 0
        %4436 = vmatpush.bf16.msra.mxu0 %v4088
        %4437 = vmatpush.bf16.msra.mxu0 %v4087
        %4438 = vmatpush.bf16.msra.mxu0 %v4086
        %4439 = vmatpush.bf16.msra.mxu0 %v4085
        %4440 = vmatpush.bf16.msra.mxu0 %v4084
        %4441 = vmatpush.bf16.msra.mxu0 %v4083
        %4442 = vmatpush.bf16.msra.mxu0 %v4082
        %4443 = vmatpush.bf16.msra.mxu0 %v4081
        %4444 = vmatmul.bf16.gmra.mxu0 %v4431
        %v4445 = vpop.f32.mrf.mxu0
        %v4446 = vadd.f32 0.0, %v4445
        %v4447 = vpop.f32.mrf.mxu0
        %4448 = vdwg.mxu0
        %4449 = vmatpush.bf16.msra.mxu0 0
        %4450 = vmatpush.bf16.msra.mxu0 0
        %4451 = vmatpush.bf16.msra.mxu0 %v4094
        %4452 = vmatpush.bf16.msra.mxu0 %v4093
        %4453 = vmatpush.bf16.msra.mxu0 %v4092
        %4454 = vmatpush.bf16.msra.mxu0 %v4091
        %4455 = vmatpush.bf16.msra.mxu0 %v4090
        %4456 = vmatpush.bf16.msra.mxu0 %v4089
        %4457 = vmatmul.bf16.gmra.mxu0 %v4434
        %v4458 = vpop.f32.mrf.mxu0
        %v4459 = vadd.f32 %v4446, %v4458
        %v4460 = vpop.f32.mrf.mxu0
        %4461 = vdwg.mxu0
        %v4462 = vadd.f32 %v4423, %v4459
        %s4463 = scalar_lea.vmem [#allocation3], 48
        %v4464 = vld [vmem:[%s4463] ss:$8 sm:$0x3]
        %v4466 = vperm.slane %v4464, 0
        %v4467 = vperm.slane %v4464, 1
        %v4470 = vpack.c.bf16 %v4466, %v4466
        %v4471 = vpack.c.bf16 %v4467, %v4467
        %v4473 = vsel %vm3525, %v4471, 0
        %4475 = vmatpush.bf16.msra.mxu0 %v4240
        %4476 = vmatpush.bf16.msra.mxu0 %v4239
        %4477 = vmatpush.bf16.msra.mxu0 %v4238
        %4478 = vmatpush.bf16.msra.mxu0 %v4237
        %4479 = vmatpush.bf16.msra.mxu0 %v4236
        %4480 = vmatpush.bf16.msra.mxu0 %v4235
        %4481 = vmatpush.bf16.msra.mxu0 %v4234
        %4482 = vmatpush.bf16.msra.mxu0 %v4233
        %4483 = vmatmul.bf16.gmra.mxu0 %v4470
        %v4484 = vpop.f32.mrf.mxu0
        %v4485 = vadd.f32 0.0, %v4484
        %v4486 = vpop.f32.mrf.mxu0
        %4487 = vdwg.mxu0
        %4488 = vmatpush.bf16.msra.mxu0 0
        %4489 = vmatpush.bf16.msra.mxu0 0
        %4490 = vmatpush.bf16.msra.mxu0 %v4246
        %4491 = vmatpush.bf16.msra.mxu0 %v4245
        %4492 = vmatpush.bf16.msra.mxu0 %v4244
        %4493 = vmatpush.bf16.msra.mxu0 %v4243
        %4494 = vmatpush.bf16.msra.mxu0 %v4242
        %4495 = vmatpush.bf16.msra.mxu0 %v4241
        %4496 = vmatmul.bf16.gmra.mxu0 %v4473
        %v4497 = vpop.f32.mrf.mxu0
        %v4498 = vadd.f32 %v4485, %v4497
        %v4499 = vpop.f32.mrf.mxu0
        %4500 = vdwg.mxu0
        %v4501 = vadd.f32 %v4462, %v4498
        %v4502 = vadd.f32 %v4501, %v4291
        %v4503 = vmax.f32 %v4502, 0.0
        %v4504 = vpack.c.bf16 %v4503, %v4503
        %s4505 = scalar_lea.vmem %s7, 32
        %v4506 = vld [vmem:[%s4505] sm:$0xf]
        %v4507 = vld [vmem:[%s4505 + $0x4] sm:$0xf]
        %v4508 = vld [vmem:[%s4505 + $0x8] sm:$0xf]
        %v4509 = vld [vmem:[%s4505 + $0xc] sm:$0xf]
        %v4510 = vld [vmem:[%s4505 + $0x10] sm:$0xf]
        %v4511 = vld [vmem:[%s4505 + $0x14] sm:$0xf]
        %v4512 = vld [vmem:[%s4505 + $0x18] sm:$0xf]
        %v4513 = vld [vmem:[%s4505 + $0x1c] sm:$0xf]
        %v4522 = vunpack.c.l.b16 %v4506
        %v4523 = vunpack.c.l.b16 %v4507
        %v4524 = vunpack.c.l.b16 %v4508
        %v4525 = vunpack.c.l.b16 %v4509
        %v4526 = vunpack.c.l.b16 %v4510
        %v4527 = vunpack.c.l.b16 %v4511
        %v4528 = vunpack.c.l.b16 %v4512
        %v4529 = vunpack.c.l.b16 %v4513
        %v4530 = vpack.c.b16 %v4523, %v4522
        %v4531 = vpack.c.b16 %v4525, %v4524
        %v4532 = vpack.c.b16 %v4527, %v4526
        %v4533 = vpack.c.b16 %v4529, %v4528
        %v4539 = vsel %vm4327, %v4504, 0
        %4541 = vmatpush.bf16.msra.mxu0 0
        %4542 = vmatpush.bf16.msra.mxu0 0
        %4543 = vmatpush.bf16.msra.mxu0 0
        %4544 = vmatpush.bf16.msra.mxu0 0
        %4545 = vmatpush.bf16.msra.mxu0 %v4533
        %4546 = vmatpush.bf16.msra.mxu0 %v4532
        %4547 = vmatpush.bf16.msra.mxu0 %v4531
        %4548 = vmatpush.bf16.msra.mxu0 %v4530
        %4549 = vmatmul.bf16.gmra.mxu0 %v4539
        %v4550 = vpop.f32.mrf.mxu0
        %v4551 = vadd.f32 0.0, %v4550
        %v4552 = vpop.f32.mrf.mxu0
        %4553 = vdwg.mxu0
        %v4554 = vadd.f32 %v4344, %v4551
        %vm4555 = vcmask 24576
        %4556 = vst.msk [vmem:[%s324] sm:$0x1] %vm4555, %v4554
        %s4557 = sand.u32 %s225, 1
        %s4558 = scalar_lea.sflag [#allocation5], %s4557
        %s4559 = sand.u32 %s225, 1
        %s4560 = scalar_lea.vmem [#allocation4], %s4559
        // Predicated region
        $region57: #{forward.1} parent=55 // pred_check
          %p4561 = pneg %p235
        $region58: #{forward.1} parent=55 // pred_check_branch
          %4563 = sbr.rel (%p4561) target = $region60
        $region59: #{forward.1} parent=55 // pred_region
          %4565 = vsyncadd %s4558, 0
          %s4566 = scalar_lea.hbm %s9, %s23
          %s4568 = sshll.u32 %s4560, 4
          %s4569 = int_to_ptr.vmem [resolvable:$true] %s4568
          %s4570 = sshll.u32 %s4566, 4
          %s4571 = int_to_ptr.hbm [resolvable:$true] %s4570
          %4573 = dma.vmem_to_hbm [thread:$0]  %s4569, 16, %s4571, %s4558
        $region60: #{forward.1} parent=55 // pred_fallthru
          _
      $region56: #{forward.1} parent=5 // pred_fallthru
        _
      %p4574 = scmp.le.s32.totalorder 2, %s18
      // Predicated region
      $region61: #{forward.1} parent=5 // pred_check
        %p4575 = pneg %p4574
      $region62: #{forward.1} parent=5 // pred_check_branch
        %4577 = sbr.rel (%p4575) target = $region64
      $region63: #{forward.1} parent=5 // pred_region
        %s4578 = ssub.s32 %s18, 2
        // Predicated region
        $region65: #{forward.1} parent=63 // pred_check
          %p4579 = pneg %p241
        $region66: #{forward.1} parent=63 // pred_check_branch
          %4581 = sbr.rel (%p4579) target = $region68
        $region67: #{forward.1} parent=63 // pred_region
          %s4582 = sand.u32 %s226, 1
          %s4583 = scalar_lea.sflag [#allocation5], %s4582
          %s4584 = sand.u32 %s226, 1
          %s4585 = scalar_lea.vmem [#allocation4], %s4584
          %4587 = dma.done %s4583, 16
        $region68: #{forward.1} parent=63 // pred_fallthru
          _
      $region64: #{forward.1} parent=5 // pred_fallthru
        _
    $region6: #{forward.1} parent=1 // loop_footer
      %s22 = sadd.s32 1, %s18
    $region7: #{forward.1} parent=1 // loop_footer_branch
      %17 = sbr.rel target = $region3
    $region8: #{forward.1} parent=1 // loop_exit
      _
    %4588 = vsyncpa [#allocation5], 1
    %s4589 = scalar_lea.sflag [#allocation5], 1
    %4590 = vsyncpa %s4589, 1

</llo_original>
